<compile_context>
chip_gen: v6e
topology: v6e:2x2x1
jax: 0.10.0
libtpu: 0.0.40
codegen_flags: <defaults>
</compile_context>

<pallas_src>
import functools
import math

import jax
import jax.numpy as jnp
import numpy as np
from jax.experimental import pallas as pl
from jax.experimental.pallas import tpu as pltpu


# ----------------------------- fused kernel ----------------------------------

def _mha_block(q_src, kv_src, wq, bq, wk, bk, wv, bv, wo, bo, *, H, scale):
    """Multi-head attention on one batch row: returns (out (S,D), head-0 probs)."""
    # Full-width projections: (S, D) @ (D, D), N=D keeps the MXU fed.
    q = jnp.dot(q_src, wq, preferred_element_type=jnp.float32) + bq
    k = jnp.dot(kv_src, wk, preferred_element_type=jnp.float32) + bk
    v = jnp.dot(kv_src, wv, preferred_element_type=jnp.float32) + bv
    D = wq.shape[1]
    dh = D // H

    ctxs = []
    p0 = None
    for h in range(H):                       # static loop, dh lane-aligned slices
        sl = slice(h * dh, (h + 1) * dh)
        qh = q[:, sl] * scale
        kh = k[:, sl]
        vh = v[:, sl]
        # scores = qh @ kh^T without materializing a transposed copy of kh.
        scores = jax.lax.dot_general(
            qh, kh, (((1,), (1,)), ((), ())),
            preferred_element_type=jnp.float32)                    # (Sq, Sk)
        m = jnp.max(scores, axis=-1, keepdims=True)
        e = jnp.exp(scores - m)
        p = e / jnp.sum(e, axis=-1, keepdims=True)   # exact divide (correctness)
        if h == 0:
            p0 = p
        ctxs.append(jnp.dot(p, vh, preferred_element_type=jnp.float32))

    ctx = jnp.concatenate(ctxs, axis=-1)                           # (Sq, D)
    out = jnp.dot(ctx, wo, preferred_element_type=jnp.float32) + bo
    return out, p0


def ident_layer2_kernel(x_ref, y_ref,
                        wq1, bq1, wk1, bk1, wv1, bv1, wo1, bo1,
                        g_ref, beta_ref,
                        wq2, bq2, wk2, bk2, wv2, bv2, wo2, bo2,
                        w1_ref, b1_ref, w2_ref, b2_ref,
                        o_ref, attn_ref, *, H, scale):
    """grid=(B,): whole IdentLayer2 forward for one batch row."""
    x = x_ref[0]                                   # (S, D) key/value of MHA2
    y = y_ref[0]                                   # (S, D)

    # ---- MHA1(y, y, y) + residual + LayerNorm (eps = 1e-5) ----
    out1, _ = _mha_block(y, y, wq1[...], bq1[...], wk1[...], bk1[...],
                         wv1[...], bv1[...], wo1[...], bo1[...],
                         H=H, scale=scale)
    t = out1 + y
    mean = jnp.mean(t, axis=-1, keepdims=True)
    var = jnp.mean((t - mean) * (t - mean), axis=-1, keepdims=True)
    y2 = (t - mean) * jax.lax.rsqrt(var + 1e-5) * g_ref[...] + beta_ref[...]

    # ---- MHA2(x, x, y2): key/value = x, query = y2 ----
    out2, p0 = _mha_block(y2, x, wq2[...], bq2[...], wk2[...], bk2[...],
                          wv2[...], bv2[...], wo2[...], bo2[...],
                          H=H, scale=scale)
    attn_ref[0] = p0                               # head-0 probs (top_attn)

    # ---- Resblock: out2 + Linear2(ReLU(Linear1(out2))) ----
    hid = jnp.maximum(
        jnp.dot(out2, w1_ref[...], preferred_element_type=jnp.float32)
        + b1_ref[...], 0.0)
    o_ref[0] = (out2
                + jnp.dot(hid, w2_ref[...], preferred_element_type=jnp.float32)
                + b2_ref[...])


# ----------------------------- wrapper ----------------------------------------

def ident_layer2_fused(x, y, params, H):
    B, S, D = x.shape
    dh = D // H
    act = pl.BlockSpec((1, S, D), lambda b: (b, 0, 0))        # lane-dense rows
    wmat = pl.BlockSpec((D, D), lambda b: (0, 0))             # grid-constant
    vec = pl.BlockSpec((1, D), lambda b: (0, 0))              # grid-constant
    attn_spec = pl.BlockSpec((1, S, S), lambda b: (b, 0, 0))

    m1, m2 = params["mha1"], params["mha2"]
    kernel = functools.partial(ident_layer2_kernel, H=H,
                               scale=1.0 / math.sqrt(dh))
    out, top_attn = pl.pallas_call(
        kernel,
        out_shape=(jax.ShapeDtypeStruct((B, S, D), jnp.float32),
                   jax.ShapeDtypeStruct((B, S, S), jnp.float32)),
        grid=(B,),
        in_specs=[act, act,
                  wmat, vec, wmat, vec, wmat, vec, wmat, vec,   # mha1
                  vec, vec,                                     # LN gamma/beta
                  wmat, vec, wmat, vec, wmat, vec, wmat, vec,   # mha2
                  wmat, vec, wmat, vec],                        # resblock
        out_specs=(act, attn_spec),
        compiler_params=pltpu.CompilerParams(
            dimension_semantics=("parallel",)),
    )(x, y,
      m1["wq"], m1["bq"].reshape(1, D), m1["wk"], m1["bk"].reshape(1, D),
      m1["wv"], m1["bv"].reshape(1, D), m1["wo"], m1["bo"].reshape(1, D),
      params["ln_gamma"].reshape(1, D), params["ln_beta"].reshape(1, D),
      m2["wq"], m2["bq"].reshape(1, D), m2["wk"], m2["bk"].reshape(1, D),
      m2["wv"], m2["bv"].reshape(1, D), m2["wo"], m2["bo"].reshape(1, D),
      params["rb_w1"], params["rb_b1"].reshape(1, D),
      params["rb_w2"], params["rb_b2"].reshape(1, D))
    return out, top_attn


@functools.partial(jax.jit, static_argnums=(3,))
def ident_layer2(x, y, params, H):
    return ident_layer2_fused(x, y, params, H)


# ----------------------------- pure-JAX reference ----------------------------

def _ref_mha(key, value, query, p, H):
    B, Sq, D = query.shape
    Sk = key.shape[1]
    dh = D // H
    hi = jax.lax.Precision.HIGHEST

    def lin(t, w, b):
        return jnp.dot(t, w, precision=hi) + b

    q = lin(query, p["wq"], p["bq"]).reshape(B, Sq, H, dh).transpose(0, 2, 1, 3)
    k = lin(key, p["wk"], p["bk"]).reshape(B, Sk, H, dh).transpose(0, 2, 1, 3)
    v = lin(value, p["wv"], p["bv"]).reshape(B, Sk, H, dh).transpose(0, 2, 1, 3)
    scores = jnp.einsum("bhqd,bhkd->bhqk", q, k, precision=hi) / math.sqrt(dh)
    probs = jax.nn.softmax(scores, axis=-1)
    ctx = jnp.einsum("bhqk,bhkd->bhqd", probs, v, precision=hi)
    ctx = ctx.transpose(0, 2, 1, 3).reshape(B, Sq, D)
    out = jnp.dot(ctx, p["wo"], precision=hi) + p["bo"]
    return out, probs[:, 0]


def _ref_ident_layer2(x, y, params, H):
    hi = jax.lax.Precision.HIGHEST
    out1, _ = _ref_mha(y, y, y, params["mha1"], H)
    t = out1 + y
    mean = t.mean(-1, keepdims=True)
    var = ((t - mean) ** 2).mean(-1, keepdims=True)
    y2 = ((t - mean) * jax.lax.rsqrt(var + 1e-5)
          * params["ln_gamma"] + params["ln_beta"])
    out2, top = _ref_mha(x, x, y2, params["mha2"], H)
    h = jnp.maximum(jnp.dot(out2, params["rb_w1"], precision=hi)
                    + params["rb_b1"], 0.0)
    out = out2 + jnp.dot(h, params["rb_w2"], precision=hi) + params["rb_b2"]
    return out, top


# ----------------------------- main -------------------------------------------

def make_params(rng, D):
    ks = jax.random.split(rng, 24)
    it = iter(ks)

    def w(shape, scale=0.1):
        return jax.random.normal(next(it), shape, jnp.float32) * scale

    def mha_params():
        return {
            "wk": w((D, D)), "bk": w((D,)),
            "wv": w((D, D)), "bv": w((D,)),
            "wq": w((D, D)), "bq": w((D,)),
            "wo": w((D, D)), "bo": w((D,)),
        }

    return {
        "mha1": mha_params(),
        "mha2": mha_params(),
        "ln_gamma": jnp.ones((D,), jnp.float32),
        "ln_beta": jnp.zeros((D,), jnp.float32),
        "rb_w1": w((D, D)), "rb_b1": w((D,)),
        "rb_w2": w((D, D)), "rb_b2": w((D,)),
    }


if __name__ == "__main__":
    # dh = D // H = 128 so head slices are lane-aligned and weight blocks
    # satisfy the (8, 128) tiling.
    B, S, D, H = 2, 8, 256, 2

    root = jax.random.PRNGKey(0)
    k_params, k_x, k_y = jax.random.split(root, 3)
    params = make_params(k_params, D)
    x = jax.random.normal(k_x, (B, S, D), jnp.float32)
    y = jax.random.normal(k_y, (B, S, D), jnp.float32)

    out, top_attn = ident_layer2(x, y, params, H)
    jax.block_until_ready((out, top_attn))

    assert out.shape == (B, S, D)
    assert top_attn.shape == (B, S, S)

    ref_out, ref_attn = _ref_ident_layer2(x, y, params, H)
    np.testing.assert_allclose(np.asarray(out), np.asarray(ref_out),
                               rtol=2e-2, atol=2e-2)
    np.testing.assert_allclose(np.asarray(top_attn), np.asarray(ref_attn),
                               rtol=2e-2, atol=2e-2)
    print("KERNEL_OK")
</pallas_src>

<mosaic_0001>
module attributes {stable_mosaic.version = 11 : i64} {
  func.func @ident_layer2_kernel(%arg0: i32, %arg1: memref<1x8x256xf32, #tpu.memory_space<vmem>>, %arg2: memref<1x8x256xf32, #tpu.memory_space<vmem>>, %arg3: memref<256x256xf32, #tpu.memory_space<vmem>>, %arg4: memref<1x256xf32, #tpu.memory_space<vmem>>, %arg5: memref<256x256xf32, #tpu.memory_space<vmem>>, %arg6: memref<1x256xf32, #tpu.memory_space<vmem>>, %arg7: memref<256x256xf32, #tpu.memory_space<vmem>>, %arg8: memref<1x256xf32, #tpu.memory_space<vmem>>, %arg9: memref<256x256xf32, #tpu.memory_space<vmem>>, %arg10: memref<1x256xf32, #tpu.memory_space<vmem>>, %arg11: memref<1x256xf32, #tpu.memory_space<vmem>>, %arg12: memref<1x256xf32, #tpu.memory_space<vmem>>, %arg13: memref<256x256xf32, #tpu.memory_space<vmem>>, %arg14: memref<1x256xf32, #tpu.memory_space<vmem>>, %arg15: memref<256x256xf32, #tpu.memory_space<vmem>>, %arg16: memref<1x256xf32, #tpu.memory_space<vmem>>, %arg17: memref<256x256xf32, #tpu.memory_space<vmem>>, %arg18: memref<1x256xf32, #tpu.memory_space<vmem>>, %arg19: memref<256x256xf32, #tpu.memory_space<vmem>>, %arg20: memref<1x256xf32, #tpu.memory_space<vmem>>, %arg21: memref<256x256xf32, #tpu.memory_space<vmem>>, %arg22: memref<1x256xf32, #tpu.memory_space<vmem>>, %arg23: memref<256x256xf32, #tpu.memory_space<vmem>>, %arg24: memref<1x256xf32, #tpu.memory_space<vmem>>, %arg25: memref<1x8x256xf32, #tpu.memory_space<vmem>>, %arg26: memref<1x8x8xf32, #tpu.memory_space<vmem>>) attributes {dimension_semantics = [#tpu.dimension_semantics<parallel>], iteration_bounds = array<i64: 2>, scalar_prefetch = 0 : i64, scratch_operands = 0 : i64, tpu.core_type = #tpu.core_type<tc>, window_params = [{transform_indices = @transform_0, window_bounds = array<i64: 1, 8, 256>}, {transform_indices = @transform_1, window_bounds = array<i64: 1, 8, 256>}, {pipeline_mode = #tpu.pipeline_mode<synchronous>, transform_indices = @transform_2, window_bounds = array<i64: 256, 256>}, {pipeline_mode = #tpu.pipeline_mode<synchronous>, transform_indices = @transform_3, window_bounds = array<i64: 1, 256>}, {pipeline_mode = #tpu.pipeline_mode<synchronous>, transform_indices = @transform_4, window_bounds = array<i64: 256, 256>}, {pipeline_mode = #tpu.pipeline_mode<synchronous>, transform_indices = @transform_5, window_bounds = array<i64: 1, 256>}, {pipeline_mode = #tpu.pipeline_mode<synchronous>, transform_indices = @transform_6, window_bounds = array<i64: 256, 256>}, {pipeline_mode = #tpu.pipeline_mode<synchronous>, transform_indices = @transform_7, window_bounds = array<i64: 1, 256>}, {pipeline_mode = #tpu.pipeline_mode<synchronous>, transform_indices = @transform_8, window_bounds = array<i64: 256, 256>}, {pipeline_mode = #tpu.pipeline_mode<synchronous>, transform_indices = @transform_9, window_bounds = array<i64: 1, 256>}, {pipeline_mode = #tpu.pipeline_mode<synchronous>, transform_indices = @transform_10, window_bounds = array<i64: 1, 256>}, {pipeline_mode = #tpu.pipeline_mode<synchronous>, transform_indices = @transform_11, window_bounds = array<i64: 1, 256>}, {pipeline_mode = #tpu.pipeline_mode<synchronous>, transform_indices = @transform_12, window_bounds = array<i64: 256, 256>}, {pipeline_mode = #tpu.pipeline_mode<synchronous>, transform_indices = @transform_13, window_bounds = array<i64: 1, 256>}, {pipeline_mode = #tpu.pipeline_mode<synchronous>, transform_indices = @transform_14, window_bounds = array<i64: 256, 256>}, {pipeline_mode = #tpu.pipeline_mode<synchronous>, transform_indices = @transform_15, window_bounds = array<i64: 1, 256>}, {pipeline_mode = #tpu.pipeline_mode<synchronous>, transform_indices = @transform_16, window_bounds = array<i64: 256, 256>}, {pipeline_mode = #tpu.pipeline_mode<synchronous>, transform_indices = @transform_17, window_bounds = array<i64: 1, 256>}, {pipeline_mode = #tpu.pipeline_mode<synchronous>, transform_indices = @transform_18, window_bounds = array<i64: 256, 256>}, {pipeline_mode = #tpu.pipeline_mode<synchronous>, transform_indices = @transform_19, window_bounds = array<i64: 1, 256>}, {pipeline_mode = #tpu.pipeline_mode<synchronous>, transform_indices = @transform_20, window_bounds = array<i64: 256, 256>}, {pipeline_mode = #tpu.pipeline_mode<synchronous>, transform_indices = @transform_21, window_bounds = array<i64: 1, 256>}, {pipeline_mode = #tpu.pipeline_mode<synchronous>, transform_indices = @transform_22, window_bounds = array<i64: 256, 256>}, {pipeline_mode = #tpu.pipeline_mode<synchronous>, transform_indices = @transform_23, window_bounds = array<i64: 1, 256>}, {transform_indices = @transform_24, window_bounds = array<i64: 1, 8, 256>}, {transform_indices = @transform_25, window_bounds = array<i64: 1, 8, 8>}]} {
    %c0 = arith.constant 0 : index
    %c0_0 = arith.constant 0 : index
    %c0_1 = arith.constant 0 : index
    %0 = vector.load %arg1[%c0, %c0_0, %c0_1] : memref<1x8x256xf32, #tpu.memory_space<vmem>>, vector<1x8x256xf32>
    %1 = vector.shape_cast %0 : vector<1x8x256xf32> to vector<8x256xf32>
    %c0_2 = arith.constant 0 : index
    %c0_3 = arith.constant 0 : index
    %c0_4 = arith.constant 0 : index
    %2 = vector.load %arg2[%c0_2, %c0_3, %c0_4] : memref<1x8x256xf32, #tpu.memory_space<vmem>>, vector<1x8x256xf32>
    %3 = vector.shape_cast %2 : vector<1x8x256xf32> to vector<8x256xf32>
    %c0_5 = arith.constant 0 : index
    %c0_6 = arith.constant 0 : index
    %4 = vector.load %arg3[%c0_5, %c0_6] : memref<256x256xf32, #tpu.memory_space<vmem>>, vector<256x256xf32>
    %c0_7 = arith.constant 0 : index
    %c0_8 = arith.constant 0 : index
    %5 = vector.load %arg4[%c0_7, %c0_8] : memref<1x256xf32, #tpu.memory_space<vmem>>, vector<1x256xf32>
    %c0_9 = arith.constant 0 : index
    %c0_10 = arith.constant 0 : index
    %6 = vector.load %arg5[%c0_9, %c0_10] : memref<256x256xf32, #tpu.memory_space<vmem>>, vector<256x256xf32>
    %c0_11 = arith.constant 0 : index
    %c0_12 = arith.constant 0 : index
    %7 = vector.load %arg6[%c0_11, %c0_12] : memref<1x256xf32, #tpu.memory_space<vmem>>, vector<1x256xf32>
    %c0_13 = arith.constant 0 : index
    %c0_14 = arith.constant 0 : index
    %8 = vector.load %arg7[%c0_13, %c0_14] : memref<256x256xf32, #tpu.memory_space<vmem>>, vector<256x256xf32>
    %c0_15 = arith.constant 0 : index
    %c0_16 = arith.constant 0 : index
    %9 = vector.load %arg8[%c0_15, %c0_16] : memref<1x256xf32, #tpu.memory_space<vmem>>, vector<1x256xf32>
    %c0_17 = arith.constant 0 : index
    %c0_18 = arith.constant 0 : index
    %10 = vector.load %arg9[%c0_17, %c0_18] : memref<256x256xf32, #tpu.memory_space<vmem>>, vector<256x256xf32>
    %c0_19 = arith.constant 0 : index
    %c0_20 = arith.constant 0 : index
    %11 = vector.load %arg10[%c0_19, %c0_20] : memref<1x256xf32, #tpu.memory_space<vmem>>, vector<1x256xf32>
    %cst = arith.constant dense<0.000000e+00> : vector<8x256xf32>
    %12 = tpu.matmul %3, %4, %cst {dimension_numbers = #tpu.dot_dimension_numbers<[1], [0], [0], [1], [0, 0, 1, 1], [], []>} : vector<8x256xf32>, vector<256x256xf32>, vector<8x256xf32> -> vector<8x256xf32>
    %13 = vector.broadcast %5 : vector<1x256xf32> to vector<8x256xf32>
    %14 = arith.addf %12, %13 : vector<8x256xf32>
    %cst_21 = arith.constant dense<0.000000e+00> : vector<8x256xf32>
    %15 = tpu.matmul %3, %6, %cst_21 {dimension_numbers = #tpu.dot_dimension_numbers<[1], [0], [0], [1], [0, 0, 1, 1], [], []>} : vector<8x256xf32>, vector<256x256xf32>, vector<8x256xf32> -> vector<8x256xf32>
    %16 = vector.broadcast %7 : vector<1x256xf32> to vector<8x256xf32>
    %17 = arith.addf %15, %16 : vector<8x256xf32>
    %cst_22 = arith.constant dense<0.000000e+00> : vector<8x256xf32>
    %18 = tpu.matmul %3, %8, %cst_22 {dimension_numbers = #tpu.dot_dimension_numbers<[1], [0], [0], [1], [0, 0, 1, 1], [], []>} : vector<8x256xf32>, vector<256x256xf32>, vector<8x256xf32> -> vector<8x256xf32>
    %19 = vector.broadcast %9 : vector<1x256xf32> to vector<8x256xf32>
    %20 = arith.addf %18, %19 : vector<8x256xf32>
    %21 = vector.extract_strided_slice %14 {offsets = [0, 0], sizes = [8, 128], strides = [1, 1]} : vector<8x256xf32> to vector<8x128xf32>
    %cst_23 = arith.constant 0.0883883461 : f32
    %22 = vector.broadcast %cst_23 : f32 to vector<8x128xf32>
    %23 = arith.mulf %21, %22 : vector<8x128xf32>
    %24 = vector.extract_strided_slice %17 {offsets = [0, 0], sizes = [8, 128], strides = [1, 1]} : vector<8x256xf32> to vector<8x128xf32>
    %25 = vector.extract_strided_slice %20 {offsets = [0, 0], sizes = [8, 128], strides = [1, 1]} : vector<8x256xf32> to vector<8x128xf32>
    %cst_24 = arith.constant dense<0.000000e+00> : vector<8x8xf32>
    %26 = tpu.matmul %23, %24, %cst_24 {dimension_numbers = #tpu.dot_dimension_numbers<[1], [1], [0], [0], [0, 0, 1, 0], [], []>} : vector<8x128xf32>, vector<8x128xf32>, vector<8x8xf32> -> vector<8x8xf32>
    %cst_25 = arith.constant dense<0xFF800000> : vector<8xf32>
    %27 = vector.multi_reduction <maximumf>, %26, %cst_25 [1] : vector<8x8xf32> to vector<8xf32>
    %28 = vector.shape_cast %27 : vector<8xf32> to vector<8x1xf32>
    %29 = vector.broadcast %28 : vector<8x1xf32> to vector<8x8xf32>
    %30 = arith.subf %26, %29 : vector<8x8xf32>
    %31 = math.exp %30 : vector<8x8xf32>
    %cst_26 = arith.constant dense<0.000000e+00> : vector<8xf32>
    %32 = vector.multi_reduction <add>, %31, %cst_26 [1] : vector<8x8xf32> to vector<8xf32>
    %33 = vector.shape_cast %32 : vector<8xf32> to vector<8x1xf32>
    %34 = vector.broadcast %33 : vector<8x1xf32> to vector<8x8xf32>
    %35 = arith.divf %31, %34 : vector<8x8xf32>
    %cst_27 = arith.constant dense<0.000000e+00> : vector<8x128xf32>
    %36 = tpu.matmul %35, %25, %cst_27 {dimension_numbers = #tpu.dot_dimension_numbers<[1], [0], [0], [1], [0, 0, 1, 1], [], []>} : vector<8x8xf32>, vector<8x128xf32>, vector<8x128xf32> -> vector<8x128xf32>
    %37 = vector.extract_strided_slice %14 {offsets = [0, 128], sizes = [8, 128], strides = [1, 1]} : vector<8x256xf32> to vector<8x128xf32>
    %cst_28 = arith.constant 0.0883883461 : f32
    %38 = vector.broadcast %cst_28 : f32 to vector<8x128xf32>
    %39 = arith.mulf %37, %38 : vector<8x128xf32>
    %40 = vector.extract_strided_slice %17 {offsets = [0, 128], sizes = [8, 128], strides = [1, 1]} : vector<8x256xf32> to vector<8x128xf32>
    %41 = vector.extract_strided_slice %20 {offsets = [0, 128], sizes = [8, 128], strides = [1, 1]} : vector<8x256xf32> to vector<8x128xf32>
    %cst_29 = arith.constant dense<0.000000e+00> : vector<8x8xf32>
    %42 = tpu.matmul %39, %40, %cst_29 {dimension_numbers = #tpu.dot_dimension_numbers<[1], [1], [0], [0], [0, 0, 1, 0], [], []>} : vector<8x128xf32>, vector<8x128xf32>, vector<8x8xf32> -> vector<8x8xf32>
    %cst_30 = arith.constant dense<0xFF800000> : vector<8xf32>
    %43 = vector.multi_reduction <maximumf>, %42, %cst_30 [1] : vector<8x8xf32> to vector<8xf32>
    %44 = vector.shape_cast %43 : vector<8xf32> to vector<8x1xf32>
    %45 = vector.broadcast %44 : vector<8x1xf32> to vector<8x8xf32>
    %46 = arith.subf %42, %45 : vector<8x8xf32>
    %47 = math.exp %46 : vector<8x8xf32>
    %cst_31 = arith.constant dense<0.000000e+00> : vector<8xf32>
    %48 = vector.multi_reduction <add>, %47, %cst_31 [1] : vector<8x8xf32> to vector<8xf32>
    %49 = vector.shape_cast %48 : vector<8xf32> to vector<8x1xf32>
    %50 = vector.broadcast %49 : vector<8x1xf32> to vector<8x8xf32>
    %51 = arith.divf %47, %50 : vector<8x8xf32>
    %cst_32 = arith.constant dense<0.000000e+00> : vector<8x128xf32>
    %52 = tpu.matmul %51, %41, %cst_32 {dimension_numbers = #tpu.dot_dimension_numbers<[1], [0], [0], [1], [0, 0, 1, 1], [], []>} : vector<8x8xf32>, vector<8x128xf32>, vector<8x128xf32> -> vector<8x128xf32>
    %53 = tpu.concatenate %36, %52 in 1 : vector<8x128xf32>, vector<8x128xf32> -> vector<8x256xf32>
    %cst_33 = arith.constant dense<0.000000e+00> : vector<8x256xf32>
    %54 = tpu.matmul %53, %10, %cst_33 {dimension_numbers = #tpu.dot_dimension_numbers<[1], [0], [0], [1], [0, 0, 1, 1], [], []>} : vector<8x256xf32>, vector<256x256xf32>, vector<8x256xf32> -> vector<8x256xf32>
    %55 = vector.broadcast %11 : vector<1x256xf32> to vector<8x256xf32>
    %56 = arith.addf %54, %55 : vector<8x256xf32>
    %57 = arith.addf %56, %3 : vector<8x256xf32>
    %cst_34 = arith.constant dense<0.000000e+00> : vector<8xf32>
    %58 = vector.multi_reduction <add>, %57, %cst_34 [1] : vector<8x256xf32> to vector<8xf32>
    %59 = vector.shape_cast %58 : vector<8xf32> to vector<8x1xf32>
    %cst_35 = arith.constant 2.560000e+02 : f32
    %60 = vector.broadcast %cst_35 : f32 to vector<8x1xf32>
    %61 = arith.divf %59, %60 : vector<8x1xf32>
    %62 = vector.broadcast %61 : vector<8x1xf32> to vector<8x256xf32>
    %63 = arith.subf %57, %62 : vector<8x256xf32>
    %64 = vector.broadcast %61 : vector<8x1xf32> to vector<8x256xf32>
    %65 = arith.subf %57, %64 : vector<8x256xf32>
    %66 = arith.mulf %63, %65 : vector<8x256xf32>
    %cst_36 = arith.constant dense<0.000000e+00> : vector<8xf32>
    %67 = vector.multi_reduction <add>, %66, %cst_36 [1] : vector<8x256xf32> to vector<8xf32>
    %68 = vector.shape_cast %67 : vector<8xf32> to vector<8x1xf32>
    %cst_37 = arith.constant 2.560000e+02 : f32
    %69 = vector.broadcast %cst_37 : f32 to vector<8x1xf32>
    %70 = arith.divf %68, %69 : vector<8x1xf32>
    %71 = vector.broadcast %61 : vector<8x1xf32> to vector<8x256xf32>
    %72 = arith.subf %57, %71 : vector<8x256xf32>
    %cst_38 = arith.constant 9.99999974E-6 : f32
    %73 = vector.broadcast %cst_38 : f32 to vector<8x1xf32>
    %74 = arith.addf %70, %73 : vector<8x1xf32>
    %75 = math.rsqrt %74 : vector<8x1xf32>
    %76 = vector.broadcast %75 : vector<8x1xf32> to vector<8x256xf32>
    %77 = arith.mulf %72, %76 : vector<8x256xf32>
    %c0_39 = arith.constant 0 : index
    %c0_40 = arith.constant 0 : index
    %78 = vector.load %arg11[%c0_39, %c0_40] : memref<1x256xf32, #tpu.memory_space<vmem>>, vector<1x256xf32>
    %79 = vector.broadcast %78 : vector<1x256xf32> to vector<8x256xf32>
    %80 = arith.mulf %77, %79 : vector<8x256xf32>
    %c0_41 = arith.constant 0 : index
    %c0_42 = arith.constant 0 : index
    %81 = vector.load %arg12[%c0_41, %c0_42] : memref<1x256xf32, #tpu.memory_space<vmem>>, vector<1x256xf32>
    %82 = vector.broadcast %81 : vector<1x256xf32> to vector<8x256xf32>
    %83 = arith.addf %80, %82 : vector<8x256xf32>
    %c0_43 = arith.constant 0 : index
    %c0_44 = arith.constant 0 : index
    %84 = vector.load %arg13[%c0_43, %c0_44] : memref<256x256xf32, #tpu.memory_space<vmem>>, vector<256x256xf32>
    %c0_45 = arith.constant 0 : index
    %c0_46 = arith.constant 0 : index
    %85 = vector.load %arg14[%c0_45, %c0_46] : memref<1x256xf32, #tpu.memory_space<vmem>>, vector<1x256xf32>
    %c0_47 = arith.constant 0 : index
    %c0_48 = arith.constant 0 : index
    %86 = vector.load %arg15[%c0_47, %c0_48] : memref<256x256xf32, #tpu.memory_space<vmem>>, vector<256x256xf32>
    %c0_49 = arith.constant 0 : index
    %c0_50 = arith.constant 0 : index
    %87 = vector.load %arg16[%c0_49, %c0_50] : memref<1x256xf32, #tpu.memory_space<vmem>>, vector<1x256xf32>
    %c0_51 = arith.constant 0 : index
    %c0_52 = arith.constant 0 : index
    %88 = vector.load %arg17[%c0_51, %c0_52] : memref<256x256xf32, #tpu.memory_space<vmem>>, vector<256x256xf32>
    %c0_53 = arith.constant 0 : index
    %c0_54 = arith.constant 0 : index
    %89 = vector.load %arg18[%c0_53, %c0_54] : memref<1x256xf32, #tpu.memory_space<vmem>>, vector<1x256xf32>
    %c0_55 = arith.constant 0 : index
    %c0_56 = arith.constant 0 : index
    %90 = vector.load %arg19[%c0_55, %c0_56] : memref<256x256xf32, #tpu.memory_space<vmem>>, vector<256x256xf32>
    %c0_57 = arith.constant 0 : index
    %c0_58 = arith.constant 0 : index
    %91 = vector.load %arg20[%c0_57, %c0_58] : memref<1x256xf32, #tpu.memory_space<vmem>>, vector<1x256xf32>
    %cst_59 = arith.constant dense<0.000000e+00> : vector<8x256xf32>
    %92 = tpu.matmul %83, %84, %cst_59 {dimension_numbers = #tpu.dot_dimension_numbers<[1], [0], [0], [1], [0, 0, 1, 1], [], []>} : vector<8x256xf32>, vector<256x256xf32>, vector<8x256xf32> -> vector<8x256xf32>
    %93 = vector.broadcast %85 : vector<1x256xf32> to vector<8x256xf32>
    %94 = arith.addf %92, %93 : vector<8x256xf32>
    %cst_60 = arith.constant dense<0.000000e+00> : vector<8x256xf32>
    %95 = tpu.matmul %1, %86, %cst_60 {dimension_numbers = #tpu.dot_dimension_numbers<[1], [0], [0], [1], [0, 0, 1, 1], [], []>} : vector<8x256xf32>, vector<256x256xf32>, vector<8x256xf32> -> vector<8x256xf32>
    %96 = vector.broadcast %87 : vector<1x256xf32> to vector<8x256xf32>
    %97 = arith.addf %95, %96 : vector<8x256xf32>
    %cst_61 = arith.constant dense<0.000000e+00> : vector<8x256xf32>
    %98 = tpu.matmul %1, %88, %cst_61 {dimension_numbers = #tpu.dot_dimension_numbers<[1], [0], [0], [1], [0, 0, 1, 1], [], []>} : vector<8x256xf32>, vector<256x256xf32>, vector<8x256xf32> -> vector<8x256xf32>
    %99 = vector.broadcast %89 : vector<1x256xf32> to vector<8x256xf32>
    %100 = arith.addf %98, %99 : vector<8x256xf32>
    %101 = vector.extract_strided_slice %94 {offsets = [0, 0], sizes = [8, 128], strides = [1, 1]} : vector<8x256xf32> to vector<8x128xf32>
    %cst_62 = arith.constant 0.0883883461 : f32
    %102 = vector.broadcast %cst_62 : f32 to vector<8x128xf32>
    %103 = arith.mulf %101, %102 : vector<8x128xf32>
    %104 = vector.extract_strided_slice %97 {offsets = [0, 0], sizes = [8, 128], strides = [1, 1]} : vector<8x256xf32> to vector<8x128xf32>
    %105 = vector.extract_strided_slice %100 {offsets = [0, 0], sizes = [8, 128], strides = [1, 1]} : vector<8x256xf32> to vector<8x128xf32>
    %cst_63 = arith.constant dense<0.000000e+00> : vector<8x8xf32>
    %106 = tpu.matmul %103, %104, %cst_63 {dimension_numbers = #tpu.dot_dimension_numbers<[1], [1], [0], [0], [0, 0, 1, 0], [], []>} : vector<8x128xf32>, vector<8x128xf32>, vector<8x8xf32> -> vector<8x8xf32>
    %cst_64 = arith.constant dense<0xFF800000> : vector<8xf32>
    %107 = vector.multi_reduction <maximumf>, %106, %cst_64 [1] : vector<8x8xf32> to vector<8xf32>
    %108 = vector.shape_cast %107 : vector<8xf32> to vector<8x1xf32>
    %109 = vector.broadcast %108 : vector<8x1xf32> to vector<8x8xf32>
    %110 = arith.subf %106, %109 : vector<8x8xf32>
    %111 = math.exp %110 : vector<8x8xf32>
    %cst_65 = arith.constant dense<0.000000e+00> : vector<8xf32>
    %112 = vector.multi_reduction <add>, %111, %cst_65 [1] : vector<8x8xf32> to vector<8xf32>
    %113 = vector.shape_cast %112 : vector<8xf32> to vector<8x1xf32>
    %114 = vector.broadcast %113 : vector<8x1xf32> to vector<8x8xf32>
    %115 = arith.divf %111, %114 : vector<8x8xf32>
    %cst_66 = arith.constant dense<0.000000e+00> : vector<8x128xf32>
    %116 = tpu.matmul %115, %105, %cst_66 {dimension_numbers = #tpu.dot_dimension_numbers<[1], [0], [0], [1], [0, 0, 1, 1], [], []>} : vector<8x8xf32>, vector<8x128xf32>, vector<8x128xf32> -> vector<8x128xf32>
    %117 = vector.extract_strided_slice %94 {offsets = [0, 128], sizes = [8, 128], strides = [1, 1]} : vector<8x256xf32> to vector<8x128xf32>
    %cst_67 = arith.constant 0.0883883461 : f32
    %118 = vector.broadcast %cst_67 : f32 to vector<8x128xf32>
    %119 = arith.mulf %117, %118 : vector<8x128xf32>
    %120 = vector.extract_strided_slice %97 {offsets = [0, 128], sizes = [8, 128], strides = [1, 1]} : vector<8x256xf32> to vector<8x128xf32>
    %121 = vector.extract_strided_slice %100 {offsets = [0, 128], sizes = [8, 128], strides = [1, 1]} : vector<8x256xf32> to vector<8x128xf32>
    %cst_68 = arith.constant dense<0.000000e+00> : vector<8x8xf32>
    %122 = tpu.matmul %119, %120, %cst_68 {dimension_numbers = #tpu.dot_dimension_numbers<[1], [1], [0], [0], [0, 0, 1, 0], [], []>} : vector<8x128xf32>, vector<8x128xf32>, vector<8x8xf32> -> vector<8x8xf32>
    %cst_69 = arith.constant dense<0xFF800000> : vector<8xf32>
    %123 = vector.multi_reduction <maximumf>, %122, %cst_69 [1] : vector<8x8xf32> to vector<8xf32>
    %124 = vector.shape_cast %123 : vector<8xf32> to vector<8x1xf32>
    %125 = vector.broadcast %124 : vector<8x1xf32> to vector<8x8xf32>
    %126 = arith.subf %122, %125 : vector<8x8xf32>
    %127 = math.exp %126 : vector<8x8xf32>
    %cst_70 = arith.constant dense<0.000000e+00> : vector<8xf32>
    %128 = vector.multi_reduction <add>, %127, %cst_70 [1] : vector<8x8xf32> to vector<8xf32>
    %129 = vector.shape_cast %128 : vector<8xf32> to vector<8x1xf32>
    %130 = vector.broadcast %129 : vector<8x1xf32> to vector<8x8xf32>
    %131 = arith.divf %127, %130 : vector<8x8xf32>
    %cst_71 = arith.constant dense<0.000000e+00> : vector<8x128xf32>
    %132 = tpu.matmul %131, %121, %cst_71 {dimension_numbers = #tpu.dot_dimension_numbers<[1], [0], [0], [1], [0, 0, 1, 1], [], []>} : vector<8x8xf32>, vector<8x128xf32>, vector<8x128xf32> -> vector<8x128xf32>
    %133 = tpu.concatenate %116, %132 in 1 : vector<8x128xf32>, vector<8x128xf32> -> vector<8x256xf32>
    %cst_72 = arith.constant dense<0.000000e+00> : vector<8x256xf32>
    %134 = tpu.matmul %133, %90, %cst_72 {dimension_numbers = #tpu.dot_dimension_numbers<[1], [0], [0], [1], [0, 0, 1, 1], [], []>} : vector<8x256xf32>, vector<256x256xf32>, vector<8x256xf32> -> vector<8x256xf32>
    %135 = vector.broadcast %91 : vector<1x256xf32> to vector<8x256xf32>
    %136 = arith.addf %134, %135 : vector<8x256xf32>
    %c0_73 = arith.constant 0 : index
    %c0_74 = arith.constant 0 : index
    %c0_75 = arith.constant 0 : index
    %137 = vector.load %arg26[%c0_73, %c0_74, %c0_75] : memref<1x8x8xf32, #tpu.memory_space<vmem>>, vector<1x8x8xf32>
    %138 = vector.shape_cast %137 : vector<1x8x8xf32> to vector<8x8xf32>
    %139 = vector.shape_cast %115 : vector<8x8xf32> to vector<1x8x8xf32>
    tpu.vector_store %arg26[%c0_73, %c0_74, %c0_75], %139 {strides = array<i32>} : memref<1x8x8xf32, #tpu.memory_space<vmem>>, vector<1x8x8xf32>,
    %c0_76 = arith.constant 0 : index
    %c0_77 = arith.constant 0 : index
    %140 = vector.load %arg21[%c0_76, %c0_77] : memref<256x256xf32, #tpu.memory_space<vmem>>, vector<256x256xf32>
    %cst_78 = arith.constant dense<0.000000e+00> : vector<8x256xf32>
    %141 = tpu.matmul %136, %140, %cst_78 {dimension_numbers = #tpu.dot_dimension_numbers<[1], [0], [0], [1], [0, 0, 1, 1], [], []>} : vector<8x256xf32>, vector<256x256xf32>, vector<8x256xf32> -> vector<8x256xf32>
    %c0_79 = arith.constant 0 : index
    %c0_80 = arith.constant 0 : index
    %142 = vector.load %arg22[%c0_79, %c0_80] : memref<1x256xf32, #tpu.memory_space<vmem>>, vector<1x256xf32>
    %143 = vector.broadcast %142 : vector<1x256xf32> to vector<8x256xf32>
    %144 = arith.addf %141, %143 : vector<8x256xf32>
    %cst_81 = arith.constant 0.000000e+00 : f32
    %145 = vector.broadcast %cst_81 : f32 to vector<8x256xf32>
    %146 = arith.maximumf %144, %145 : vector<8x256xf32>
    %c0_82 = arith.constant 0 : index
    %c0_83 = arith.constant 0 : index
    %147 = vector.load %arg23[%c0_82, %c0_83] : memref<256x256xf32, #tpu.memory_space<vmem>>, vector<256x256xf32>
    %cst_84 = arith.constant dense<0.000000e+00> : vector<8x256xf32>
    %148 = tpu.matmul %146, %147, %cst_84 {dimension_numbers = #tpu.dot_dimension_numbers<[1], [0], [0], [1], [0, 0, 1, 1], [], []>} : vector<8x256xf32>, vector<256x256xf32>, vector<8x256xf32> -> vector<8x256xf32>
    %149 = arith.addf %136, %148 : vector<8x256xf32>
    %c0_85 = arith.constant 0 : index
    %c0_86 = arith.constant 0 : index
    %150 = vector.load %arg24[%c0_85, %c0_86] : memref<1x256xf32, #tpu.memory_space<vmem>>, vector<1x256xf32>
    %151 = vector.broadcast %150 : vector<1x256xf32> to vector<8x256xf32>
    %152 = arith.addf %149, %151 : vector<8x256xf32>
    %c0_87 = arith.constant 0 : index
    %c0_88 = arith.constant 0 : index
    %c0_89 = arith.constant 0 : index
    %153 = vector.load %arg25[%c0_87, %c0_88, %c0_89] : memref<1x8x256xf32, #tpu.memory_space<vmem>>, vector<1x8x256xf32>
    %154 = vector.shape_cast %153 : vector<1x8x256xf32> to vector<8x256xf32>
    %155 = vector.shape_cast %152 : vector<8x256xf32> to vector<1x8x256xf32>
    tpu.vector_store %arg25[%c0_87, %c0_88, %c0_89], %155 {strides = array<i32>} : memref<1x8x256xf32, #tpu.memory_space<vmem>>, vector<1x8x256xf32>,
    return
  }
  func.func @transform_0(%arg0: i32) -> (i32, i32, i32) {
    %c0_i32 = arith.constant 0 : i32
    %c0_i32_0 = arith.constant 0 : i32
    %c0_i32_1 = arith.constant 0 : i32
    return %arg0, %c0_i32, %c0_i32_0 : i32, i32, i32
  }
  func.func @transform_1(%arg0: i32) -> (i32, i32, i32) {
    %c0_i32 = arith.constant 0 : i32
    %c0_i32_0 = arith.constant 0 : i32
    %c0_i32_1 = arith.constant 0 : i32
    return %arg0, %c0_i32, %c0_i32_0 : i32, i32, i32
  }
  func.func @transform_2(%arg0: i32) -> (i32, i32) {
    %c0_i32 = arith.constant 0 : i32
    %c0_i32_0 = arith.constant 0 : i32
    %c0_i32_1 = arith.constant 0 : i32
    return %c0_i32, %c0_i32_0 : i32, i32
  }
  func.func @transform_3(%arg0: i32) -> (i32, i32) {
    %c0_i32 = arith.constant 0 : i32
    %c0_i32_0 = arith.constant 0 : i32
    %c0_i32_1 = arith.constant 0 : i32
    return %c0_i32, %c0_i32_0 : i32, i32
  }
  func.func @transform_4(%arg0: i32) -> (i32, i32) {
    %c0_i32 = arith.constant 0 : i32
    %c0_i32_0 = arith.constant 0 : i32
    %c0_i32_1 = arith.constant 0 : i32
    return %c0_i32, %c0_i32_0 : i32, i32
  }
  func.func @transform_5(%arg0: i32) -> (i32, i32) {
    %c0_i32 = arith.constant 0 : i32
    %c0_i32_0 = arith.constant 0 : i32
    %c0_i32_1 = arith.constant 0 : i32
    return %c0_i32, %c0_i32_0 : i32, i32
  }
  func.func @transform_6(%arg0: i32) -> (i32, i32) {
    %c0_i32 = arith.constant 0 : i32
    %c0_i32_0 = arith.constant 0 : i32
    %c0_i32_1 = arith.constant 0 : i32
    return %c0_i32, %c0_i32_0 : i32, i32
  }
  func.func @transform_7(%arg0: i32) -> (i32, i32) {
    %c0_i32 = arith.constant 0 : i32
    %c0_i32_0 = arith.constant 0 : i32
    %c0_i32_1 = arith.constant 0 : i32
    return %c0_i32, %c0_i32_0 : i32, i32
  }
  func.func @transform_8(%arg0: i32) -> (i32, i32) {
    %c0_i32 = arith.constant 0 : i32
    %c0_i32_0 = arith.constant 0 : i32
    %c0_i32_1 = arith.constant 0 : i32
    return %c0_i32, %c0_i32_0 : i32, i32
  }
  func.func @transform_9(%arg0: i32) -> (i32, i32) {
    %c0_i32 = arith.constant 0 : i32
    %c0_i32_0 = arith.constant 0 : i32
    %c0_i32_1 = arith.constant 0 : i32
    return %c0_i32, %c0_i32_0 : i32, i32
  }
  func.func @transform_10(%arg0: i32) -> (i32, i32) {
    %c0_i32 = arith.constant 0 : i32
    %c0_i32_0 = arith.constant 0 : i32
    %c0_i32_1 = arith.constant 0 : i32
    return %c0_i32, %c0_i32_0 : i32, i32
  }
  func.func @transform_11(%arg0: i32) -> (i32, i32) {
    %c0_i32 = arith.constant 0 : i32
    %c0_i32_0 = arith.constant 0 : i32
    %c0_i32_1 = arith.constant 0 : i32
    return %c0_i32, %c0_i32_0 : i32, i32
  }
  func.func @transform_12(%arg0: i32) -> (i32, i32) {
    %c0_i32 = arith.constant 0 : i32
    %c0_i32_0 = arith.constant 0 : i32
    %c0_i32_1 = arith.constant 0 : i32
    return %c0_i32, %c0_i32_0 : i32, i32
  }
  func.func @transform_13(%arg0: i32) -> (i32, i32) {
    %c0_i32 = arith.constant 0 : i32
    %c0_i32_0 = arith.constant 0 : i32
    %c0_i32_1 = arith.constant 0 : i32
    return %c0_i32, %c0_i32_0 : i32, i32
  }
  func.func @transform_14(%arg0: i32) -> (i32, i32) {
    %c0_i32 = arith.constant 0 : i32
    %c0_i32_0 = arith.constant 0 : i32
    %c0_i32_1 = arith.constant 0 : i32
    return %c0_i32, %c0_i32_0 : i32, i32
  }
  func.func @transform_15(%arg0: i32) -> (i32, i32) {
    %c0_i32 = arith.constant 0 : i32
    %c0_i32_0 = arith.constant 0 : i32
    %c0_i32_1 = arith.constant 0 : i32
    return %c0_i32, %c0_i32_0 : i32, i32
  }
  func.func @transform_16(%arg0: i32) -> (i32, i32) {
    %c0_i32 = arith.constant 0 : i32
    %c0_i32_0 = arith.constant 0 : i32
    %c0_i32_1 = arith.constant 0 : i32
    return %c0_i32, %c0_i32_0 : i32, i32
  }
  func.func @transform_17(%arg0: i32) -> (i32, i32) {
    %c0_i32 = arith.constant 0 : i32
    %c0_i32_0 = arith.constant 0 : i32
    %c0_i32_1 = arith.constant 0 : i32
    return %c0_i32, %c0_i32_0 : i32, i32
  }
  func.func @transform_18(%arg0: i32) -> (i32, i32) {
    %c0_i32 = arith.constant 0 : i32
    %c0_i32_0 = arith.constant 0 : i32
    %c0_i32_1 = arith.constant 0 : i32
    return %c0_i32, %c0_i32_0 : i32, i32
  }
  func.func @transform_19(%arg0: i32) -> (i32, i32) {
    %c0_i32 = arith.constant 0 : i32
    %c0_i32_0 = arith.constant 0 : i32
    %c0_i32_1 = arith.constant 0 : i32
    return %c0_i32, %c0_i32_0 : i32, i32
  }
  func.func @transform_20(%arg0: i32) -> (i32, i32) {
    %c0_i32 = arith.constant 0 : i32
    %c0_i32_0 = arith.constant 0 : i32
    %c0_i32_1 = arith.constant 0 : i32
    return %c0_i32, %c0_i32_0 : i32, i32
  }
  func.func @transform_21(%arg0: i32) -> (i32, i32) {
    %c0_i32 = arith.constant 0 : i32
    %c0_i32_0 = arith.constant 0 : i32
    %c0_i32_1 = arith.constant 0 : i32
    return %c0_i32, %c0_i32_0 : i32, i32
  }
  func.func @transform_22(%arg0: i32) -> (i32, i32) {
    %c0_i32 = arith.constant 0 : i32
    %c0_i32_0 = arith.constant 0 : i32
    %c0_i32_1 = arith.constant 0 : i32
    return %c0_i32, %c0_i32_0 : i32, i32
  }
  func.func @transform_23(%arg0: i32) -> (i32, i32) {
    %c0_i32 = arith.constant 0 : i32
    %c0_i32_0 = arith.constant 0 : i32
    %c0_i32_1 = arith.constant 0 : i32
    return %c0_i32, %c0_i32_0 : i32, i32
  }
  func.func @transform_24(%arg0: i32) -> (i32, i32, i32) {
    %c0_i32 = arith.constant 0 : i32
    %c0_i32_0 = arith.constant 0 : i32
    %c0_i32_1 = arith.constant 0 : i32
    return %arg0, %c0_i32, %c0_i32_0 : i32, i32, i32
  }
  func.func @transform_25(%arg0: i32) -> (i32, i32, i32) {
    %c0_i32 = arith.constant 0 : i32
    %c0_i32_0 = arith.constant 0 : i32
    %c0_i32_1 = arith.constant 0 : i32
    return %arg0, %c0_i32, %c0_i32_0 : i32, i32, i32
  }
}

</mosaic_0001>

<llo_original>
// kernel: ident_layer2.1
$region0: #{ident_layer2.1}
  #allocation0 [shape = 'u32[]', space=smem, size = 0x4, offset = 0x4, fixed_abs, tag = 'smem constant byte address 0x4 - core index']
  #allocation1 [shape = 'u32[144,128]{1,0:T(1,128)}', space=vmem, size = 0x12000, scoped, tag = 'internal scratch']
  %s0 = inlined_call_operand.hbm [shape: f32[2,8,256], index: 0, kind: input, shape index: {}]
  %s1 = inlined_call_operand.hbm [shape: f32[2,8,256], index: 1, kind: input, shape index: {}]
  %s2 = inlined_call_operand.hbm [shape: f32[256,256], index: 2, kind: input, shape index: {}]
  %s3 = inlined_call_operand.vmem [shape: f32[1,256], index: 3, kind: input, shape index: {}]
  %s4 = inlined_call_operand.hbm [shape: f32[256,256], index: 4, kind: input, shape index: {}]
  %s5 = inlined_call_operand.vmem [shape: f32[1,256], index: 5, kind: input, shape index: {}]
  %s6 = inlined_call_operand.hbm [shape: f32[256,256], index: 6, kind: input, shape index: {}]
  %s7 = inlined_call_operand.vmem [shape: f32[1,256], index: 7, kind: input, shape index: {}]
  %s8 = inlined_call_operand.hbm [shape: f32[256,256], index: 8, kind: input, shape index: {}]
  %s9 = inlined_call_operand.vmem [shape: f32[1,256], index: 9, kind: input, shape index: {}]
  %s10 = inlined_call_operand.vmem [shape: f32[1,256], index: 10, kind: input, shape index: {}]
  %s11 = inlined_call_operand.vmem [shape: f32[1,256], index: 11, kind: input, shape index: {}]
  %s12 = inlined_call_operand.hbm [shape: f32[256,256], index: 12, kind: input, shape index: {}]
  %s13 = inlined_call_operand.vmem [shape: f32[1,256], index: 13, kind: input, shape index: {}]
  %s14 = inlined_call_operand.hbm [shape: f32[256,256], index: 14, kind: input, shape index: {}]
  %s15 = inlined_call_operand.vmem [shape: f32[1,256], index: 15, kind: input, shape index: {}]
  %s16 = inlined_call_operand.hbm [shape: f32[256,256], index: 16, kind: input, shape index: {}]
  %s17 = inlined_call_operand.vmem [shape: f32[1,256], index: 17, kind: input, shape index: {}]
  %s18 = inlined_call_operand.hbm [shape: f32[256,256], index: 18, kind: input, shape index: {}]
  %s19 = inlined_call_operand.vmem [shape: f32[1,256], index: 19, kind: input, shape index: {}]
  %s20 = inlined_call_operand.hbm [shape: f32[256,256], index: 20, kind: input, shape index: {}]
  %s21 = inlined_call_operand.vmem [shape: f32[1,256], index: 21, kind: input, shape index: {}]
  %s22 = inlined_call_operand.hbm [shape: f32[256,256], index: 22, kind: input, shape index: {}]
  %s23 = inlined_call_operand.vmem [shape: f32[1,256], index: 23, kind: input, shape index: {}]
  %s24 = inlined_call_operand.hbm [shape: f32[2,8,256], index: 24, kind: output, shape index: {0}]
  %s25 = inlined_call_operand.hbm [shape: f32[2,8,8], index: 25, kind: output, shape index: {1}]
  %26 = xla_tuple %s24, %s25
  %s27 = sld [smem:[#allocation0]]
  $region185: #{ident_layer2.1} parent=0
    _
  %s29 = ssub.s32 1, %s27
  %s30 = scalar_select 0, %s29, %s27
  $region1: #{ident_layer2.1} parent=0
    #allocation2 [shape = 'u8[16384]{0}', space=vmem, size = 0x4000, scoped, tag = 'input window, operand 0']
    #allocation3 [shape = 's32[2]{0}', space=sflag, size = 0x8, scoped, tag = 'scoped memory for ident_layer2.1']
    #allocation4 [shape = 's32[2]{0}', space=sflag, size = 0x8, scoped, tag = 'scoped memory for ident_layer2.1']
    #allocation5 [shape = 'u8[16384]{0}', space=vmem, size = 0x4000, scoped, tag = 'input window, operand 1']
    #allocation6 [shape = 's32[2]{0}', space=sflag, size = 0x8, scoped, tag = 'scoped memory for ident_layer2.1']
    #allocation7 [shape = 'u8[262144]{0}', space=vmem, size = 0x40000, scoped, tag = 'input window, operand 2, single buffered']
    #allocation8 [shape = 'u8[262144]{0}', space=vmem, size = 0x40000, scoped, tag = 'input window, operand 4, single buffered']
    #allocation9 [shape = 's32[1]{0}', space=sflag, size = 0x4, scoped, tag = 'scoped memory for ident_layer2.1']
    #allocation10 [shape = 'u8[262144]{0}', space=vmem, size = 0x40000, scoped, tag = 'input window, operand 6, single buffered']
    #allocation11 [shape = 'u8[262144]{0}', space=vmem, size = 0x40000, scoped, tag = 'input window, operand 8, single buffered']
    #allocation12 [shape = 's32[1]{0}', space=sflag, size = 0x4, scoped, tag = 'scoped memory for ident_layer2.1']
    #allocation13 [shape = 'u8[262144]{0}', space=vmem, size = 0x40000, scoped, tag = 'input window, operand 12, single buffered']
    #allocation14 [shape = 'u8[262144]{0}', space=vmem, size = 0x40000, scoped, tag = 'input window, operand 14, single buffered']
    #allocation15 [shape = 's32[1]{0}', space=sflag, size = 0x4, scoped, tag = 'scoped memory for ident_layer2.1']
    #allocation16 [shape = 'u8[262144]{0}', space=vmem, size = 0x40000, scoped, tag = 'input window, operand 16, single buffered']
    #allocation17 [shape = 'u8[262144]{0}', space=vmem, size = 0x40000, scoped, tag = 'input window, operand 18, single buffered']
    #allocation18 [shape = 's32[1]{0}', space=sflag, size = 0x4, scoped, tag = 'scoped memory for ident_layer2.1']
    #allocation19 [shape = 'u8[262144]{0}', space=vmem, size = 0x40000, scoped, tag = 'input window, operand 20, single buffered']
    #allocation20 [shape = 'u8[262144]{0}', space=vmem, size = 0x40000, scoped, tag = 'input window, operand 22, single buffered']
    #allocation21 [shape = 's32[1]{0}', space=sflag, size = 0x4, scoped, tag = 'scoped memory for ident_layer2.1']
    #allocation22 [shape = 'u8[16384]{0}', space=vmem, size = 0x4000, scoped, tag = 'output window, operand 0']
    #allocation23 [shape = 'u8[8192]{0}', space=vmem, size = 0x2000, scoped, tag = 'output window, operand 1']
    #allocation24 [shape = 's32[2]{0}', space=sflag, size = 0x8, scoped, tag = 'scoped memory for ident_layer2.1']
    %31 = vsyncpa [#allocation3], 0
    %s32 = scalar_lea.sflag [#allocation3], 1
    %33 = vsyncpa %s32, 0
    %34 = vsyncpa [#allocation6], 0
    %s35 = scalar_lea.sflag [#allocation6], 1
    %36 = vsyncpa %s35, 0
    %37 = vsyncpa [#allocation9], 0
    %38 = vsyncpa [#allocation12], 0
    %39 = vsyncpa [#allocation15], 0
    %40 = vsyncpa [#allocation18], 0
    %41 = vsyncpa [#allocation21], 0
    %42 = vsyncpa [#allocation4], 0
    %s43 = scalar_lea.sflag [#allocation4], 1
    %44 = vsyncpa %s43, 0
    %45 = vsyncpa [#allocation24], 0
    %s46 = scalar_lea.sflag [#allocation24], 1
    %47 = vsyncpa %s46, 0
    loop: start=0, step=1, limit=4
    $region2: #{ident_layer2.1} parent=1 // loop_pre_header
      _
    $region3: #{ident_layer2.1} parent=1 // loop_header
      %s49 = sphi 0, %s53
      %p50 = scmp.ge.s32.totalorder %s49, 4
      %s59 = sphi 0, %s61
      %s62 = sphi 0, %s59
      %s63 = sphi 0, %s62
      %s79 = sphi 0, %s63
      %s85 = sphi 0, %s87
      %s88 = sphi 0, %s85
      %s89 = sphi 0, %s88
      %s105 = sphi 0, %s89
      %s109 = sphi 0, %s109
      %s111 = sphi 0, %s109
      %s112 = sphi 0, %s111
      %s126 = sphi 0, %s112
      %s130 = sphi 0, %s130
      %s132 = sphi 0, %s130
      %s133 = sphi 0, %s132
      %s147 = sphi 0, %s133
      %s151 = sphi 0, %s151
      %s153 = sphi 0, %s151
      %s154 = sphi 0, %s153
      %s168 = sphi 0, %s154
      %s172 = sphi 0, %s172
      %s174 = sphi 0, %s172
      %s175 = sphi 0, %s174
      %s189 = sphi 0, %s175
      %s193 = sphi 0, %s193
      %s195 = sphi 0, %s193
      %s196 = sphi 0, %s195
      %s210 = sphi 0, %s196
      %s214 = sphi 0, %s214
      %s216 = sphi 0, %s214
      %s217 = sphi 0, %s216
      %s231 = sphi 0, %s217
      %s235 = sphi 0, %s235
      %s237 = sphi 0, %s235
      %s238 = sphi 0, %s237
      %s252 = sphi 0, %s238
      %s256 = sphi 0, %s256
      %s258 = sphi 0, %s256
      %s259 = sphi 0, %s258
      %s273 = sphi 0, %s259
      %s277 = sphi 0, %s277
      %s279 = sphi 0, %s277
      %s280 = sphi 0, %s279
      %s294 = sphi 0, %s280
      %s298 = sphi 0, %s298
      %s300 = sphi 0, %s298
      %s301 = sphi 0, %s300
      %s315 = sphi 0, %s301
      %s319 = sphi 0, %s319
      %s321 = sphi 0, %s319
      %s322 = sphi 0, %s321
      %s336 = sphi 0, %s322
      %s340 = sphi 0, %s340
      %s342 = sphi 0, %s340
      %s343 = sphi 0, %s342
      %s357 = sphi 0, %s343
      %s361 = sphi 0, %s361
      %s363 = sphi 0, %s361
      %s364 = sphi 0, %s363
      %s378 = sphi 0, %s364
      %s382 = sphi 0, %s382
      %s384 = sphi 0, %s382
      %s385 = sphi 0, %s384
      %s399 = sphi 0, %s385
      %s403 = sphi 0, %s403
      %s405 = sphi 0, %s403
      %s406 = sphi 0, %s405
      %s420 = sphi 0, %s406
      %s424 = sphi 0, %s424
      %s426 = sphi 0, %s424
      %s427 = sphi 0, %s426
      %s441 = sphi 0, %s427
      %s445 = sphi 0, %s445
      %s447 = sphi 0, %s445
      %s448 = sphi 0, %s447
      %s462 = sphi 0, %s448
      %s466 = sphi 0, %s466
      %s468 = sphi 0, %s466
      %s469 = sphi 0, %s468
      %s483 = sphi 0, %s469
      %s487 = sphi 0, %s487
      %s489 = sphi 0, %s487
      %s490 = sphi 0, %s489
      %s504 = sphi 0, %s490
      %s508 = sphi 0, %s508
      %s510 = sphi 0, %s508
      %s511 = sphi 0, %s510
      %s525 = sphi 0, %s511
      %s529 = sphi 0, %s529
      %s531 = sphi 0, %s529
      %s532 = sphi 0, %s531
      %s546 = sphi 0, %s532
      %s550 = sphi 0, %s550
      %s552 = sphi 0, %s550
      %s553 = sphi 0, %s552
      %s567 = sphi 0, %s553
      %s573 = sphi 0, %s575
      %s576 = sphi 0, %s573
      %s577 = sphi 0, %s576
      %s593 = sphi 0, %s577
      %s599 = sphi 0, %s601
      %s602 = sphi 0, %s599
      %s603 = sphi 0, %s602
      %s619 = sphi 0, %s603
    $region4: #{ident_layer2.1} parent=1 // loop_header_branch
      %52 = sbr.rel (%p50) target = $region8
    $region5: #{ident_layer2.1} parent=1 // loop_body
      %s54 = ssub.s32 %s49, 1
      %s55 = ssub.s32 %s49, 2
      %s56 = sadd.s32 %s49, 1
      %s57 = ssub.s32 %s49, %s56
      %p58 = scmp.eq.s32.totalorder %s57, 0
      %s60 = sadd.s32 %s59, 1
      %s61 = scalar_select %p58, %s59, %s60
      %p64 = pneg %p58
      %p65 = scmp.eq.s32.totalorder %s49, 1
      %p66 = por %p64, %p65
      %p67 = scmp.ne.s32.totalorder %s59, %s62
      %p68 = scmp.eq.s32.totalorder %s49, 0
      %p69 = por %p67, %p68
      %p70 = scmp.ne.s32.totalorder %s59, %s62
      %p71 = scmp.eq.s32.totalorder %s54, 1
      %p72 = por %p70, %p71
      %p73 = scmp.ne.s32.totalorder %s62, %s63
      %p74 = scmp.eq.s32.totalorder %s54, 0
      %p75 = por %p73, %p74
      %p76 = scmp.ne.s32.totalorder %s62, %s63
      %p77 = scmp.eq.s32.totalorder %s55, 1
      %p78 = por %p76, %p77
      %p80 = scmp.ne.s32.totalorder %s63, %s79
      %p81 = scmp.eq.s32.totalorder %s55, 0
      %p82 = por %p80, %p81
      %s83 = ssub.s32 %s49, %s56
      %p84 = scmp.eq.s32.totalorder %s83, 0
      %s86 = sadd.s32 %s85, 1
      %s87 = scalar_select %p84, %s85, %s86
      %p90 = pneg %p84
      %p91 = scmp.eq.s32.totalorder %s49, 1
      %p92 = por %p90, %p91
      %p93 = scmp.ne.s32.totalorder %s85, %s88
      %p94 = scmp.eq.s32.totalorder %s49, 0
      %p95 = por %p93, %p94
      %p96 = scmp.ne.s32.totalorder %s85, %s88
      %p97 = scmp.eq.s32.totalorder %s54, 1
      %p98 = por %p96, %p97
      %p99 = scmp.ne.s32.totalorder %s88, %s89
      %p100 = scmp.eq.s32.totalorder %s54, 0
      %p101 = por %p99, %p100
      %p102 = scmp.ne.s32.totalorder %s88, %s89
      %p103 = scmp.eq.s32.totalorder %s55, 1
      %p104 = por %p102, %p103
      %p106 = scmp.ne.s32.totalorder %s89, %s105
      %p107 = scmp.eq.s32.totalorder %s55, 0
      %p108 = por %p106, %p107
      %s110 = sadd.s32 %s109, 1
      %p113 = scmp.eq.s32.totalorder %s49, 1
      %p114 = scmp.ne.s32.totalorder %s109, %s111
      %p115 = scmp.eq.s32.totalorder %s49, 0
      %p116 = por %p114, %p115
      %p117 = scmp.ne.s32.totalorder %s109, %s111
      %p118 = scmp.eq.s32.totalorder %s54, 1
      %p119 = por %p117, %p118
      %p120 = scmp.ne.s32.totalorder %s111, %s112
      %p121 = scmp.eq.s32.totalorder %s54, 0
      %p122 = por %p120, %p121
      %p123 = scmp.ne.s32.totalorder %s111, %s112
      %p124 = scmp.eq.s32.totalorder %s55, 1
      %p125 = por %p123, %p124
      %p127 = scmp.ne.s32.totalorder %s112, %s126
      %p128 = scmp.eq.s32.totalorder %s55, 0
      %p129 = por %p127, %p128
      %s131 = sadd.s32 %s130, 1
      %p134 = scmp.eq.s32.totalorder %s49, 1
      %p135 = scmp.ne.s32.totalorder %s130, %s132
      %p136 = scmp.eq.s32.totalorder %s49, 0
      %p137 = por %p135, %p136
      %p138 = scmp.ne.s32.totalorder %s130, %s132
      %p139 = scmp.eq.s32.totalorder %s54, 1
      %p140 = por %p138, %p139
      %p141 = scmp.ne.s32.totalorder %s132, %s133
      %p142 = scmp.eq.s32.totalorder %s54, 0
      %p143 = por %p141, %p142
      %p144 = scmp.ne.s32.totalorder %s132, %s133
      %p145 = scmp.eq.s32.totalorder %s55, 1
      %p146 = por %p144, %p145
      %p148 = scmp.ne.s32.totalorder %s133, %s147
      %p149 = scmp.eq.s32.totalorder %s55, 0
      %p150 = por %p148, %p149
      %s152 = sadd.s32 %s151, 1
      %p155 = scmp.eq.s32.totalorder %s49, 1
      %p156 = scmp.ne.s32.totalorder %s151, %s153
      %p157 = scmp.eq.s32.totalorder %s49, 0
      %p158 = por %p156, %p157
      %p159 = scmp.ne.s32.totalorder %s151, %s153
      %p160 = scmp.eq.s32.totalorder %s54, 1
      %p161 = por %p159, %p160
      %p162 = scmp.ne.s32.totalorder %s153, %s154
      %p163 = scmp.eq.s32.totalorder %s54, 0
      %p164 = por %p162, %p163
      %p165 = scmp.ne.s32.totalorder %s153, %s154
      %p166 = scmp.eq.s32.totalorder %s55, 1
      %p167 = por %p165, %p166
      %p169 = scmp.ne.s32.totalorder %s154, %s168
      %p170 = scmp.eq.s32.totalorder %s55, 0
      %p171 = por %p169, %p170
      %s173 = sadd.s32 %s172, 1
      %p176 = scmp.eq.s32.totalorder %s49, 1
      %p177 = scmp.ne.s32.totalorder %s172, %s174
      %p178 = scmp.eq.s32.totalorder %s49, 0
      %p179 = por %p177, %p178
      %p180 = scmp.ne.s32.totalorder %s172, %s174
      %p181 = scmp.eq.s32.totalorder %s54, 1
      %p182 = por %p180, %p181
      %p183 = scmp.ne.s32.totalorder %s174, %s175
      %p184 = scmp.eq.s32.totalorder %s54, 0
      %p185 = por %p183, %p184
      %p186 = scmp.ne.s32.totalorder %s174, %s175
      %p187 = scmp.eq.s32.totalorder %s55, 1
      %p188 = por %p186, %p187
      %p190 = scmp.ne.s32.totalorder %s175, %s189
      %p191 = scmp.eq.s32.totalorder %s55, 0
      %p192 = por %p190, %p191
      %s194 = sadd.s32 %s193, 1
      %p197 = scmp.eq.s32.totalorder %s49, 1
      %p198 = scmp.ne.s32.totalorder %s193, %s195
      %p199 = scmp.eq.s32.totalorder %s49, 0
      %p200 = por %p198, %p199
      %p201 = scmp.ne.s32.totalorder %s193, %s195
      %p202 = scmp.eq.s32.totalorder %s54, 1
      %p203 = por %p201, %p202
      %p204 = scmp.ne.s32.totalorder %s195, %s196
      %p205 = scmp.eq.s32.totalorder %s54, 0
      %p206 = por %p204, %p205
      %p207 = scmp.ne.s32.totalorder %s195, %s196
      %p208 = scmp.eq.s32.totalorder %s55, 1
      %p209 = por %p207, %p208
      %p211 = scmp.ne.s32.totalorder %s196, %s210
      %p212 = scmp.eq.s32.totalorder %s55, 0
      %p213 = por %p211, %p212
      %s215 = sadd.s32 %s214, 1
      %p218 = scmp.eq.s32.totalorder %s49, 1
      %p219 = scmp.ne.s32.totalorder %s214, %s216
      %p220 = scmp.eq.s32.totalorder %s49, 0
      %p221 = por %p219, %p220
      %p222 = scmp.ne.s32.totalorder %s214, %s216
      %p223 = scmp.eq.s32.totalorder %s54, 1
      %p224 = por %p222, %p223
      %p225 = scmp.ne.s32.totalorder %s216, %s217
      %p226 = scmp.eq.s32.totalorder %s54, 0
      %p227 = por %p225, %p226
      %p228 = scmp.ne.s32.totalorder %s216, %s217
      %p229 = scmp.eq.s32.totalorder %s55, 1
      %p230 = por %p228, %p229
      %p232 = scmp.ne.s32.totalorder %s217, %s231
      %p233 = scmp.eq.s32.totalorder %s55, 0
      %p234 = por %p232, %p233
      %s236 = sadd.s32 %s235, 1
      %p239 = scmp.eq.s32.totalorder %s49, 1
      %p240 = scmp.ne.s32.totalorder %s235, %s237
      %p241 = scmp.eq.s32.totalorder %s49, 0
      %p242 = por %p240, %p241
      %p243 = scmp.ne.s32.totalorder %s235, %s237
      %p244 = scmp.eq.s32.totalorder %s54, 1
      %p245 = por %p243, %p244
      %p246 = scmp.ne.s32.totalorder %s237, %s238
      %p247 = scmp.eq.s32.totalorder %s54, 0
      %p248 = por %p246, %p247
      %p249 = scmp.ne.s32.totalorder %s237, %s238
      %p250 = scmp.eq.s32.totalorder %s55, 1
      %p251 = por %p249, %p250
      %p253 = scmp.ne.s32.totalorder %s238, %s252
      %p254 = scmp.eq.s32.totalorder %s55, 0
      %p255 = por %p253, %p254
      %s257 = sadd.s32 %s256, 1
      %p260 = scmp.eq.s32.totalorder %s49, 1
      %p261 = scmp.ne.s32.totalorder %s256, %s258
      %p262 = scmp.eq.s32.totalorder %s49, 0
      %p263 = por %p261, %p262
      %p264 = scmp.ne.s32.totalorder %s256, %s258
      %p265 = scmp.eq.s32.totalorder %s54, 1
      %p266 = por %p264, %p265
      %p267 = scmp.ne.s32.totalorder %s258, %s259
      %p268 = scmp.eq.s32.totalorder %s54, 0
      %p269 = por %p267, %p268
      %p270 = scmp.ne.s32.totalorder %s258, %s259
      %p271 = scmp.eq.s32.totalorder %s55, 1
      %p272 = por %p270, %p271
      %p274 = scmp.ne.s32.totalorder %s259, %s273
      %p275 = scmp.eq.s32.totalorder %s55, 0
      %p276 = por %p274, %p275
      %s278 = sadd.s32 %s277, 1
      %p281 = scmp.eq.s32.totalorder %s49, 1
      %p282 = scmp.ne.s32.totalorder %s277, %s279
      %p283 = scmp.eq.s32.totalorder %s49, 0
      %p284 = por %p282, %p283
      %p285 = scmp.ne.s32.totalorder %s277, %s279
      %p286 = scmp.eq.s32.totalorder %s54, 1
      %p287 = por %p285, %p286
      %p288 = scmp.ne.s32.totalorder %s279, %s280
      %p289 = scmp.eq.s32.totalorder %s54, 0
      %p290 = por %p288, %p289
      %p291 = scmp.ne.s32.totalorder %s279, %s280
      %p292 = scmp.eq.s32.totalorder %s55, 1
      %p293 = por %p291, %p292
      %p295 = scmp.ne.s32.totalorder %s280, %s294
      %p296 = scmp.eq.s32.totalorder %s55, 0
      %p297 = por %p295, %p296
      %s299 = sadd.s32 %s298, 1
      %p302 = scmp.eq.s32.totalorder %s49, 1
      %p303 = scmp.ne.s32.totalorder %s298, %s300
      %p304 = scmp.eq.s32.totalorder %s49, 0
      %p305 = por %p303, %p304
      %p306 = scmp.ne.s32.totalorder %s298, %s300
      %p307 = scmp.eq.s32.totalorder %s54, 1
      %p308 = por %p306, %p307
      %p309 = scmp.ne.s32.totalorder %s300, %s301
      %p310 = scmp.eq.s32.totalorder %s54, 0
      %p311 = por %p309, %p310
      %p312 = scmp.ne.s32.totalorder %s300, %s301
      %p313 = scmp.eq.s32.totalorder %s55, 1
      %p314 = por %p312, %p313
      %p316 = scmp.ne.s32.totalorder %s301, %s315
      %p317 = scmp.eq.s32.totalorder %s55, 0
      %p318 = por %p316, %p317
      %s320 = sadd.s32 %s319, 1
      %p323 = scmp.eq.s32.totalorder %s49, 1
      %p324 = scmp.ne.s32.totalorder %s319, %s321
      %p325 = scmp.eq.s32.totalorder %s49, 0
      %p326 = por %p324, %p325
      %p327 = scmp.ne.s32.totalorder %s319, %s321
      %p328 = scmp.eq.s32.totalorder %s54, 1
      %p329 = por %p327, %p328
      %p330 = scmp.ne.s32.totalorder %s321, %s322
      %p331 = scmp.eq.s32.totalorder %s54, 0
      %p332 = por %p330, %p331
      %p333 = scmp.ne.s32.totalorder %s321, %s322
      %p334 = scmp.eq.s32.totalorder %s55, 1
      %p335 = por %p333, %p334
      %p337 = scmp.ne.s32.totalorder %s322, %s336
      %p338 = scmp.eq.s32.totalorder %s55, 0
      %p339 = por %p337, %p338
      %s341 = sadd.s32 %s340, 1
      %p344 = scmp.eq.s32.totalorder %s49, 1
      %p345 = scmp.ne.s32.totalorder %s340, %s342
      %p346 = scmp.eq.s32.totalorder %s49, 0
      %p347 = por %p345, %p346
      %p348 = scmp.ne.s32.totalorder %s340, %s342
      %p349 = scmp.eq.s32.totalorder %s54, 1
      %p350 = por %p348, %p349
      %p351 = scmp.ne.s32.totalorder %s342, %s343
      %p352 = scmp.eq.s32.totalorder %s54, 0
      %p353 = por %p351, %p352
      %p354 = scmp.ne.s32.totalorder %s342, %s343
      %p355 = scmp.eq.s32.totalorder %s55, 1
      %p356 = por %p354, %p355
      %p358 = scmp.ne.s32.totalorder %s343, %s357
      %p359 = scmp.eq.s32.totalorder %s55, 0
      %p360 = por %p358, %p359
      %s362 = sadd.s32 %s361, 1
      %p365 = scmp.eq.s32.totalorder %s49, 1
      %p366 = scmp.ne.s32.totalorder %s361, %s363
      %p367 = scmp.eq.s32.totalorder %s49, 0
      %p368 = por %p366, %p367
      %p369 = scmp.ne.s32.totalorder %s361, %s363
      %p370 = scmp.eq.s32.totalorder %s54, 1
      %p371 = por %p369, %p370
      %p372 = scmp.ne.s32.totalorder %s363, %s364
      %p373 = scmp.eq.s32.totalorder %s54, 0
      %p374 = por %p372, %p373
      %p375 = scmp.ne.s32.totalorder %s363, %s364
      %p376 = scmp.eq.s32.totalorder %s55, 1
      %p377 = por %p375, %p376
      %p379 = scmp.ne.s32.totalorder %s364, %s378
      %p380 = scmp.eq.s32.totalorder %s55, 0
      %p381 = por %p379, %p380
      %s383 = sadd.s32 %s382, 1
      %p386 = scmp.eq.s32.totalorder %s49, 1
      %p387 = scmp.ne.s32.totalorder %s382, %s384
      %p388 = scmp.eq.s32.totalorder %s49, 0
      %p389 = por %p387, %p388
      %p390 = scmp.ne.s32.totalorder %s382, %s384
      %p391 = scmp.eq.s32.totalorder %s54, 1
      %p392 = por %p390, %p391
      %p393 = scmp.ne.s32.totalorder %s384, %s385
      %p394 = scmp.eq.s32.totalorder %s54, 0
      %p395 = por %p393, %p394
      %p396 = scmp.ne.s32.totalorder %s384, %s385
      %p397 = scmp.eq.s32.totalorder %s55, 1
      %p398 = por %p396, %p397
      %p400 = scmp.ne.s32.totalorder %s385, %s399
      %p401 = scmp.eq.s32.totalorder %s55, 0
      %p402 = por %p400, %p401
      %s404 = sadd.s32 %s403, 1
      %p407 = scmp.eq.s32.totalorder %s49, 1
      %p408 = scmp.ne.s32.totalorder %s403, %s405
      %p409 = scmp.eq.s32.totalorder %s49, 0
      %p410 = por %p408, %p409
      %p411 = scmp.ne.s32.totalorder %s403, %s405
      %p412 = scmp.eq.s32.totalorder %s54, 1
      %p413 = por %p411, %p412
      %p414 = scmp.ne.s32.totalorder %s405, %s406
      %p415 = scmp.eq.s32.totalorder %s54, 0
      %p416 = por %p414, %p415
      %p417 = scmp.ne.s32.totalorder %s405, %s406
      %p418 = scmp.eq.s32.totalorder %s55, 1
      %p419 = por %p417, %p418
      %p421 = scmp.ne.s32.totalorder %s406, %s420
      %p422 = scmp.eq.s32.totalorder %s55, 0
      %p423 = por %p421, %p422
      %s425 = sadd.s32 %s424, 1
      %p428 = scmp.eq.s32.totalorder %s49, 1
      %p429 = scmp.ne.s32.totalorder %s424, %s426
      %p430 = scmp.eq.s32.totalorder %s49, 0
      %p431 = por %p429, %p430
      %p432 = scmp.ne.s32.totalorder %s424, %s426
      %p433 = scmp.eq.s32.totalorder %s54, 1
      %p434 = por %p432, %p433
      %p435 = scmp.ne.s32.totalorder %s426, %s427
      %p436 = scmp.eq.s32.totalorder %s54, 0
      %p437 = por %p435, %p436
      %p438 = scmp.ne.s32.totalorder %s426, %s427
      %p439 = scmp.eq.s32.totalorder %s55, 1
      %p440 = por %p438, %p439
      %p442 = scmp.ne.s32.totalorder %s427, %s441
      %p443 = scmp.eq.s32.totalorder %s55, 0
      %p444 = por %p442, %p443
      %s446 = sadd.s32 %s445, 1
      %p449 = scmp.eq.s32.totalorder %s49, 1
      %p450 = scmp.ne.s32.totalorder %s445, %s447
      %p451 = scmp.eq.s32.totalorder %s49, 0
      %p452 = por %p450, %p451
      %p453 = scmp.ne.s32.totalorder %s445, %s447
      %p454 = scmp.eq.s32.totalorder %s54, 1
      %p455 = por %p453, %p454
      %p456 = scmp.ne.s32.totalorder %s447, %s448
      %p457 = scmp.eq.s32.totalorder %s54, 0
      %p458 = por %p456, %p457
      %p459 = scmp.ne.s32.totalorder %s447, %s448
      %p460 = scmp.eq.s32.totalorder %s55, 1
      %p461 = por %p459, %p460
      %p463 = scmp.ne.s32.totalorder %s448, %s462
      %p464 = scmp.eq.s32.totalorder %s55, 0
      %p465 = por %p463, %p464
      %s467 = sadd.s32 %s466, 1
      %p470 = scmp.eq.s32.totalorder %s49, 1
      %p471 = scmp.ne.s32.totalorder %s466, %s468
      %p472 = scmp.eq.s32.totalorder %s49, 0
      %p473 = por %p471, %p472
      %p474 = scmp.ne.s32.totalorder %s466, %s468
      %p475 = scmp.eq.s32.totalorder %s54, 1
      %p476 = por %p474, %p475
      %p477 = scmp.ne.s32.totalorder %s468, %s469
      %p478 = scmp.eq.s32.totalorder %s54, 0
      %p479 = por %p477, %p478
      %p480 = scmp.ne.s32.totalorder %s468, %s469
      %p481 = scmp.eq.s32.totalorder %s55, 1
      %p482 = por %p480, %p481
      %p484 = scmp.ne.s32.totalorder %s469, %s483
      %p485 = scmp.eq.s32.totalorder %s55, 0
      %p486 = por %p484, %p485
      %s488 = sadd.s32 %s487, 1
      %p491 = scmp.eq.s32.totalorder %s49, 1
      %p492 = scmp.ne.s32.totalorder %s487, %s489
      %p493 = scmp.eq.s32.totalorder %s49, 0
      %p494 = por %p492, %p493
      %p495 = scmp.ne.s32.totalorder %s487, %s489
      %p496 = scmp.eq.s32.totalorder %s54, 1
      %p497 = por %p495, %p496
      %p498 = scmp.ne.s32.totalorder %s489, %s490
      %p499 = scmp.eq.s32.totalorder %s54, 0
      %p500 = por %p498, %p499
      %p501 = scmp.ne.s32.totalorder %s489, %s490
      %p502 = scmp.eq.s32.totalorder %s55, 1
      %p503 = por %p501, %p502
      %p505 = scmp.ne.s32.totalorder %s490, %s504
      %p506 = scmp.eq.s32.totalorder %s55, 0
      %p507 = por %p505, %p506
      %s509 = sadd.s32 %s508, 1
      %p512 = scmp.eq.s32.totalorder %s49, 1
      %p513 = scmp.ne.s32.totalorder %s508, %s510
      %p514 = scmp.eq.s32.totalorder %s49, 0
      %p515 = por %p513, %p514
      %p516 = scmp.ne.s32.totalorder %s508, %s510
      %p517 = scmp.eq.s32.totalorder %s54, 1
      %p518 = por %p516, %p517
      %p519 = scmp.ne.s32.totalorder %s510, %s511
      %p520 = scmp.eq.s32.totalorder %s54, 0
      %p521 = por %p519, %p520
      %p522 = scmp.ne.s32.totalorder %s510, %s511
      %p523 = scmp.eq.s32.totalorder %s55, 1
      %p524 = por %p522, %p523
      %p526 = scmp.ne.s32.totalorder %s511, %s525
      %p527 = scmp.eq.s32.totalorder %s55, 0
      %p528 = por %p526, %p527
      %s530 = sadd.s32 %s529, 1
      %p533 = scmp.eq.s32.totalorder %s49, 1
      %p534 = scmp.ne.s32.totalorder %s529, %s531
      %p535 = scmp.eq.s32.totalorder %s49, 0
      %p536 = por %p534, %p535
      %p537 = scmp.ne.s32.totalorder %s529, %s531
      %p538 = scmp.eq.s32.totalorder %s54, 1
      %p539 = por %p537, %p538
      %p540 = scmp.ne.s32.totalorder %s531, %s532
      %p541 = scmp.eq.s32.totalorder %s54, 0
      %p542 = por %p540, %p541
      %p543 = scmp.ne.s32.totalorder %s531, %s532
      %p544 = scmp.eq.s32.totalorder %s55, 1
      %p545 = por %p543, %p544
      %p547 = scmp.ne.s32.totalorder %s532, %s546
      %p548 = scmp.eq.s32.totalorder %s55, 0
      %p549 = por %p547, %p548
      %s551 = sadd.s32 %s550, 1
      %p554 = scmp.eq.s32.totalorder %s49, 1
      %p555 = scmp.ne.s32.totalorder %s550, %s552
      %p556 = scmp.eq.s32.totalorder %s49, 0
      %p557 = por %p555, %p556
      %p558 = scmp.ne.s32.totalorder %s550, %s552
      %p559 = scmp.eq.s32.totalorder %s54, 1
      %p560 = por %p558, %p559
      %p561 = scmp.ne.s32.totalorder %s552, %s553
      %p562 = scmp.eq.s32.totalorder %s54, 0
      %p563 = por %p561, %p562
      %p564 = scmp.ne.s32.totalorder %s552, %s553
      %p565 = scmp.eq.s32.totalorder %s55, 1
      %p566 = por %p564, %p565
      %p568 = scmp.ne.s32.totalorder %s553, %s567
      %p569 = scmp.eq.s32.totalorder %s55, 0
      %p570 = por %p568, %p569
      %s571 = ssub.s32 %s49, %s56
      %p572 = scmp.eq.s32.totalorder %s571, 0
      %s574 = sadd.s32 %s573, 1
      %s575 = scalar_select %p572, %s573, %s574
      %p578 = pneg %p572
      %p579 = scmp.eq.s32.totalorder %s49, 1
      %p580 = por %p578, %p579
      %p581 = scmp.ne.s32.totalorder %s573, %s576
      %p582 = scmp.eq.s32.totalorder %s49, 0
      %p583 = por %p581, %p582
      %p584 = scmp.ne.s32.totalorder %s573, %s576
      %p585 = scmp.eq.s32.totalorder %s54, 1
      %p586 = por %p584, %p585
      %p587 = scmp.ne.s32.totalorder %s576, %s577
      %p588 = scmp.eq.s32.totalorder %s54, 0
      %p589 = por %p587, %p588
      %p590 = scmp.ne.s32.totalorder %s576, %s577
      %p591 = scmp.eq.s32.totalorder %s55, 1
      %p592 = por %p590, %p591
      %p594 = scmp.ne.s32.totalorder %s577, %s593
      %p595 = scmp.eq.s32.totalorder %s55, 0
      %p596 = por %p594, %p595
      %s597 = ssub.s32 %s49, %s56
      %p598 = scmp.eq.s32.totalorder %s597, 0
      %s600 = sadd.s32 %s599, 1
      %s601 = scalar_select %p598, %s599, %s600
      %p604 = pneg %p598
      %p605 = scmp.eq.s32.totalorder %s49, 1
      %p606 = por %p604, %p605
      %p607 = scmp.ne.s32.totalorder %s599, %s602
      %p608 = scmp.eq.s32.totalorder %s49, 0
      %p609 = por %p607, %p608
      %p610 = scmp.ne.s32.totalorder %s599, %s602
      %p611 = scmp.eq.s32.totalorder %s54, 1
      %p612 = por %p610, %p611
      %p613 = scmp.ne.s32.totalorder %s602, %s603
      %p614 = scmp.eq.s32.totalorder %s54, 0
      %p615 = por %p613, %p614
      %p616 = scmp.ne.s32.totalorder %s602, %s603
      %p617 = scmp.eq.s32.totalorder %s55, 1
      %p618 = por %p616, %p617
      %p620 = scmp.ne.s32.totalorder %s603, %s619
      %p621 = scmp.eq.s32.totalorder %s55, 0
      %p622 = por %p620, %p621
      %p623 = scmp.le.s32.totalorder 1, %s49
      %p624 = scmp.lt.s32.totalorder %s49, 3
      %p625 = pnand %p623, %p624
      %p626 = pneg %p625
      // Predicated region
      $region9: #{ident_layer2.1} parent=5 // pred_check
        _
      $region10: #{ident_layer2.1} parent=5 // pred_check_branch
        %628 = sbr.rel (%p625) target = $region12
      $region11: #{ident_layer2.1} parent=5 // pred_region
        %s629 = ssub.s32 %s49, 1
        // Predicated region
        $region13: #{ident_layer2.1} parent=11 // pred_check
          %p630 = pneg %p122
        $region14: #{ident_layer2.1} parent=11 // pred_check_branch
          %632 = sbr.rel (%p630) target = $region16
        $region15: #{ident_layer2.1} parent=11 // pred_region
          %s634 = ssub.s32 8192, 8192
          %635 = vsyncadd [#allocation6], %s634
          %s636 = sshll.u32 [#allocation7], 4
          %s637 = int_to_ptr.vmem [resolvable:$true] %s636
          %642 = dma.hbm_to_vmem [thread:$0]  %s2, 8192, %s637, [#allocation6], 256, 256, 16
        $region16: #{ident_layer2.1} parent=11 // pred_fallthru
          _
        // Predicated region
        $region17: #{ident_layer2.1} parent=11 // pred_check
          %p643 = pneg %p143
        $region18: #{ident_layer2.1} parent=11 // pred_check_branch
          %645 = sbr.rel (%p643) target = $region20
        $region19: #{ident_layer2.1} parent=11 // pred_region
          _
        $region20: #{ident_layer2.1} parent=11 // pred_fallthru
          _
        // Predicated region
        $region21: #{ident_layer2.1} parent=11 // pred_check
          %p646 = pneg %p164
        $region22: #{ident_layer2.1} parent=11 // pred_check_branch
          %648 = sbr.rel (%p646) target = $region24
        $region23: #{ident_layer2.1} parent=11 // pred_region
          %s650 = ssub.s32 8192, 8192
          %651 = vsyncadd [#allocation9], %s650
          %s652 = sshll.u32 [#allocation8], 4
          %s653 = int_to_ptr.vmem [resolvable:$true] %s652
          %658 = dma.hbm_to_vmem [thread:$0]  %s4, 8192, %s653, [#allocation9], 256, 256, 16
        $region24: #{ident_layer2.1} parent=11 // pred_fallthru
          _
        // Predicated region
        $region25: #{ident_layer2.1} parent=11 // pred_check
          %p659 = pneg %p185
        $region26: #{ident_layer2.1} parent=11 // pred_check_branch
          %661 = sbr.rel (%p659) target = $region28
        $region27: #{ident_layer2.1} parent=11 // pred_region
          _
        $region28: #{ident_layer2.1} parent=11 // pred_fallthru
          _
        // Predicated region
        $region29: #{ident_layer2.1} parent=11 // pred_check
          %p662 = pneg %p206
        $region30: #{ident_layer2.1} parent=11 // pred_check_branch
          %664 = sbr.rel (%p662) target = $region32
        $region31: #{ident_layer2.1} parent=11 // pred_region
          %s666 = ssub.s32 8192, 8192
          %667 = vsyncadd [#allocation9], %s666
          %s668 = sshll.u32 [#allocation10], 4
          %s669 = int_to_ptr.vmem [resolvable:$true] %s668
          %674 = dma.hbm_to_vmem [thread:$0]  %s6, 8192, %s669, [#allocation9], 256, 256, 16
        $region32: #{ident_layer2.1} parent=11 // pred_fallthru
          _
        // Predicated region
        $region33: #{ident_layer2.1} parent=11 // pred_check
          %p675 = pneg %p227
        $region34: #{ident_layer2.1} parent=11 // pred_check_branch
          %677 = sbr.rel (%p675) target = $region36
        $region35: #{ident_layer2.1} parent=11 // pred_region
          _
        $region36: #{ident_layer2.1} parent=11 // pred_fallthru
          _
        // Predicated region
        $region37: #{ident_layer2.1} parent=11 // pred_check
          %p678 = pneg %p248
        $region38: #{ident_layer2.1} parent=11 // pred_check_branch
          %680 = sbr.rel (%p678) target = $region40
        $region39: #{ident_layer2.1} parent=11 // pred_region
          %s682 = ssub.s32 8192, 8192
          %683 = vsyncadd [#allocation12], %s682
          %s684 = sshll.u32 [#allocation11], 4
          %s685 = int_to_ptr.vmem [resolvable:$true] %s684
          %690 = dma.hbm_to_vmem [thread:$0]  %s8, 8192, %s685, [#allocation12], 256, 256, 16
        $region40: #{ident_layer2.1} parent=11 // pred_fallthru
          _
        // Predicated region
        $region41: #{ident_layer2.1} parent=11 // pred_check
          %p691 = pneg %p269
        $region42: #{ident_layer2.1} parent=11 // pred_check_branch
          %693 = sbr.rel (%p691) target = $region44
        $region43: #{ident_layer2.1} parent=11 // pred_region
          _
        $region44: #{ident_layer2.1} parent=11 // pred_fallthru
          _
        // Predicated region
        $region45: #{ident_layer2.1} parent=11 // pred_check
          %p694 = pneg %p290
        $region46: #{ident_layer2.1} parent=11 // pred_check_branch
          %696 = sbr.rel (%p694) target = $region48
        $region47: #{ident_layer2.1} parent=11 // pred_region
          _
        $region48: #{ident_layer2.1} parent=11 // pred_fallthru
          _
        // Predicated region
        $region49: #{ident_layer2.1} parent=11 // pred_check
          %p697 = pneg %p311
        $region50: #{ident_layer2.1} parent=11 // pred_check_branch
          %699 = sbr.rel (%p697) target = $region52
        $region51: #{ident_layer2.1} parent=11 // pred_region
          _
        $region52: #{ident_layer2.1} parent=11 // pred_fallthru
          _
        // Predicated region
        $region53: #{ident_layer2.1} parent=11 // pred_check
          %p700 = pneg %p332
        $region54: #{ident_layer2.1} parent=11 // pred_check_branch
          %702 = sbr.rel (%p700) target = $region56
        $region55: #{ident_layer2.1} parent=11 // pred_region
          %s704 = ssub.s32 8192, 8192
          %705 = vsyncadd [#allocation12], %s704
          %s706 = sshll.u32 [#allocation13], 4
          %s707 = int_to_ptr.vmem [resolvable:$true] %s706
          %712 = dma.hbm_to_vmem [thread:$0]  %s12, 8192, %s707, [#allocation12], 256, 256, 16
        $region56: #{ident_layer2.1} parent=11 // pred_fallthru
          _
        // Predicated region
        $region57: #{ident_layer2.1} parent=11 // pred_check
          %p713 = pneg %p353
        $region58: #{ident_layer2.1} parent=11 // pred_check_branch
          %715 = sbr.rel (%p713) target = $region60
        $region59: #{ident_layer2.1} parent=11 // pred_region
          _
        $region60: #{ident_layer2.1} parent=11 // pred_fallthru
          _
        // Predicated region
        $region61: #{ident_layer2.1} parent=11 // pred_check
          %p716 = pneg %p374
        $region62: #{ident_layer2.1} parent=11 // pred_check_branch
          %718 = sbr.rel (%p716) target = $region64
        $region63: #{ident_layer2.1} parent=11 // pred_region
          %s720 = ssub.s32 8192, 8192
          %721 = vsyncadd [#allocation15], %s720
          %s722 = sshll.u32 [#allocation14], 4
          %s723 = int_to_ptr.vmem [resolvable:$true] %s722
          %728 = dma.hbm_to_vmem [thread:$0]  %s14, 8192, %s723, [#allocation15], 256, 256, 16
        $region64: #{ident_layer2.1} parent=11 // pred_fallthru
          _
        // Predicated region
        $region65: #{ident_layer2.1} parent=11 // pred_check
          %p729 = pneg %p395
        $region66: #{ident_layer2.1} parent=11 // pred_check_branch
          %731 = sbr.rel (%p729) target = $region68
        $region67: #{ident_layer2.1} parent=11 // pred_region
          _
        $region68: #{ident_layer2.1} parent=11 // pred_fallthru
          _
        // Predicated region
        $region69: #{ident_layer2.1} parent=11 // pred_check
          %p732 = pneg %p416
        $region70: #{ident_layer2.1} parent=11 // pred_check_branch
          %734 = sbr.rel (%p732) target = $region72
        $region71: #{ident_layer2.1} parent=11 // pred_region
          %s736 = ssub.s32 8192, 8192
          %737 = vsyncadd [#allocation15], %s736
          %s738 = sshll.u32 [#allocation16], 4
          %s739 = int_to_ptr.vmem [resolvable:$true] %s738
          %744 = dma.hbm_to_vmem [thread:$0]  %s16, 8192, %s739, [#allocation15], 256, 256, 16
        $region72: #{ident_layer2.1} parent=11 // pred_fallthru
          _
        // Predicated region
        $region73: #{ident_layer2.1} parent=11 // pred_check
          %p745 = pneg %p437
        $region74: #{ident_layer2.1} parent=11 // pred_check_branch
          %747 = sbr.rel (%p745) target = $region76
        $region75: #{ident_layer2.1} parent=11 // pred_region
          _
        $region76: #{ident_layer2.1} parent=11 // pred_fallthru
          _
        // Predicated region
        $region77: #{ident_layer2.1} parent=11 // pred_check
          %p748 = pneg %p458
        $region78: #{ident_layer2.1} parent=11 // pred_check_branch
          %750 = sbr.rel (%p748) target = $region80
        $region79: #{ident_layer2.1} parent=11 // pred_region
          %s752 = ssub.s32 8192, 8192
          %753 = vsyncadd [#allocation18], %s752
          %s754 = sshll.u32 [#allocation17], 4
          %s755 = int_to_ptr.vmem [resolvable:$true] %s754
          %760 = dma.hbm_to_vmem [thread:$0]  %s18, 8192, %s755, [#allocation18], 256, 256, 16
        $region80: #{ident_layer2.1} parent=11 // pred_fallthru
          _
        // Predicated region
        $region81: #{ident_layer2.1} parent=11 // pred_check
          %p761 = pneg %p479
        $region82: #{ident_layer2.1} parent=11 // pred_check_branch
          %763 = sbr.rel (%p761) target = $region84
        $region83: #{ident_layer2.1} parent=11 // pred_region
          _
        $region84: #{ident_layer2.1} parent=11 // pred_fallthru
          _
        // Predicated region
        $region85: #{ident_layer2.1} parent=11 // pred_check
          %p764 = pneg %p500
        $region86: #{ident_layer2.1} parent=11 // pred_check_branch
          %766 = sbr.rel (%p764) target = $region88
        $region87: #{ident_layer2.1} parent=11 // pred_region
          %s768 = ssub.s32 8192, 8192
          %769 = vsyncadd [#allocation18], %s768
          %s770 = sshll.u32 [#allocation19], 4
          %s771 = int_to_ptr.vmem [resolvable:$true] %s770
          %776 = dma.hbm_to_vmem [thread:$0]  %s20, 8192, %s771, [#allocation18], 256, 256, 16
        $region88: #{ident_layer2.1} parent=11 // pred_fallthru
          _
        // Predicated region
        $region89: #{ident_layer2.1} parent=11 // pred_check
          %p777 = pneg %p521
        $region90: #{ident_layer2.1} parent=11 // pred_check_branch
          %779 = sbr.rel (%p777) target = $region92
        $region91: #{ident_layer2.1} parent=11 // pred_region
          _
        $region92: #{ident_layer2.1} parent=11 // pred_fallthru
          _
        // Predicated region
        $region93: #{ident_layer2.1} parent=11 // pred_check
          %p780 = pneg %p542
        $region94: #{ident_layer2.1} parent=11 // pred_check_branch
          %782 = sbr.rel (%p780) target = $region96
        $region95: #{ident_layer2.1} parent=11 // pred_region
          %s784 = ssub.s32 8192, 8192
          %785 = vsyncadd [#allocation21], %s784
          %s786 = sshll.u32 [#allocation20], 4
          %s787 = int_to_ptr.vmem [resolvable:$true] %s786
          %792 = dma.hbm_to_vmem [thread:$0]  %s22, 8192, %s787, [#allocation21], 256, 256, 16
        $region96: #{ident_layer2.1} parent=11 // pred_fallthru
          _
        // Predicated region
        $region97: #{ident_layer2.1} parent=11 // pred_check
          %p793 = pneg %p563
        $region98: #{ident_layer2.1} parent=11 // pred_check_branch
          %795 = sbr.rel (%p793) target = $region100
        $region99: #{ident_layer2.1} parent=11 // pred_region
          _
        $region100: #{ident_layer2.1} parent=11 // pred_fallthru
          _
      $region12: #{ident_layer2.1} parent=5 // pred_fallthru
        _
      %p796 = scmp.lt.s32.totalorder %s49, 2
      // Predicated region
      $region101: #{ident_layer2.1} parent=5 // pred_check
        %p797 = pneg %p796
      $region102: #{ident_layer2.1} parent=5 // pred_check_branch
        %799 = sbr.rel (%p797) target = $region104
      $region103: #{ident_layer2.1} parent=5 // pred_region
        // Predicated region
        $region105: #{ident_layer2.1} parent=103 // pred_check
          %p800 = pneg %p69
        $region106: #{ident_layer2.1} parent=103 // pred_check_branch
          %802 = sbr.rel (%p800) target = $region108
        $region107: #{ident_layer2.1} parent=103 // pred_region
          %s803 = sand.u32 %s59, 1
          %s804 = scalar_lea.sflag [#allocation3], %s803
          %s805 = sand.u32 %s59, 1
          %s806 = smul.addr %s805, 16
          %s807 = scalar_lea.vmem [#allocation2], %s806
          %s809 = ssub.s32 256, 256
          %810 = vsyncadd %s804, %s809
          %s811 = smul.addr %s49, 2
          %s812 = smul.addr %s811, 128
          %s813 = scalar_lea.hbm %s0, %s812
          %s815 = sshll.u32 %s807, 4
          %s816 = int_to_ptr.vmem [resolvable:$true] %s815
          %818 = dma.hbm_to_vmem [thread:$0]  %s813, 256, %s816, %s804
        $region108: #{ident_layer2.1} parent=103 // pred_fallthru
          _
        // Predicated region
        $region109: #{ident_layer2.1} parent=103 // pred_check
          %p819 = pneg %p95
        $region110: #{ident_layer2.1} parent=103 // pred_check_branch
          %821 = sbr.rel (%p819) target = $region112
        $region111: #{ident_layer2.1} parent=103 // pred_region
          %s822 = sand.u32 %s49, 1
          %s823 = scalar_lea.sflag [#allocation6], %s822
          %s824 = sand.u32 %s85, 1
          %s825 = smul.addr %s824, 16
          %s826 = scalar_lea.vmem [#allocation5], %s825
          %s828 = ssub.s32 256, 256
          %829 = vsyncadd %s823, %s828
          %s830 = smul.addr %s49, 2
          %s831 = smul.addr %s830, 128
          %s832 = scalar_lea.hbm %s1, %s831
          %s834 = sshll.u32 %s826, 4
          %s835 = int_to_ptr.vmem [resolvable:$true] %s834
          %837 = dma.hbm_to_vmem [thread:$0]  %s832, 256, %s835, %s823
        $region112: #{ident_layer2.1} parent=103 // pred_fallthru
          _
      $region104: #{ident_layer2.1} parent=5 // pred_fallthru
        _
      %p838 = scmp.le.s32.totalorder 1, %s49
      %p839 = scmp.lt.s32.totalorder %s49, 3
      %p840 = pnand %p838, %p839
      %p841 = pneg %p840
      // Predicated region
      $region113: #{ident_layer2.1} parent=5 // pred_check
        _
      $region114: #{ident_layer2.1} parent=5 // pred_check_branch
        %843 = sbr.rel (%p840) target = $region116
      $region115: #{ident_layer2.1} parent=5 // pred_region
        %s844 = ssub.s32 %s49, 1
        %s845 = sand.u32 %s62, 1
        %s846 = scalar_lea.sflag [#allocation3], %s845
        %s847 = sand.u32 %s62, 1
        %s848 = smul.addr %s847, 16
        %s849 = scalar_lea.vmem [#allocation2], %s848
        // Predicated region
        $region117: #{ident_layer2.1} parent=115 // pred_check
          %p850 = pneg %p75
        $region118: #{ident_layer2.1} parent=115 // pred_check_branch
          %852 = sbr.rel (%p850) target = $region120
        $region119: #{ident_layer2.1} parent=115 // pred_region
          %853 = dma.done %s846, 256
        $region120: #{ident_layer2.1} parent=115 // pred_fallthru
          _
        %s854 = sand.u32 %s54, 1
        %s855 = scalar_lea.sflag [#allocation6], %s854
        %s856 = sand.u32 %s88, 1
        %s857 = smul.addr %s856, 16
        %s858 = scalar_lea.vmem [#allocation5], %s857
        // Predicated region
        $region121: #{ident_layer2.1} parent=115 // pred_check
          %p859 = pneg %p101
        $region122: #{ident_layer2.1} parent=115 // pred_check_branch
          %861 = sbr.rel (%p859) target = $region124
        $region123: #{ident_layer2.1} parent=115 // pred_region
          %862 = dma.done %s855, 256
        $region124: #{ident_layer2.1} parent=115 // pred_fallthru
          _
        // Predicated region
        $region125: #{ident_layer2.1} parent=115 // pred_check
          %p863 = pneg %p122
        $region126: #{ident_layer2.1} parent=115 // pred_check_branch
          %865 = sbr.rel (%p863) target = $region128
        $region127: #{ident_layer2.1} parent=115 // pred_region
          %866 = dma.done [#allocation6], 8192
        $region128: #{ident_layer2.1} parent=115 // pred_fallthru
          _
        // Predicated region
        $region129: #{ident_layer2.1} parent=115 // pred_check
          %p867 = pneg %p164
        $region130: #{ident_layer2.1} parent=115 // pred_check_branch
          %869 = sbr.rel (%p867) target = $region132
        $region131: #{ident_layer2.1} parent=115 // pred_region
          %870 = dma.done [#allocation9], 8192
        $region132: #{ident_layer2.1} parent=115 // pred_fallthru
          _
        // Predicated region
        $region133: #{ident_layer2.1} parent=115 // pred_check
          %p871 = pneg %p206
        $region134: #{ident_layer2.1} parent=115 // pred_check_branch
          %873 = sbr.rel (%p871) target = $region136
        $region135: #{ident_layer2.1} parent=115 // pred_region
          %874 = dma.done [#allocation9], 8192
        $region136: #{ident_layer2.1} parent=115 // pred_fallthru
          _
        // Predicated region
        $region137: #{ident_layer2.1} parent=115 // pred_check
          %p875 = pneg %p248
        $region138: #{ident_layer2.1} parent=115 // pred_check_branch
          %877 = sbr.rel (%p875) target = $region140
        $region139: #{ident_layer2.1} parent=115 // pred_region
          %878 = dma.done [#allocation12], 8192
        $region140: #{ident_layer2.1} parent=115 // pred_fallthru
          _
        // Predicated region
        $region141: #{ident_layer2.1} parent=115 // pred_check
          %p879 = pneg %p332
        $region142: #{ident_layer2.1} parent=115 // pred_check_branch
          %881 = sbr.rel (%p879) target = $region144
        $region143: #{ident_layer2.1} parent=115 // pred_region
          %882 = dma.done [#allocation12], 8192
        $region144: #{ident_layer2.1} parent=115 // pred_fallthru
          _
        // Predicated region
        $region145: #{ident_layer2.1} parent=115 // pred_check
          %p883 = pneg %p374
        $region146: #{ident_layer2.1} parent=115 // pred_check_branch
          %885 = sbr.rel (%p883) target = $region148
        $region147: #{ident_layer2.1} parent=115 // pred_region
          %886 = dma.done [#allocation15], 8192
        $region148: #{ident_layer2.1} parent=115 // pred_fallthru
          _
        // Predicated region
        $region149: #{ident_layer2.1} parent=115 // pred_check
          %p887 = pneg %p416
        $region150: #{ident_layer2.1} parent=115 // pred_check_branch
          %889 = sbr.rel (%p887) target = $region152
        $region151: #{ident_layer2.1} parent=115 // pred_region
          %890 = dma.done [#allocation15], 8192
        $region152: #{ident_layer2.1} parent=115 // pred_fallthru
          _
        // Predicated region
        $region153: #{ident_layer2.1} parent=115 // pred_check
          %p891 = pneg %p458
        $region154: #{ident_layer2.1} parent=115 // pred_check_branch
          %893 = sbr.rel (%p891) target = $region156
        $region155: #{ident_layer2.1} parent=115 // pred_region
          %894 = dma.done [#allocation18], 8192
        $region156: #{ident_layer2.1} parent=115 // pred_fallthru
          _
        // Predicated region
        $region157: #{ident_layer2.1} parent=115 // pred_check
          %p895 = pneg %p500
        $region158: #{ident_layer2.1} parent=115 // pred_check_branch
          %897 = sbr.rel (%p895) target = $region160
        $region159: #{ident_layer2.1} parent=115 // pred_region
          %898 = dma.done [#allocation18], 8192
        $region160: #{ident_layer2.1} parent=115 // pred_fallthru
          _
        // Predicated region
        $region161: #{ident_layer2.1} parent=115 // pred_check
          %p899 = pneg %p542
        $region162: #{ident_layer2.1} parent=115 // pred_check_branch
          %901 = sbr.rel (%p899) target = $region164
        $region163: #{ident_layer2.1} parent=115 // pred_region
          %902 = dma.done [#allocation21], 8192
        $region164: #{ident_layer2.1} parent=115 // pred_fallthru
          _
        %s903 = sand.u32 %s62, 1
        %s904 = scalar_lea.sflag [#allocation3], %s903
        %s905 = sand.u32 %s62, 1
        %s906 = smul.addr %s905, 16
        %s907 = scalar_lea.vmem [#allocation2], %s906
        %p908 = pneg %p75
        %p909 = pneg %p72
        %s910 = sand.u32 %s54, 1
        %s911 = scalar_lea.sflag [#allocation6], %s910
        %s912 = sand.u32 %s88, 1
        %s913 = smul.addr %s912, 16
        %s914 = scalar_lea.vmem [#allocation5], %s913
        %p915 = pneg %p101
        %p916 = pneg %p98
        %p917 = pneg %p122
        %p918 = pneg %p119
        %p919 = pneg %p143
        %p920 = pneg %p140
        %p921 = pneg %p164
        %p922 = pneg %p161
        %p923 = pneg %p185
        %p924 = pneg %p182
        %p925 = pneg %p206
        %p926 = pneg %p203
        %p927 = pneg %p227
        %p928 = pneg %p224
        %p929 = pneg %p248
        %p930 = pneg %p245
        %p931 = pneg %p269
        %p932 = pneg %p266
        %p933 = pneg %p290
        %p934 = pneg %p287
        %p935 = pneg %p311
        %p936 = pneg %p308
        %p937 = pneg %p332
        %p938 = pneg %p329
        %p939 = pneg %p353
        %p940 = pneg %p350
        %p941 = pneg %p374
        %p942 = pneg %p371
        %p943 = pneg %p395
        %p944 = pneg %p392
        %p945 = pneg %p416
        %p946 = pneg %p413
        %p947 = pneg %p437
        %p948 = pneg %p434
        %p949 = pneg %p458
        %p950 = pneg %p455
        %p951 = pneg %p479
        %p952 = pneg %p476
        %p953 = pneg %p500
        %p954 = pneg %p497
        %p955 = pneg %p521
        %p956 = pneg %p518
        %p957 = pneg %p542
        %p958 = pneg %p539
        %p959 = pneg %p563
        %p960 = pneg %p560
        %p961 = pneg %p589
        %p962 = pneg %p586
        %s963 = sand.u32 %s576, 1
        %s964 = scalar_lea.sflag [#allocation4], %s963
        %s965 = sand.u32 %s576, 1
        %s966 = smul.addr %s965, 16
        %s967 = scalar_lea.vmem [#allocation22], %s966
        %p968 = pneg %p615
        %p969 = pneg %p612
        %s970 = sand.u32 %s602, 1
        %s971 = scalar_lea.sflag [#allocation24], %s970
        %s972 = sand.u32 %s602, 1
        %s973 = smul.addr %s972, 8
        %s974 = scalar_lea.vmem [#allocation23], %s973
        %v975 = vld [vmem:[%s849] sm:$0xff]
        %v976 = vld [vmem:[%s849 + $0x8] sm:$0xff]
        %v977 = vld [vmem:[%s858] sm:$0xff]
        %v978 = vld [vmem:[%s858 + $0x8] sm:$0xff]
        %v979 = vld [vmem:[#allocation7] sm:$0xff]
        %v980 = vld [vmem:[#allocation7 + $0x8] sm:$0xff]
        %v981 = vld [vmem:[#allocation7 + $0x10] sm:$0xff]
        %v982 = vld [vmem:[#allocation7 + $0x18] sm:$0xff]
        %v983 = vld [vmem:[#allocation7 + $0x20] sm:$0xff]
        %v984 = vld [vmem:[#allocation7 + $0x28] sm:$0xff]
        %v985 = vld [vmem:[#allocation7 + $0x30] sm:$0xff]
        %v986 = vld [vmem:[#allocation7 + $0x38] sm:$0xff]
        %v987 = vld [vmem:[#allocation7 + $0x40] sm:$0xff]
        %v988 = vld [vmem:[#allocation7 + $0x48] sm:$0xff]
        %v989 = vld [vmem:[#allocation7 + $0x50] sm:$0xff]
        %v990 = vld [vmem:[#allocation7 + $0x58] sm:$0xff]
        %v991 = vld [vmem:[#allocation7 + $0x60] sm:$0xff]
        %v992 = vld [vmem:[#allocation7 + $0x68] sm:$0xff]
        %v993 = vld [vmem:[#allocation7 + $0x70] sm:$0xff]
        %v994 = vld [vmem:[#allocation7 + $0x78] sm:$0xff]
        %v995 = vld [vmem:[#allocation7 + $0x80] sm:$0xff]
        %v996 = vld [vmem:[#allocation7 + $0x88] sm:$0xff]
        %v997 = vld [vmem:[#allocation7 + $0x90] sm:$0xff]
        %v998 = vld [vmem:[#allocation7 + $0x98] sm:$0xff]
        %v999 = vld [vmem:[#allocation7 + $0xa0] sm:$0xff]
        %v1000 = vld [vmem:[#allocation7 + $0xa8] sm:$0xff]
        %v1001 = vld [vmem:[#allocation7 + $0xb0] sm:$0xff]
        %v1002 = vld [vmem:[#allocation7 + $0xb8] sm:$0xff]
        %v1003 = vld [vmem:[#allocation7 + $0xc0] sm:$0xff]
        %v1004 = vld [vmem:[#allocation7 + $0xc8] sm:$0xff]
        %v1005 = vld [vmem:[#allocation7 + $0xd0] sm:$0xff]
        %v1006 = vld [vmem:[#allocation7 + $0xd8] sm:$0xff]
        %v1007 = vld [vmem:[#allocation7 + $0xe0] sm:$0xff]
        %v1008 = vld [vmem:[#allocation7 + $0xe8] sm:$0xff]
        %v1009 = vld [vmem:[#allocation7 + $0xf0] sm:$0xff]
        %v1010 = vld [vmem:[#allocation7 + $0xf8] sm:$0xff]
        %v1011 = vld [vmem:[#allocation7 + $0x100] sm:$0xff]
        %v1012 = vld [vmem:[#allocation7 + $0x108] sm:$0xff]
        %v1013 = vld [vmem:[#allocation7 + $0x110] sm:$0xff]
        %v1014 = vld [vmem:[#allocation7 + $0x118] sm:$0xff]
        %v1015 = vld [vmem:[#allocation7 + $0x120] sm:$0xff]
        %v1016 = vld [vmem:[#allocation7 + $0x128] sm:$0xff]
        %v1017 = vld [vmem:[#allocation7 + $0x130] sm:$0xff]
        %v1018 = vld [vmem:[#allocation7 + $0x138] sm:$0xff]
        %v1019 = vld [vmem:[#allocation7 + $0x140] sm:$0xff]
        %v1020 = vld [vmem:[#allocation7 + $0x148] sm:$0xff]
        %v1021 = vld [vmem:[#allocation7 + $0x150] sm:$0xff]
        %v1022 = vld [vmem:[#allocation7 + $0x158] sm:$0xff]
        %v1023 = vld [vmem:[#allocation7 + $0x160] sm:$0xff]
        %v1024 = vld [vmem:[#allocation7 + $0x168] sm:$0xff]
        %v1025 = vld [vmem:[#allocation7 + $0x170] sm:$0xff]
        %v1026 = vld [vmem:[#allocation7 + $0x178] sm:$0xff]
        %v1027 = vld [vmem:[#allocation7 + $0x180] sm:$0xff]
        %v1028 = vld [vmem:[#allocation7 + $0x188] sm:$0xff]
        %v1029 = vld [vmem:[#allocation7 + $0x190] sm:$0xff]
        %v1030 = vld [vmem:[#allocation7 + $0x198] sm:$0xff]
        %v1031 = vld [vmem:[#allocation7 + $0x1a0] sm:$0xff]
        %v1032 = vld [vmem:[#allocation7 + $0x1a8] sm:$0xff]
        %v1033 = vld [vmem:[#allocation7 + $0x1b0] sm:$0xff]
        %v1034 = vld [vmem:[#allocation7 + $0x1b8] sm:$0xff]
        %v1035 = vld [vmem:[#allocation7 + $0x1c0] sm:$0xff]
        %v1036 = vld [vmem:[#allocation7 + $0x1c8] sm:$0xff]
        %v1037 = vld [vmem:[#allocation7 + $0x1d0] sm:$0xff]
        %v1038 = vld [vmem:[#allocation7 + $0x1d8] sm:$0xff]
        %v1039 = vld [vmem:[#allocation7 + $0x1e0] sm:$0xff]
        %v1040 = vld [vmem:[#allocation7 + $0x1e8] sm:$0xff]
        %v1041 = vld [vmem:[#allocation7 + $0x1f0] sm:$0xff]
        %v1042 = vld [vmem:[#allocation7 + $0x1f8] sm:$0xff]
        %v1043 = vld [vmem:[%s3] sm:$0x3]
        %v1044 = vld [vmem:[#allocation8] sm:$0xff]
        %v1045 = vld [vmem:[#allocation8 + $0x8] sm:$0xff]
        %v1046 = vld [vmem:[#allocation8 + $0x10] sm:$0xff]
        %v1047 = vld [vmem:[#allocation8 + $0x18] sm:$0xff]
        %v1048 = vld [vmem:[#allocation8 + $0x20] sm:$0xff]
        %v1049 = vld [vmem:[#allocation8 + $0x28] sm:$0xff]
        %v1050 = vld [vmem:[#allocation8 + $0x30] sm:$0xff]
        %v1051 = vld [vmem:[#allocation8 + $0x38] sm:$0xff]
        %v1052 = vld [vmem:[#allocation8 + $0x40] sm:$0xff]
        %v1053 = vld [vmem:[#allocation8 + $0x48] sm:$0xff]
        %v1054 = vld [vmem:[#allocation8 + $0x50] sm:$0xff]
        %v1055 = vld [vmem:[#allocation8 + $0x58] sm:$0xff]
        %v1056 = vld [vmem:[#allocation8 + $0x60] sm:$0xff]
        %v1057 = vld [vmem:[#allocation8 + $0x68] sm:$0xff]
        %v1058 = vld [vmem:[#allocation8 + $0x70] sm:$0xff]
        %v1059 = vld [vmem:[#allocation8 + $0x78] sm:$0xff]
        %v1060 = vld [vmem:[#allocation8 + $0x80] sm:$0xff]
        %v1061 = vld [vmem:[#allocation8 + $0x88] sm:$0xff]
        %v1062 = vld [vmem:[#allocation8 + $0x90] sm:$0xff]
        %v1063 = vld [vmem:[#allocation8 + $0x98] sm:$0xff]
        %v1064 = vld [vmem:[#allocation8 + $0xa0] sm:$0xff]
        %v1065 = vld [vmem:[#allocation8 + $0xa8] sm:$0xff]
        %v1066 = vld [vmem:[#allocation8 + $0xb0] sm:$0xff]
        %v1067 = vld [vmem:[#allocation8 + $0xb8] sm:$0xff]
        %v1068 = vld [vmem:[#allocation8 + $0xc0] sm:$0xff]
        %v1069 = vld [vmem:[#allocation8 + $0xc8] sm:$0xff]
        %v1070 = vld [vmem:[#allocation8 + $0xd0] sm:$0xff]
        %v1071 = vld [vmem:[#allocation8 + $0xd8] sm:$0xff]
        %v1072 = vld [vmem:[#allocation8 + $0xe0] sm:$0xff]
        %v1073 = vld [vmem:[#allocation8 + $0xe8] sm:$0xff]
        %v1074 = vld [vmem:[#allocation8 + $0xf0] sm:$0xff]
        %v1075 = vld [vmem:[#allocation8 + $0xf8] sm:$0xff]
        %v1076 = vld [vmem:[#allocation8 + $0x100] sm:$0xff]
        %v1077 = vld [vmem:[#allocation8 + $0x108] sm:$0xff]
        %v1078 = vld [vmem:[#allocation8 + $0x110] sm:$0xff]
        %v1079 = vld [vmem:[#allocation8 + $0x118] sm:$0xff]
        %v1080 = vld [vmem:[#allocation8 + $0x120] sm:$0xff]
        %v1081 = vld [vmem:[#allocation8 + $0x128] sm:$0xff]
        %v1082 = vld [vmem:[#allocation8 + $0x130] sm:$0xff]
        %v1083 = vld [vmem:[#allocation8 + $0x138] sm:$0xff]
        %v1084 = vld [vmem:[#allocation8 + $0x140] sm:$0xff]
        %v1085 = vld [vmem:[#allocation8 + $0x148] sm:$0xff]
        %v1086 = vld [vmem:[#allocation8 + $0x150] sm:$0xff]
        %v1087 = vld [vmem:[#allocation8 + $0x158] sm:$0xff]
        %v1088 = vld [vmem:[#allocation8 + $0x160] sm:$0xff]
        %v1089 = vld [vmem:[#allocation8 + $0x168] sm:$0xff]
        %v1090 = vld [vmem:[#allocation8 + $0x170] sm:$0xff]
        %v1091 = vld [vmem:[#allocation8 + $0x178] sm:$0xff]
        %v1092 = vld [vmem:[#allocation8 + $0x180] sm:$0xff]
        %v1093 = vld [vmem:[#allocation8 + $0x188] sm:$0xff]
        %v1094 = vld [vmem:[#allocation8 + $0x190] sm:$0xff]
        %v1095 = vld [vmem:[#allocation8 + $0x198] sm:$0xff]
        %v1096 = vld [vmem:[#allocation8 + $0x1a0] sm:$0xff]
        %v1097 = vld [vmem:[#allocation8 + $0x1a8] sm:$0xff]
        %v1098 = vld [vmem:[#allocation8 + $0x1b0] sm:$0xff]
        %v1099 = vld [vmem:[#allocation8 + $0x1b8] sm:$0xff]
        %v1100 = vld [vmem:[#allocation8 + $0x1c0] sm:$0xff]
        %v1101 = vld [vmem:[#allocation8 + $0x1c8] sm:$0xff]
        %v1102 = vld [vmem:[#allocation8 + $0x1d0] sm:$0xff]
        %v1103 = vld [vmem:[#allocation8 + $0x1d8] sm:$0xff]
        %v1104 = vld [vmem:[#allocation8 + $0x1e0] sm:$0xff]
        %v1105 = vld [vmem:[#allocation8 + $0x1e8] sm:$0xff]
        %v1106 = vld [vmem:[#allocation8 + $0x1f0] sm:$0xff]
        %v1107 = vld [vmem:[#allocation8 + $0x1f8] sm:$0xff]
        %v1108 = vld [vmem:[%s5] sm:$0x3]
        %v1109 = vld [vmem:[#allocation10] sm:$0xff]
        %v1110 = vld [vmem:[#allocation10 + $0x8] sm:$0xff]
        %v1111 = vld [vmem:[#allocation10 + $0x10] sm:$0xff]
        %v1112 = vld [vmem:[#allocation10 + $0x18] sm:$0xff]
        %v1113 = vld [vmem:[#allocation10 + $0x20] sm:$0xff]
        %v1114 = vld [vmem:[#allocation10 + $0x28] sm:$0xff]
        %v1115 = vld [vmem:[#allocation10 + $0x30] sm:$0xff]
        %v1116 = vld [vmem:[#allocation10 + $0x38] sm:$0xff]
        %v1117 = vld [vmem:[#allocation10 + $0x40] sm:$0xff]
        %v1118 = vld [vmem:[#allocation10 + $0x48] sm:$0xff]
        %v1119 = vld [vmem:[#allocation10 + $0x50] sm:$0xff]
        %v1120 = vld [vmem:[#allocation10 + $0x58] sm:$0xff]
        %v1121 = vld [vmem:[#allocation10 + $0x60] sm:$0xff]
        %v1122 = vld [vmem:[#allocation10 + $0x68] sm:$0xff]
        %v1123 = vld [vmem:[#allocation10 + $0x70] sm:$0xff]
        %v1124 = vld [vmem:[#allocation10 + $0x78] sm:$0xff]
        %v1125 = vld [vmem:[#allocation10 + $0x80] sm:$0xff]
        %v1126 = vld [vmem:[#allocation10 + $0x88] sm:$0xff]
        %v1127 = vld [vmem:[#allocation10 + $0x90] sm:$0xff]
        %v1128 = vld [vmem:[#allocation10 + $0x98] sm:$0xff]
        %v1129 = vld [vmem:[#allocation10 + $0xa0] sm:$0xff]
        %v1130 = vld [vmem:[#allocation10 + $0xa8] sm:$0xff]
        %v1131 = vld [vmem:[#allocation10 + $0xb0] sm:$0xff]
        %v1132 = vld [vmem:[#allocation10 + $0xb8] sm:$0xff]
        %v1133 = vld [vmem:[#allocation10 + $0xc0] sm:$0xff]
        %v1134 = vld [vmem:[#allocation10 + $0xc8] sm:$0xff]
        %v1135 = vld [vmem:[#allocation10 + $0xd0] sm:$0xff]
        %v1136 = vld [vmem:[#allocation10 + $0xd8] sm:$0xff]
        %v1137 = vld [vmem:[#allocation10 + $0xe0] sm:$0xff]
        %v1138 = vld [vmem:[#allocation10 + $0xe8] sm:$0xff]
        %v1139 = vld [vmem:[#allocation10 + $0xf0] sm:$0xff]
        %v1140 = vld [vmem:[#allocation10 + $0xf8] sm:$0xff]
        %v1141 = vld [vmem:[#allocation10 + $0x100] sm:$0xff]
        %v1142 = vld [vmem:[#allocation10 + $0x108] sm:$0xff]
        %v1143 = vld [vmem:[#allocation10 + $0x110] sm:$0xff]
        %v1144 = vld [vmem:[#allocation10 + $0x118] sm:$0xff]
        %v1145 = vld [vmem:[#allocation10 + $0x120] sm:$0xff]
        %v1146 = vld [vmem:[#allocation10 + $0x128] sm:$0xff]
        %v1147 = vld [vmem:[#allocation10 + $0x130] sm:$0xff]
        %v1148 = vld [vmem:[#allocation10 + $0x138] sm:$0xff]
        %v1149 = vld [vmem:[#allocation10 + $0x140] sm:$0xff]
        %v1150 = vld [vmem:[#allocation10 + $0x148] sm:$0xff]
        %v1151 = vld [vmem:[#allocation10 + $0x150] sm:$0xff]
        %v1152 = vld [vmem:[#allocation10 + $0x158] sm:$0xff]
        %v1153 = vld [vmem:[#allocation10 + $0x160] sm:$0xff]
        %v1154 = vld [vmem:[#allocation10 + $0x168] sm:$0xff]
        %v1155 = vld [vmem:[#allocation10 + $0x170] sm:$0xff]
        %v1156 = vld [vmem:[#allocation10 + $0x178] sm:$0xff]
        %v1157 = vld [vmem:[#allocation10 + $0x180] sm:$0xff]
        %v1158 = vld [vmem:[#allocation10 + $0x188] sm:$0xff]
        %v1159 = vld [vmem:[#allocation10 + $0x190] sm:$0xff]
        %v1160 = vld [vmem:[#allocation10 + $0x198] sm:$0xff]
        %v1161 = vld [vmem:[#allocation10 + $0x1a0] sm:$0xff]
        %v1162 = vld [vmem:[#allocation10 + $0x1a8] sm:$0xff]
        %v1163 = vld [vmem:[#allocation10 + $0x1b0] sm:$0xff]
        %v1164 = vld [vmem:[#allocation10 + $0x1b8] sm:$0xff]
        %v1165 = vld [vmem:[#allocation10 + $0x1c0] sm:$0xff]
        %v1166 = vld [vmem:[#allocation10 + $0x1c8] sm:$0xff]
        %v1167 = vld [vmem:[#allocation10 + $0x1d0] sm:$0xff]
        %v1168 = vld [vmem:[#allocation10 + $0x1d8] sm:$0xff]
        %v1169 = vld [vmem:[#allocation10 + $0x1e0] sm:$0xff]
        %v1170 = vld [vmem:[#allocation10 + $0x1e8] sm:$0xff]
        %v1171 = vld [vmem:[#allocation10 + $0x1f0] sm:$0xff]
        %v1172 = vld [vmem:[#allocation10 + $0x1f8] sm:$0xff]
        %v1173 = vld [vmem:[%s7] sm:$0x3]
        %v1174 = vld [vmem:[#allocation11] sm:$0xff]
        %v1175 = vld [vmem:[#allocation11 + $0x8] sm:$0xff]
        %v1176 = vld [vmem:[#allocation11 + $0x10] sm:$0xff]
        %v1177 = vld [vmem:[#allocation11 + $0x18] sm:$0xff]
        %v1178 = vld [vmem:[#allocation11 + $0x20] sm:$0xff]
        %v1179 = vld [vmem:[#allocation11 + $0x28] sm:$0xff]
        %v1180 = vld [vmem:[#allocation11 + $0x30] sm:$0xff]
        %v1181 = vld [vmem:[#allocation11 + $0x38] sm:$0xff]
        %v1182 = vld [vmem:[#allocation11 + $0x40] sm:$0xff]
        %v1183 = vld [vmem:[#allocation11 + $0x48] sm:$0xff]
        %v1184 = vld [vmem:[#allocation11 + $0x50] sm:$0xff]
        %v1185 = vld [vmem:[#allocation11 + $0x58] sm:$0xff]
        %v1186 = vld [vmem:[#allocation11 + $0x60] sm:$0xff]
        %v1187 = vld [vmem:[#allocation11 + $0x68] sm:$0xff]
        %v1188 = vld [vmem:[#allocation11 + $0x70] sm:$0xff]
        %v1189 = vld [vmem:[#allocation11 + $0x78] sm:$0xff]
        %v1190 = vld [vmem:[#allocation11 + $0x80] sm:$0xff]
        %v1191 = vld [vmem:[#allocation11 + $0x88] sm:$0xff]
        %v1192 = vld [vmem:[#allocation11 + $0x90] sm:$0xff]
        %v1193 = vld [vmem:[#allocation11 + $0x98] sm:$0xff]
        %v1194 = vld [vmem:[#allocation11 + $0xa0] sm:$0xff]
        %v1195 = vld [vmem:[#allocation11 + $0xa8] sm:$0xff]
        %v1196 = vld [vmem:[#allocation11 + $0xb0] sm:$0xff]
        %v1197 = vld [vmem:[#allocation11 + $0xb8] sm:$0xff]
        %v1198 = vld [vmem:[#allocation11 + $0xc0] sm:$0xff]
        %v1199 = vld [vmem:[#allocation11 + $0xc8] sm:$0xff]
        %v1200 = vld [vmem:[#allocation11 + $0xd0] sm:$0xff]
        %v1201 = vld [vmem:[#allocation11 + $0xd8] sm:$0xff]
        %v1202 = vld [vmem:[#allocation11 + $0xe0] sm:$0xff]
        %v1203 = vld [vmem:[#allocation11 + $0xe8] sm:$0xff]
        %v1204 = vld [vmem:[#allocation11 + $0xf0] sm:$0xff]
        %v1205 = vld [vmem:[#allocation11 + $0xf8] sm:$0xff]
        %v1206 = vld [vmem:[#allocation11 + $0x100] sm:$0xff]
        %v1207 = vld [vmem:[#allocation11 + $0x108] sm:$0xff]
        %v1208 = vld [vmem:[#allocation11 + $0x110] sm:$0xff]
        %v1209 = vld [vmem:[#allocation11 + $0x118] sm:$0xff]
        %v1210 = vld [vmem:[#allocation11 + $0x120] sm:$0xff]
        %v1211 = vld [vmem:[#allocation11 + $0x128] sm:$0xff]
        %v1212 = vld [vmem:[#allocation11 + $0x130] sm:$0xff]
        %v1213 = vld [vmem:[#allocation11 + $0x138] sm:$0xff]
        %v1214 = vld [vmem:[#allocation11 + $0x140] sm:$0xff]
        %v1215 = vld [vmem:[#allocation11 + $0x148] sm:$0xff]
        %v1216 = vld [vmem:[#allocation11 + $0x150] sm:$0xff]
        %v1217 = vld [vmem:[#allocation11 + $0x158] sm:$0xff]
        %v1218 = vld [vmem:[#allocation11 + $0x160] sm:$0xff]
        %v1219 = vld [vmem:[#allocation11 + $0x168] sm:$0xff]
        %v1220 = vld [vmem:[#allocation11 + $0x170] sm:$0xff]
        %v1221 = vld [vmem:[#allocation11 + $0x178] sm:$0xff]
        %v1222 = vld [vmem:[#allocation11 + $0x180] sm:$0xff]
        %v1223 = vld [vmem:[#allocation11 + $0x188] sm:$0xff]
        %v1224 = vld [vmem:[#allocation11 + $0x190] sm:$0xff]
        %v1225 = vld [vmem:[#allocation11 + $0x198] sm:$0xff]
        %v1226 = vld [vmem:[#allocation11 + $0x1a0] sm:$0xff]
        %v1227 = vld [vmem:[#allocation11 + $0x1a8] sm:$0xff]
        %v1228 = vld [vmem:[#allocation11 + $0x1b0] sm:$0xff]
        %v1229 = vld [vmem:[#allocation11 + $0x1b8] sm:$0xff]
        %v1230 = vld [vmem:[#allocation11 + $0x1c0] sm:$0xff]
        %v1231 = vld [vmem:[#allocation11 + $0x1c8] sm:$0xff]
        %v1232 = vld [vmem:[#allocation11 + $0x1d0] sm:$0xff]
        %v1233 = vld [vmem:[#allocation11 + $0x1d8] sm:$0xff]
        %v1234 = vld [vmem:[#allocation11 + $0x1e0] sm:$0xff]
        %v1235 = vld [vmem:[#allocation11 + $0x1e8] sm:$0xff]
        %v1236 = vld [vmem:[#allocation11 + $0x1f0] sm:$0xff]
        %v1237 = vld [vmem:[#allocation11 + $0x1f8] sm:$0xff]
        %v1238 = vld [vmem:[%s9] sm:$0x3]
        %v1240 = vlaneseq
        %v1241 = vshrl.u32 %v1240, 7
        %v1242 = vsub.s32 0, %v1241
        %v1243 = vrot.slane %v1043, %v1242
        %v1244 = vlaneseq
        %v1245 = vshrl.u32 %v1244, 7
        %v1246 = vsub.s32 1, %v1245
        %v1247 = vrot.slane %v1043, %v1246
        %1250 = vmatprep.subr.mxu0 %v1010
        %1251 = vmatpush1.msra.mxu0 %v1009
        %1252 = vmatprep.subr.mxu0 %v1008
        %1253 = vmatpush1.msra.mxu0 %v1007
        %1254 = vmatprep.subr.mxu0 %v1006
        %1255 = vmatpush1.msra.mxu0 %v1005
        %1256 = vmatprep.subr.mxu0 %v1004
        %1257 = vmatpush1.msra.mxu0 %v1003
        %1258 = vmatprep.subr.mxu0 %v1002
        %1259 = vmatpush1.msra.mxu0 %v1001
        %1260 = vmatprep.subr.mxu0 %v1000
        %1261 = vmatpush1.msra.mxu0 %v999
        %1262 = vmatprep.subr.mxu0 %v998
        %1263 = vmatpush1.msra.mxu0 %v997
        %1264 = vmatprep.subr.mxu0 %v996
        %1265 = vmatpush1.msra.mxu0 %v995
        %1266 = vmatprep.subr.mxu0 %v994
        %1267 = vmatpush1.msra.mxu0 %v993
        %1268 = vmatprep.subr.mxu0 %v992
        %1269 = vmatpush1.msra.mxu0 %v991
        %1270 = vmatprep.subr.mxu0 %v990
        %1271 = vmatpush1.msra.mxu0 %v989
        %1272 = vmatprep.subr.mxu0 %v988
        %1273 = vmatpush1.msra.mxu0 %v987
        %1274 = vmatprep.subr.mxu0 %v986
        %1275 = vmatpush1.msra.mxu0 %v985
        %1276 = vmatprep.subr.mxu0 %v984
        %1277 = vmatpush1.msra.mxu0 %v983
        %1278 = vmatprep.subr.mxu0 %v982
        %1279 = vmatpush1.msra.mxu0 %v981
        %1280 = vmatprep.subr.mxu0 %v980
        %1281 = vmatpush1.msra.mxu0 %v979
        %1282 = vmatprep.subr.mxu0 %v1042
        %1283 = vmatpush2.msra.mxu0 %v1041
        %1284 = vmatprep.subr.mxu0 %v1040
        %1285 = vmatpush2.msra.mxu0 %v1039
        %1286 = vmatprep.subr.mxu0 %v1038
        %1287 = vmatpush2.msra.mxu0 %v1037
        %1288 = vmatprep.subr.mxu0 %v1036
        %1289 = vmatpush2.msra.mxu0 %v1035
        %1290 = vmatprep.subr.mxu0 %v1034
        %1291 = vmatpush2.msra.mxu0 %v1033
        %1292 = vmatprep.subr.mxu0 %v1032
        %1293 = vmatpush2.msra.mxu0 %v1031
        %1294 = vmatprep.subr.mxu0 %v1030
        %1295 = vmatpush2.msra.mxu0 %v1029
        %1296 = vmatprep.subr.mxu0 %v1028
        %1297 = vmatpush2.msra.mxu0 %v1027
        %1298 = vmatprep.subr.mxu0 %v1026
        %1299 = vmatpush2.msra.mxu0 %v1025
        %1300 = vmatprep.subr.mxu0 %v1024
        %1301 = vmatpush2.msra.mxu0 %v1023
        %1302 = vmatprep.subr.mxu0 %v1022
        %1303 = vmatpush2.msra.mxu0 %v1021
        %1304 = vmatprep.subr.mxu0 %v1020
        %1305 = vmatpush2.msra.mxu0 %v1019
        %1306 = vmatprep.subr.mxu0 %v1018
        %1307 = vmatpush2.msra.mxu0 %v1017
        %1308 = vmatprep.subr.mxu0 %v1016
        %1309 = vmatpush2.msra.mxu0 %v1015
        %1310 = vmatprep.subr.mxu0 %v1014
        %1311 = vmatpush2.msra.mxu0 %v1013
        %1312 = vmatprep.subr.mxu0 %v1012
        %1313 = vmatpush2.msra.mxu0 %v1011
        %1314 = vmatprep.mubr.f32.mxu0 %v978
        %1315 = vmatmul.mubr.f32.gmra.mxu0 %v977
        %v1316 = vpop.f32.mrf.mxu0
        %v1317 = vadd.f32 %v1243, %v1316
        %v1318 = vpop.f32.mrf.mxu0
        %v1319 = vadd.f32 %v1247, %v1318
        %1320 = vdwg.mxu0
        %v1322 = vlaneseq
        %v1323 = vshrl.u32 %v1322, 7
        %v1324 = vsub.s32 0, %v1323
        %v1325 = vrot.slane %v1108, %v1324
        %v1326 = vlaneseq
        %v1327 = vshrl.u32 %v1326, 7
        %v1328 = vsub.s32 1, %v1327
        %v1329 = vrot.slane %v1108, %v1328
        %1332 = vmatprep.subr.mxu0 %v1075
        %1333 = vmatpush1.msra.mxu0 %v1074
        %1334 = vmatprep.subr.mxu0 %v1073
        %1335 = vmatpush1.msra.mxu0 %v1072
        %1336 = vmatprep.subr.mxu0 %v1071
        %1337 = vmatpush1.msra.mxu0 %v1070
        %1338 = vmatprep.subr.mxu0 %v1069
        %1339 = vmatpush1.msra.mxu0 %v1068
        %1340 = vmatprep.subr.mxu0 %v1067
        %1341 = vmatpush1.msra.mxu0 %v1066
        %1342 = vmatprep.subr.mxu0 %v1065
        %1343 = vmatpush1.msra.mxu0 %v1064
        %1344 = vmatprep.subr.mxu0 %v1063
        %1345 = vmatpush1.msra.mxu0 %v1062
        %1346 = vmatprep.subr.mxu0 %v1061
        %1347 = vmatpush1.msra.mxu0 %v1060
        %1348 = vmatprep.subr.mxu0 %v1059
        %1349 = vmatpush1.msra.mxu0 %v1058
        %1350 = vmatprep.subr.mxu0 %v1057
        %1351 = vmatpush1.msra.mxu0 %v1056
        %1352 = vmatprep.subr.mxu0 %v1055
        %1353 = vmatpush1.msra.mxu0 %v1054
        %1354 = vmatprep.subr.mxu0 %v1053
        %1355 = vmatpush1.msra.mxu0 %v1052
        %1356 = vmatprep.subr.mxu0 %v1051
        %1357 = vmatpush1.msra.mxu0 %v1050
        %1358 = vmatprep.subr.mxu0 %v1049
        %1359 = vmatpush1.msra.mxu0 %v1048
        %1360 = vmatprep.subr.mxu0 %v1047
        %1361 = vmatpush1.msra.mxu0 %v1046
        %1362 = vmatprep.subr.mxu0 %v1045
        %1363 = vmatpush1.msra.mxu0 %v1044
        %1364 = vmatprep.subr.mxu0 %v1107
        %1365 = vmatpush2.msra.mxu0 %v1106
        %1366 = vmatprep.subr.mxu0 %v1105
        %1367 = vmatpush2.msra.mxu0 %v1104
        %1368 = vmatprep.subr.mxu0 %v1103
        %1369 = vmatpush2.msra.mxu0 %v1102
        %1370 = vmatprep.subr.mxu0 %v1101
        %1371 = vmatpush2.msra.mxu0 %v1100
        %1372 = vmatprep.subr.mxu0 %v1099
        %1373 = vmatpush2.msra.mxu0 %v1098
        %1374 = vmatprep.subr.mxu0 %v1097
        %1375 = vmatpush2.msra.mxu0 %v1096
        %1376 = vmatprep.subr.mxu0 %v1095
        %1377 = vmatpush2.msra.mxu0 %v1094
        %1378 = vmatprep.subr.mxu0 %v1093
        %1379 = vmatpush2.msra.mxu0 %v1092
        %1380 = vmatprep.subr.mxu0 %v1091
        %1381 = vmatpush2.msra.mxu0 %v1090
        %1382 = vmatprep.subr.mxu0 %v1089
        %1383 = vmatpush2.msra.mxu0 %v1088
        %1384 = vmatprep.subr.mxu0 %v1087
        %1385 = vmatpush2.msra.mxu0 %v1086
        %1386 = vmatprep.subr.mxu0 %v1085
        %1387 = vmatpush2.msra.mxu0 %v1084
        %1388 = vmatprep.subr.mxu0 %v1083
        %1389 = vmatpush2.msra.mxu0 %v1082
        %1390 = vmatprep.subr.mxu0 %v1081
        %1391 = vmatpush2.msra.mxu0 %v1080
        %1392 = vmatprep.subr.mxu0 %v1079
        %1393 = vmatpush2.msra.mxu0 %v1078
        %1394 = vmatprep.subr.mxu0 %v1077
        %1395 = vmatpush2.msra.mxu0 %v1076
        %1396 = vmatprep.mubr.f32.mxu0 %v978
        %1397 = vmatmul.mubr.f32.gmra.mxu0 %v977
        %v1398 = vpop.f32.mrf.mxu0
        %v1399 = vadd.f32 %v1325, %v1398
        %v1400 = vpop.f32.mrf.mxu0
        %v1401 = vadd.f32 %v1329, %v1400
        %1402 = vdwg.mxu0
        %v1404 = vlaneseq
        %v1405 = vshrl.u32 %v1404, 7
        %v1406 = vsub.s32 0, %v1405
        %v1407 = vrot.slane %v1173, %v1406
        %v1408 = vlaneseq
        %v1409 = vshrl.u32 %v1408, 7
        %v1410 = vsub.s32 1, %v1409
        %v1411 = vrot.slane %v1173, %v1410
        %1414 = vmatprep.subr.mxu0 %v1140
        %1415 = vmatpush1.msra.mxu0 %v1139
        %1416 = vmatprep.subr.mxu0 %v1138
        %1417 = vmatpush1.msra.mxu0 %v1137
        %1418 = vmatprep.subr.mxu0 %v1136
        %1419 = vmatpush1.msra.mxu0 %v1135
        %1420 = vmatprep.subr.mxu0 %v1134
        %1421 = vmatpush1.msra.mxu0 %v1133
        %1422 = vmatprep.subr.mxu0 %v1132
        %1423 = vmatpush1.msra.mxu0 %v1131
        %1424 = vmatprep.subr.mxu0 %v1130
        %1425 = vmatpush1.msra.mxu0 %v1129
        %1426 = vmatprep.subr.mxu0 %v1128
        %1427 = vmatpush1.msra.mxu0 %v1127
        %1428 = vmatprep.subr.mxu0 %v1126
        %1429 = vmatpush1.msra.mxu0 %v1125
        %1430 = vmatprep.subr.mxu0 %v1124
        %1431 = vmatpush1.msra.mxu0 %v1123
        %1432 = vmatprep.subr.mxu0 %v1122
        %1433 = vmatpush1.msra.mxu0 %v1121
        %1434 = vmatprep.subr.mxu0 %v1120
        %1435 = vmatpush1.msra.mxu0 %v1119
        %1436 = vmatprep.subr.mxu0 %v1118
        %1437 = vmatpush1.msra.mxu0 %v1117
        %1438 = vmatprep.subr.mxu0 %v1116
        %1439 = vmatpush1.msra.mxu0 %v1115
        %1440 = vmatprep.subr.mxu0 %v1114
        %1441 = vmatpush1.msra.mxu0 %v1113
        %1442 = vmatprep.subr.mxu0 %v1112
        %1443 = vmatpush1.msra.mxu0 %v1111
        %1444 = vmatprep.subr.mxu0 %v1110
        %1445 = vmatpush1.msra.mxu0 %v1109
        %1446 = vmatprep.subr.mxu0 %v1172
        %1447 = vmatpush2.msra.mxu0 %v1171
        %1448 = vmatprep.subr.mxu0 %v1170
        %1449 = vmatpush2.msra.mxu0 %v1169
        %1450 = vmatprep.subr.mxu0 %v1168
        %1451 = vmatpush2.msra.mxu0 %v1167
        %1452 = vmatprep.subr.mxu0 %v1166
        %1453 = vmatpush2.msra.mxu0 %v1165
        %1454 = vmatprep.subr.mxu0 %v1164
        %1455 = vmatpush2.msra.mxu0 %v1163
        %1456 = vmatprep.subr.mxu0 %v1162
        %1457 = vmatpush2.msra.mxu0 %v1161
        %1458 = vmatprep.subr.mxu0 %v1160
        %1459 = vmatpush2.msra.mxu0 %v1159
        %1460 = vmatprep.subr.mxu0 %v1158
        %1461 = vmatpush2.msra.mxu0 %v1157
        %1462 = vmatprep.subr.mxu0 %v1156
        %1463 = vmatpush2.msra.mxu0 %v1155
        %1464 = vmatprep.subr.mxu0 %v1154
        %1465 = vmatpush2.msra.mxu0 %v1153
        %1466 = vmatprep.subr.mxu0 %v1152
        %1467 = vmatpush2.msra.mxu0 %v1151
        %1468 = vmatprep.subr.mxu0 %v1150
        %1469 = vmatpush2.msra.mxu0 %v1149
        %1470 = vmatprep.subr.mxu0 %v1148
        %1471 = vmatpush2.msra.mxu0 %v1147
        %1472 = vmatprep.subr.mxu0 %v1146
        %1473 = vmatpush2.msra.mxu0 %v1145
        %1474 = vmatprep.subr.mxu0 %v1144
        %1475 = vmatpush2.msra.mxu0 %v1143
        %1476 = vmatprep.subr.mxu0 %v1142
        %1477 = vmatpush2.msra.mxu0 %v1141
        %1478 = vmatprep.mubr.f32.mxu0 %v978
        %1479 = vmatmul.mubr.f32.gmra.mxu0 %v977
        %v1480 = vpop.f32.mrf.mxu0
        %v1481 = vadd.f32 %v1407, %v1480
        %v1482 = vpop.f32.mrf.mxu0
        %v1483 = vadd.f32 %v1411, %v1482
        %1484 = vdwg.mxu0
        %v1485 = vmul.f32 %v1317, 0.088388346
        %1486 = vmatprep.subr.mxu0 0.0
        %1487 = vmatpush1.xpose.msra.mxu0 0.0
        %1488 = vmatprep.subr.mxu0 0.0
        %1489 = vmatpush1.xpose.msra.mxu0 0.0
        %1490 = vmatprep.subr.mxu0 0.0
        %1491 = vmatpush1.xpose.msra.mxu0 0.0
        %1492 = vmatprep.subr.mxu0 0.0
        %1493 = vmatpush1.xpose.msra.mxu0 0.0
        %1494 = vmatprep.subr.mxu0 0.0
        %1495 = vmatpush1.xpose.msra.mxu0 0.0
        %1496 = vmatprep.subr.mxu0 0.0
        %1497 = vmatpush1.xpose.msra.mxu0 0.0
        %1498 = vmatprep.subr.mxu0 0.0
        %1499 = vmatpush1.xpose.msra.mxu0 0.0
        %1500 = vmatprep.subr.mxu0 0.0
        %1501 = vmatpush1.xpose.msra.mxu0 0.0
        %1502 = vmatprep.subr.mxu0 0.0
        %1503 = vmatpush1.xpose.msra.mxu0 0.0
        %1504 = vmatprep.subr.mxu0 0.0
        %1505 = vmatpush1.xpose.msra.mxu0 0.0
        %1506 = vmatprep.subr.mxu0 0.0
        %1507 = vmatpush1.xpose.msra.mxu0 0.0
        %1508 = vmatprep.subr.mxu0 0.0
        %1509 = vmatpush1.xpose.msra.mxu0 0.0
        %1510 = vmatprep.subr.mxu0 0.0
        %1511 = vmatpush1.xpose.msra.mxu0 0.0
        %1512 = vmatprep.subr.mxu0 0.0
        %1513 = vmatpush1.xpose.msra.mxu0 0.0
        %1514 = vmatprep.subr.mxu0 0.0
        %1515 = vmatpush1.xpose.msra.mxu0 0.0
        %1516 = vmatprep.subr.mxu0 0.0
        %1517 = vmatpush1.xpose.msra.mxu0 %v1399
        %1518 = vmatprep.subr.mxu0 0.0
        %1519 = vmatpush2.xpose.msra.mxu0 0.0
        %1520 = vmatprep.subr.mxu0 0.0
        %1521 = vmatpush2.xpose.msra.mxu0 0.0
        %1522 = vmatprep.subr.mxu0 0.0
        %1523 = vmatpush2.xpose.msra.mxu0 0.0
        %1524 = vmatprep.subr.mxu0 0.0
        %1525 = vmatpush2.xpose.msra.mxu0 0.0
        %1526 = vmatprep.subr.mxu0 0.0
        %1527 = vmatpush2.xpose.msra.mxu0 0.0
        %1528 = vmatprep.subr.mxu0 0.0
        %1529 = vmatpush2.xpose.msra.mxu0 0.0
        %1530 = vmatprep.subr.mxu0 0.0
        %1531 = vmatpush2.xpose.msra.mxu0 0.0
        %1532 = vmatprep.subr.mxu0 0.0
        %1533 = vmatpush2.xpose.msra.mxu0 0.0
        %1534 = vmatprep.subr.mxu0 0.0
        %1535 = vmatpush2.xpose.msra.mxu0 0.0
        %1536 = vmatprep.subr.mxu0 0.0
        %1537 = vmatpush2.xpose.msra.mxu0 0.0
        %1538 = vmatprep.subr.mxu0 0.0
        %1539 = vmatpush2.xpose.msra.mxu0 0.0
        %1540 = vmatprep.subr.mxu0 0.0
        %1541 = vmatpush2.xpose.msra.mxu0 0.0
        %1542 = vmatprep.subr.mxu0 0.0
        %1543 = vmatpush2.xpose.msra.mxu0 0.0
        %1544 = vmatprep.subr.mxu0 0.0
        %1545 = vmatpush2.xpose.msra.mxu0 0.0
        %1546 = vmatprep.subr.mxu0 0.0
        %1547 = vmatpush2.xpose.msra.mxu0 0.0
        %1548 = vmatprep.subr.mxu0 0.0
        %1549 = vmatpush2.xpose.msra.mxu0 0.0
        %1550 = vmatprep.mubr.f32.mxu0 0.0
        %1551 = vmatmul.mubr.f32.gmra.mxu0 %v1485
        %v1552 = vpop.f32.mrf.mxu0
        %v1553 = vadd.f32 0.0, %v1552
        %v1554 = vpop.f32.mrf.mxu0
        %1555 = vdwg.mxu0
        %vm1556 = vcmask 64512
        %v1557 = vsel %vm1556, %v1553, -inf
        %1558 = vmax.xlane.f32.xlu0 %v1557
        %v1559 = vpop.xlane.xlu0 %1558
        %v1560 = vsub.f32 %v1553, %v1559
        %v1561 = vmul.f32 %v1560, 1.442695
        %v1562 = vpow.pop %v1561
        %v1563 = vsel %vm1556, %v1562, 0.0
        %1564 = vadd.xlane.f32.xlu0 %v1563
        %v1565 = vpop.xlane.xlu0 %1564
        %v1566 = vrcp.pop %v1565
        %v1567 = vmul.f32 %v1562, %v1566
        %v1569 = vsel %vm1556, %v1567, 0
        %1571 = vmatprep.subr.mxu0 0.0
        %1572 = vmatpush1.msra.mxu0 0.0
        %1573 = vmatprep.subr.mxu0 0.0
        %1574 = vmatpush1.msra.mxu0 0.0
        %1575 = vmatprep.subr.mxu0 0.0
        %1576 = vmatpush1.msra.mxu0 0.0
        %1577 = vmatprep.subr.mxu0 0.0
        %1578 = vmatpush1.msra.mxu0 0.0
        %1579 = vmatprep.subr.mxu0 0.0
        %1580 = vmatpush1.msra.mxu0 0.0
        %1581 = vmatprep.subr.mxu0 0.0
        %1582 = vmatpush1.msra.mxu0 0.0
        %1583 = vmatprep.subr.mxu0 0.0
        %1584 = vmatpush1.msra.mxu0 0.0
        %1585 = vmatprep.subr.mxu0 0.0
        %1586 = vmatpush1.msra.mxu0 0.0
        %1587 = vmatprep.subr.mxu0 0.0
        %1588 = vmatpush1.msra.mxu0 0.0
        %1589 = vmatprep.subr.mxu0 0.0
        %1590 = vmatpush1.msra.mxu0 0.0
        %1591 = vmatprep.subr.mxu0 0.0
        %1592 = vmatpush1.msra.mxu0 0.0
        %1593 = vmatprep.subr.mxu0 0.0
        %1594 = vmatpush1.msra.mxu0 0.0
        %1595 = vmatprep.subr.mxu0 0.0
        %1596 = vmatpush1.msra.mxu0 0.0
        %1597 = vmatprep.subr.mxu0 0.0
        %1598 = vmatpush1.msra.mxu0 0.0
        %1599 = vmatprep.subr.mxu0 0.0
        %1600 = vmatpush1.msra.mxu0 0.0
        %1601 = vmatprep.subr.mxu0 0.0
        %1602 = vmatpush1.msra.mxu0 %v1481
        %1603 = vmatprep.subr.mxu0 0.0
        %1604 = vmatpush2.msra.mxu0 0.0
        %1605 = vmatprep.subr.mxu0 0.0
        %1606 = vmatpush2.msra.mxu0 0.0
        %1607 = vmatprep.subr.mxu0 0.0
        %1608 = vmatpush2.msra.mxu0 0.0
        %1609 = vmatprep.subr.mxu0 0.0
        %1610 = vmatpush2.msra.mxu0 0.0
        %1611 = vmatprep.subr.mxu0 0.0
        %1612 = vmatpush2.msra.mxu0 0.0
        %1613 = vmatprep.subr.mxu0 0.0
        %1614 = vmatpush2.msra.mxu0 0.0
        %1615 = vmatprep.subr.mxu0 0.0
        %1616 = vmatpush2.msra.mxu0 0.0
        %1617 = vmatprep.subr.mxu0 0.0
        %1618 = vmatpush2.msra.mxu0 0.0
        %1619 = vmatprep.subr.mxu0 0.0
        %1620 = vmatpush2.msra.mxu0 0.0
        %1621 = vmatprep.subr.mxu0 0.0
        %1622 = vmatpush2.msra.mxu0 0.0
        %1623 = vmatprep.subr.mxu0 0.0
        %1624 = vmatpush2.msra.mxu0 0.0
        %1625 = vmatprep.subr.mxu0 0.0
        %1626 = vmatpush2.msra.mxu0 0.0
        %1627 = vmatprep.subr.mxu0 0.0
        %1628 = vmatpush2.msra.mxu0 0.0
        %1629 = vmatprep.subr.mxu0 0.0
        %1630 = vmatpush2.msra.mxu0 0.0
        %1631 = vmatprep.subr.mxu0 0.0
        %1632 = vmatpush2.msra.mxu0 0.0
        %1633 = vmatprep.subr.mxu0 0.0
        %1634 = vmatpush2.msra.mxu0 0.0
        %1635 = vmatprep.mubr.f32.mxu0 0.0
        %1636 = vmatmul.mubr.f32.gmra.mxu0 %v1569
        %v1637 = vpop.f32.mrf.mxu0
        %v1638 = vadd.f32 0.0, %v1637
        %v1639 = vpop.f32.mrf.mxu0
        %1640 = vdwg.mxu0
        %v1641 = vmul.f32 %v1319, 0.088388346
        %1642 = vmatprep.subr.mxu0 0.0
        %1643 = vmatpush1.xpose.msra.mxu0 0.0
        %1644 = vmatprep.subr.mxu0 0.0
        %1645 = vmatpush1.xpose.msra.mxu0 0.0
        %1646 = vmatprep.subr.mxu0 0.0
        %1647 = vmatpush1.xpose.msra.mxu0 0.0
        %1648 = vmatprep.subr.mxu0 0.0
        %1649 = vmatpush1.xpose.msra.mxu0 0.0
        %1650 = vmatprep.subr.mxu0 0.0
        %1651 = vmatpush1.xpose.msra.mxu0 0.0
        %1652 = vmatprep.subr.mxu0 0.0
        %1653 = vmatpush1.xpose.msra.mxu0 0.0
        %1654 = vmatprep.subr.mxu0 0.0
        %1655 = vmatpush1.xpose.msra.mxu0 0.0
        %1656 = vmatprep.subr.mxu0 0.0
        %1657 = vmatpush1.xpose.msra.mxu0 0.0
        %1658 = vmatprep.subr.mxu0 0.0
        %1659 = vmatpush1.xpose.msra.mxu0 0.0
        %1660 = vmatprep.subr.mxu0 0.0
        %1661 = vmatpush1.xpose.msra.mxu0 0.0
        %1662 = vmatprep.subr.mxu0 0.0
        %1663 = vmatpush1.xpose.msra.mxu0 0.0
        %1664 = vmatprep.subr.mxu0 0.0
        %1665 = vmatpush1.xpose.msra.mxu0 0.0
        %1666 = vmatprep.subr.mxu0 0.0
        %1667 = vmatpush1.xpose.msra.mxu0 0.0
        %1668 = vmatprep.subr.mxu0 0.0
        %1669 = vmatpush1.xpose.msra.mxu0 0.0
        %1670 = vmatprep.subr.mxu0 0.0
        %1671 = vmatpush1.xpose.msra.mxu0 0.0
        %1672 = vmatprep.subr.mxu0 0.0
        %1673 = vmatpush1.xpose.msra.mxu0 %v1401
        %1674 = vmatprep.subr.mxu0 0.0
        %1675 = vmatpush2.xpose.msra.mxu0 0.0
        %1676 = vmatprep.subr.mxu0 0.0
        %1677 = vmatpush2.xpose.msra.mxu0 0.0
        %1678 = vmatprep.subr.mxu0 0.0
        %1679 = vmatpush2.xpose.msra.mxu0 0.0
        %1680 = vmatprep.subr.mxu0 0.0
        %1681 = vmatpush2.xpose.msra.mxu0 0.0
        %1682 = vmatprep.subr.mxu0 0.0
        %1683 = vmatpush2.xpose.msra.mxu0 0.0
        %1684 = vmatprep.subr.mxu0 0.0
        %1685 = vmatpush2.xpose.msra.mxu0 0.0
        %1686 = vmatprep.subr.mxu0 0.0
        %1687 = vmatpush2.xpose.msra.mxu0 0.0
        %1688 = vmatprep.subr.mxu0 0.0
        %1689 = vmatpush2.xpose.msra.mxu0 0.0
        %1690 = vmatprep.subr.mxu0 0.0
        %1691 = vmatpush2.xpose.msra.mxu0 0.0
        %1692 = vmatprep.subr.mxu0 0.0
        %1693 = vmatpush2.xpose.msra.mxu0 0.0
        %1694 = vmatprep.subr.mxu0 0.0
        %1695 = vmatpush2.xpose.msra.mxu0 0.0
        %1696 = vmatprep.subr.mxu0 0.0
        %1697 = vmatpush2.xpose.msra.mxu0 0.0
        %1698 = vmatprep.subr.mxu0 0.0
        %1699 = vmatpush2.xpose.msra.mxu0 0.0
        %1700 = vmatprep.subr.mxu0 0.0
        %1701 = vmatpush2.xpose.msra.mxu0 0.0
        %1702 = vmatprep.subr.mxu0 0.0
        %1703 = vmatpush2.xpose.msra.mxu0 0.0
        %1704 = vmatprep.subr.mxu0 0.0
        %1705 = vmatpush2.xpose.msra.mxu0 0.0
        %1706 = vmatprep.mubr.f32.mxu0 0.0
        %1707 = vmatmul.mubr.f32.gmra.mxu0 %v1641
        %v1708 = vpop.f32.mrf.mxu0
        %v1709 = vadd.f32 0.0, %v1708
        %v1710 = vpop.f32.mrf.mxu0
        %1711 = vdwg.mxu0
        %v1712 = vsel %vm1556, %v1709, -inf
        %1713 = vmax.xlane.f32.xlu0 %v1712
        %v1714 = vpop.xlane.xlu0 %1713
        %v1715 = vsub.f32 %v1709, %v1714
        %v1716 = vmul.f32 %v1715, 1.442695
        %v1717 = vpow.pop %v1716
        %v1718 = vsel %vm1556, %v1717, 0.0
        %1719 = vadd.xlane.f32.xlu0 %v1718
        %v1720 = vpop.xlane.xlu0 %1719
        %v1721 = vrcp.pop %v1720
        %v1722 = vmul.f32 %v1717, %v1721
        %v1724 = vsel %vm1556, %v1722, 0
        %1726 = vmatprep.subr.mxu0 0.0
        %1727 = vmatpush1.msra.mxu0 0.0
        %1728 = vmatprep.subr.mxu0 0.0
        %1729 = vmatpush1.msra.mxu0 0.0
        %1730 = vmatprep.subr.mxu0 0.0
        %1731 = vmatpush1.msra.mxu0 0.0
        %1732 = vmatprep.subr.mxu0 0.0
        %1733 = vmatpush1.msra.mxu0 0.0
        %1734 = vmatprep.subr.mxu0 0.0
        %1735 = vmatpush1.msra.mxu0 0.0
        %1736 = vmatprep.subr.mxu0 0.0
        %1737 = vmatpush1.msra.mxu0 0.0
        %1738 = vmatprep.subr.mxu0 0.0
        %1739 = vmatpush1.msra.mxu0 0.0
        %1740 = vmatprep.subr.mxu0 0.0
        %1741 = vmatpush1.msra.mxu0 0.0
        %1742 = vmatprep.subr.mxu0 0.0
        %1743 = vmatpush1.msra.mxu0 0.0
        %1744 = vmatprep.subr.mxu0 0.0
        %1745 = vmatpush1.msra.mxu0 0.0
        %1746 = vmatprep.subr.mxu0 0.0
        %1747 = vmatpush1.msra.mxu0 0.0
        %1748 = vmatprep.subr.mxu0 0.0
        %1749 = vmatpush1.msra.mxu0 0.0
        %1750 = vmatprep.subr.mxu0 0.0
        %1751 = vmatpush1.msra.mxu0 0.0
        %1752 = vmatprep.subr.mxu0 0.0
        %1753 = vmatpush1.msra.mxu0 0.0
        %1754 = vmatprep.subr.mxu0 0.0
        %1755 = vmatpush1.msra.mxu0 0.0
        %1756 = vmatprep.subr.mxu0 0.0
        %1757 = vmatpush1.msra.mxu0 %v1483
        %1758 = vmatprep.subr.mxu0 0.0
        %1759 = vmatpush2.msra.mxu0 0.0
        %1760 = vmatprep.subr.mxu0 0.0
        %1761 = vmatpush2.msra.mxu0 0.0
        %1762 = vmatprep.subr.mxu0 0.0
        %1763 = vmatpush2.msra.mxu0 0.0
        %1764 = vmatprep.subr.mxu0 0.0
        %1765 = vmatpush2.msra.mxu0 0.0
        %1766 = vmatprep.subr.mxu0 0.0
        %1767 = vmatpush2.msra.mxu0 0.0
        %1768 = vmatprep.subr.mxu0 0.0
        %1769 = vmatpush2.msra.mxu0 0.0
        %1770 = vmatprep.subr.mxu0 0.0
        %1771 = vmatpush2.msra.mxu0 0.0
        %1772 = vmatprep.subr.mxu0 0.0
        %1773 = vmatpush2.msra.mxu0 0.0
        %1774 = vmatprep.subr.mxu0 0.0
        %1775 = vmatpush2.msra.mxu0 0.0
        %1776 = vmatprep.subr.mxu0 0.0
        %1777 = vmatpush2.msra.mxu0 0.0
        %1778 = vmatprep.subr.mxu0 0.0
        %1779 = vmatpush2.msra.mxu0 0.0
        %1780 = vmatprep.subr.mxu0 0.0
        %1781 = vmatpush2.msra.mxu0 0.0
        %1782 = vmatprep.subr.mxu0 0.0
        %1783 = vmatpush2.msra.mxu0 0.0
        %1784 = vmatprep.subr.mxu0 0.0
        %1785 = vmatpush2.msra.mxu0 0.0
        %1786 = vmatprep.subr.mxu0 0.0
        %1787 = vmatpush2.msra.mxu0 0.0
        %1788 = vmatprep.subr.mxu0 0.0
        %1789 = vmatpush2.msra.mxu0 0.0
        %1790 = vmatprep.mubr.f32.mxu0 0.0
        %1791 = vmatmul.mubr.f32.gmra.mxu0 %v1724
        %v1792 = vpop.f32.mrf.mxu0
        %v1793 = vadd.f32 0.0, %v1792
        %v1794 = vpop.f32.mrf.mxu0
        %1795 = vdwg.mxu0
        %v1797 = vlaneseq
        %v1798 = vshrl.u32 %v1797, 7
        %v1799 = vsub.s32 0, %v1798
        %v1800 = vrot.slane %v1238, %v1799
        %v1801 = vlaneseq
        %v1802 = vshrl.u32 %v1801, 7
        %v1803 = vsub.s32 1, %v1802
        %v1804 = vrot.slane %v1238, %v1803
        %1807 = vmatprep.subr.mxu0 %v1205
        %1808 = vmatpush1.msra.mxu0 %v1204
        %1809 = vmatprep.subr.mxu0 %v1203
        %1810 = vmatpush1.msra.mxu0 %v1202
        %1811 = vmatprep.subr.mxu0 %v1201
        %1812 = vmatpush1.msra.mxu0 %v1200
        %1813 = vmatprep.subr.mxu0 %v1199
        %1814 = vmatpush1.msra.mxu0 %v1198
        %1815 = vmatprep.subr.mxu0 %v1197
        %1816 = vmatpush1.msra.mxu0 %v1196
        %1817 = vmatprep.subr.mxu0 %v1195
        %1818 = vmatpush1.msra.mxu0 %v1194
        %1819 = vmatprep.subr.mxu0 %v1193
        %1820 = vmatpush1.msra.mxu0 %v1192
        %1821 = vmatprep.subr.mxu0 %v1191
        %1822 = vmatpush1.msra.mxu0 %v1190
        %1823 = vmatprep.subr.mxu0 %v1189
        %1824 = vmatpush1.msra.mxu0 %v1188
        %1825 = vmatprep.subr.mxu0 %v1187
        %1826 = vmatpush1.msra.mxu0 %v1186
        %1827 = vmatprep.subr.mxu0 %v1185
        %1828 = vmatpush1.msra.mxu0 %v1184
        %1829 = vmatprep.subr.mxu0 %v1183
        %1830 = vmatpush1.msra.mxu0 %v1182
        %1831 = vmatprep.subr.mxu0 %v1181
        %1832 = vmatpush1.msra.mxu0 %v1180
        %1833 = vmatprep.subr.mxu0 %v1179
        %1834 = vmatpush1.msra.mxu0 %v1178
        %1835 = vmatprep.subr.mxu0 %v1177
        %1836 = vmatpush1.msra.mxu0 %v1176
        %1837 = vmatprep.subr.mxu0 %v1175
        %1838 = vmatpush1.msra.mxu0 %v1174
        %1839 = vmatprep.subr.mxu0 %v1237
        %1840 = vmatpush2.msra.mxu0 %v1236
        %1841 = vmatprep.subr.mxu0 %v1235
        %1842 = vmatpush2.msra.mxu0 %v1234
        %1843 = vmatprep.subr.mxu0 %v1233
        %1844 = vmatpush2.msra.mxu0 %v1232
        %1845 = vmatprep.subr.mxu0 %v1231
        %1846 = vmatpush2.msra.mxu0 %v1230
        %1847 = vmatprep.subr.mxu0 %v1229
        %1848 = vmatpush2.msra.mxu0 %v1228
        %1849 = vmatprep.subr.mxu0 %v1227
        %1850 = vmatpush2.msra.mxu0 %v1226
        %1851 = vmatprep.subr.mxu0 %v1225
        %1852 = vmatpush2.msra.mxu0 %v1224
        %1853 = vmatprep.subr.mxu0 %v1223
        %1854 = vmatpush2.msra.mxu0 %v1222
        %1855 = vmatprep.subr.mxu0 %v1221
        %1856 = vmatpush2.msra.mxu0 %v1220
        %1857 = vmatprep.subr.mxu0 %v1219
        %1858 = vmatpush2.msra.mxu0 %v1218
        %1859 = vmatprep.subr.mxu0 %v1217
        %1860 = vmatpush2.msra.mxu0 %v1216
        %1861 = vmatprep.subr.mxu0 %v1215
        %1862 = vmatpush2.msra.mxu0 %v1214
        %1863 = vmatprep.subr.mxu0 %v1213
        %1864 = vmatpush2.msra.mxu0 %v1212
        %1865 = vmatprep.subr.mxu0 %v1211
        %1866 = vmatpush2.msra.mxu0 %v1210
        %1867 = vmatprep.subr.mxu0 %v1209
        %1868 = vmatpush2.msra.mxu0 %v1208
        %1869 = vmatprep.subr.mxu0 %v1207
        %1870 = vmatpush2.msra.mxu0 %v1206
        %1871 = vmatprep.mubr.f32.mxu0 %v1793
        %1872 = vmatmul.mubr.f32.gmra.mxu0 %v1638
        %v1873 = vpop.f32.mrf.mxu0
        %v1874 = vadd.f32 %v1800, %v1873
        %v1875 = vpop.f32.mrf.mxu0
        %v1876 = vadd.f32 %v1804, %v1875
        %1877 = vdwg.mxu0
        %v1878 = vadd.f32 %v1874, %v977
        %v1879 = vadd.f32 %v1876, %v978
        %v1880 = vadd.f32 %v1878, %v1879
        %1881 = vadd.xlane.f32.xlu0 %v1880
        %v1882 = vpop.xlane.xlu0 %1881
        %v1883 = vrcp.pop 256.0
        %v1884 = vmul.f32 %v1882, %v1883
        %v1885 = vsub.f32 %v1878, %v1884
        %v1886 = vsub.f32 %v1879, %v1884
        %v1887 = vmul.f32 %v1885, %v1885
        %v1888 = vmul.f32 %v1886, %v1886
        %v1889 = vadd.f32 %v1887, %v1888
        %1890 = vadd.xlane.f32.xlu0 %v1889
        %v1891 = vpop.xlane.xlu0 %1890
        %v1892 = vmul.f32 %v1891, %v1883
        %v1893 = vadd.f32 %v1892, 1e-05
        %v1894 = vrsqrt.pop %v1893
        %v1895 = vmul.f32 %v1885, %v1894
        %v1896 = vmul.f32 %v1886, %v1894
        %v1897 = vld [vmem:[%s10] sm:$0x3]
        %v1899 = vlaneseq
        %v1900 = vshrl.u32 %v1899, 7
        %v1901 = vsub.s32 0, %v1900
        %v1902 = vrot.slane %v1897, %v1901
        %v1903 = vlaneseq
        %v1904 = vshrl.u32 %v1903, 7
        %v1905 = vsub.s32 1, %v1904
        %v1906 = vrot.slane %v1897, %v1905
        %v1909 = vmul.f32 %v1895, %v1902
        %v1910 = vmul.f32 %v1896, %v1906
        %v1911 = vld [vmem:[%s11] sm:$0x3]
        %v1913 = vlaneseq
        %v1914 = vshrl.u32 %v1913, 7
        %v1915 = vsub.s32 0, %v1914
        %v1916 = vrot.slane %v1911, %v1915
        %v1917 = vlaneseq
        %v1918 = vshrl.u32 %v1917, 7
        %v1919 = vsub.s32 1, %v1918
        %v1920 = vrot.slane %v1911, %v1919
        %v1923 = vadd.f32 %v1909, %v1916
        %v1924 = vadd.f32 %v1910, %v1920
        %v1925 = vld [vmem:[#allocation13] sm:$0xff]
        %v1926 = vld [vmem:[#allocation13 + $0x8] sm:$0xff]
        %v1927 = vld [vmem:[#allocation13 + $0x10] sm:$0xff]
        %v1928 = vld [vmem:[#allocation13 + $0x18] sm:$0xff]
        %v1929 = vld [vmem:[#allocation13 + $0x20] sm:$0xff]
        %v1930 = vld [vmem:[#allocation13 + $0x28] sm:$0xff]
        %v1931 = vld [vmem:[#allocation13 + $0x30] sm:$0xff]
        %v1932 = vld [vmem:[#allocation13 + $0x38] sm:$0xff]
        %v1933 = vld [vmem:[#allocation13 + $0x40] sm:$0xff]
        %v1934 = vld [vmem:[#allocation13 + $0x48] sm:$0xff]
        %v1935 = vld [vmem:[#allocation13 + $0x50] sm:$0xff]
        %v1936 = vld [vmem:[#allocation13 + $0x58] sm:$0xff]
        %v1937 = vld [vmem:[#allocation13 + $0x60] sm:$0xff]
        %v1938 = vld [vmem:[#allocation13 + $0x68] sm:$0xff]
        %v1939 = vld [vmem:[#allocation13 + $0x70] sm:$0xff]
        %v1940 = vld [vmem:[#allocation13 + $0x78] sm:$0xff]
        %v1941 = vld [vmem:[#allocation13 + $0x80] sm:$0xff]
        %v1942 = vld [vmem:[#allocation13 + $0x88] sm:$0xff]
        %v1943 = vld [vmem:[#allocation13 + $0x90] sm:$0xff]
        %v1944 = vld [vmem:[#allocation13 + $0x98] sm:$0xff]
        %v1945 = vld [vmem:[#allocation13 + $0xa0] sm:$0xff]
        %v1946 = vld [vmem:[#allocation13 + $0xa8] sm:$0xff]
        %v1947 = vld [vmem:[#allocation13 + $0xb0] sm:$0xff]
        %v1948 = vld [vmem:[#allocation13 + $0xb8] sm:$0xff]
        %v1949 = vld [vmem:[#allocation13 + $0xc0] sm:$0xff]
        %v1950 = vld [vmem:[#allocation13 + $0xc8] sm:$0xff]
        %v1951 = vld [vmem:[#allocation13 + $0xd0] sm:$0xff]
        %v1952 = vld [vmem:[#allocation13 + $0xd8] sm:$0xff]
        %v1953 = vld [vmem:[#allocation13 + $0xe0] sm:$0xff]
        %v1954 = vld [vmem:[#allocation13 + $0xe8] sm:$0xff]
        %v1955 = vld [vmem:[#allocation13 + $0xf0] sm:$0xff]
        %v1956 = vld [vmem:[#allocation13 + $0xf8] sm:$0xff]
        %v1957 = vld [vmem:[#allocation13 + $0x100] sm:$0xff]
        %v1958 = vld [vmem:[#allocation13 + $0x108] sm:$0xff]
        %v1959 = vld [vmem:[#allocation13 + $0x110] sm:$0xff]
        %v1960 = vld [vmem:[#allocation13 + $0x118] sm:$0xff]
        %v1961 = vld [vmem:[#allocation13 + $0x120] sm:$0xff]
        %v1962 = vld [vmem:[#allocation13 + $0x128] sm:$0xff]
        %v1963 = vld [vmem:[#allocation13 + $0x130] sm:$0xff]
        %v1964 = vld [vmem:[#allocation13 + $0x138] sm:$0xff]
        %v1965 = vld [vmem:[#allocation13 + $0x140] sm:$0xff]
        %v1966 = vld [vmem:[#allocation13 + $0x148] sm:$0xff]
        %v1967 = vld [vmem:[#allocation13 + $0x150] sm:$0xff]
        %v1968 = vld [vmem:[#allocation13 + $0x158] sm:$0xff]
        %v1969 = vld [vmem:[#allocation13 + $0x160] sm:$0xff]
        %v1970 = vld [vmem:[#allocation13 + $0x168] sm:$0xff]
        %v1971 = vld [vmem:[#allocation13 + $0x170] sm:$0xff]
        %v1972 = vld [vmem:[#allocation13 + $0x178] sm:$0xff]
        %v1973 = vld [vmem:[#allocation13 + $0x180] sm:$0xff]
        %v1974 = vld [vmem:[#allocation13 + $0x188] sm:$0xff]
        %v1975 = vld [vmem:[#allocation13 + $0x190] sm:$0xff]
        %v1976 = vld [vmem:[#allocation13 + $0x198] sm:$0xff]
        %v1977 = vld [vmem:[#allocation13 + $0x1a0] sm:$0xff]
        %v1978 = vld [vmem:[#allocation13 + $0x1a8] sm:$0xff]
        %v1979 = vld [vmem:[#allocation13 + $0x1b0] sm:$0xff]
        %v1980 = vld [vmem:[#allocation13 + $0x1b8] sm:$0xff]
        %v1981 = vld [vmem:[#allocation13 + $0x1c0] sm:$0xff]
        %v1982 = vld [vmem:[#allocation13 + $0x1c8] sm:$0xff]
        %v1983 = vld [vmem:[#allocation13 + $0x1d0] sm:$0xff]
        %v1984 = vld [vmem:[#allocation13 + $0x1d8] sm:$0xff]
        %v1985 = vld [vmem:[#allocation13 + $0x1e0] sm:$0xff]
        %v1986 = vld [vmem:[#allocation13 + $0x1e8] sm:$0xff]
        %v1987 = vld [vmem:[#allocation13 + $0x1f0] sm:$0xff]
        %v1988 = vld [vmem:[#allocation13 + $0x1f8] sm:$0xff]
        %v1989 = vld [vmem:[%s13] sm:$0x3]
        %v1990 = vld [vmem:[#allocation14] sm:$0xff]
        %v1991 = vld [vmem:[#allocation14 + $0x8] sm:$0xff]
        %v1992 = vld [vmem:[#allocation14 + $0x10] sm:$0xff]
        %v1993 = vld [vmem:[#allocation14 + $0x18] sm:$0xff]
        %v1994 = vld [vmem:[#allocation14 + $0x20] sm:$0xff]
        %v1995 = vld [vmem:[#allocation14 + $0x28] sm:$0xff]
        %v1996 = vld [vmem:[#allocation14 + $0x30] sm:$0xff]
        %v1997 = vld [vmem:[#allocation14 + $0x38] sm:$0xff]
        %v1998 = vld [vmem:[#allocation14 + $0x40] sm:$0xff]
        %v1999 = vld [vmem:[#allocation14 + $0x48] sm:$0xff]
        %v2000 = vld [vmem:[#allocation14 + $0x50] sm:$0xff]
        %v2001 = vld [vmem:[#allocation14 + $0x58] sm:$0xff]
        %v2002 = vld [vmem:[#allocation14 + $0x60] sm:$0xff]
        %v2003 = vld [vmem:[#allocation14 + $0x68] sm:$0xff]
        %v2004 = vld [vmem:[#allocation14 + $0x70] sm:$0xff]
        %v2005 = vld [vmem:[#allocation14 + $0x78] sm:$0xff]
        %v2006 = vld [vmem:[#allocation14 + $0x80] sm:$0xff]
        %v2007 = vld [vmem:[#allocation14 + $0x88] sm:$0xff]
        %v2008 = vld [vmem:[#allocation14 + $0x90] sm:$0xff]
        %v2009 = vld [vmem:[#allocation14 + $0x98] sm:$0xff]
        %v2010 = vld [vmem:[#allocation14 + $0xa0] sm:$0xff]
        %v2011 = vld [vmem:[#allocation14 + $0xa8] sm:$0xff]
        %v2012 = vld [vmem:[#allocation14 + $0xb0] sm:$0xff]
        %v2013 = vld [vmem:[#allocation14 + $0xb8] sm:$0xff]
        %v2014 = vld [vmem:[#allocation14 + $0xc0] sm:$0xff]
        %v2015 = vld [vmem:[#allocation14 + $0xc8] sm:$0xff]
        %v2016 = vld [vmem:[#allocation14 + $0xd0] sm:$0xff]
        %v2017 = vld [vmem:[#allocation14 + $0xd8] sm:$0xff]
        %v2018 = vld [vmem:[#allocation14 + $0xe0] sm:$0xff]
        %v2019 = vld [vmem:[#allocation14 + $0xe8] sm:$0xff]
        %v2020 = vld [vmem:[#allocation14 + $0xf0] sm:$0xff]
        %v2021 = vld [vmem:[#allocation14 + $0xf8] sm:$0xff]
        %v2022 = vld [vmem:[#allocation14 + $0x100] sm:$0xff]
        %v2023 = vld [vmem:[#allocation14 + $0x108] sm:$0xff]
        %v2024 = vld [vmem:[#allocation14 + $0x110] sm:$0xff]
        %v2025 = vld [vmem:[#allocation14 + $0x118] sm:$0xff]
        %v2026 = vld [vmem:[#allocation14 + $0x120] sm:$0xff]
        %v2027 = vld [vmem:[#allocation14 + $0x128] sm:$0xff]
        %v2028 = vld [vmem:[#allocation14 + $0x130] sm:$0xff]
        %v2029 = vld [vmem:[#allocation14 + $0x138] sm:$0xff]
        %v2030 = vld [vmem:[#allocation14 + $0x140] sm:$0xff]
        %v2031 = vld [vmem:[#allocation14 + $0x148] sm:$0xff]
        %v2032 = vld [vmem:[#allocation14 + $0x150] sm:$0xff]
        %v2033 = vld [vmem:[#allocation14 + $0x158] sm:$0xff]
        %v2034 = vld [vmem:[#allocation14 + $0x160] sm:$0xff]
        %v2035 = vld [vmem:[#allocation14 + $0x168] sm:$0xff]
        %v2036 = vld [vmem:[#allocation14 + $0x170] sm:$0xff]
        %v2037 = vld [vmem:[#allocation14 + $0x178] sm:$0xff]
        %v2038 = vld [vmem:[#allocation14 + $0x180] sm:$0xff]
        %v2039 = vld [vmem:[#allocation14 + $0x188] sm:$0xff]
        %v2040 = vld [vmem:[#allocation14 + $0x190] sm:$0xff]
        %v2041 = vld [vmem:[#allocation14 + $0x198] sm:$0xff]
        %v2042 = vld [vmem:[#allocation14 + $0x1a0] sm:$0xff]
        %v2043 = vld [vmem:[#allocation14 + $0x1a8] sm:$0xff]
        %v2044 = vld [vmem:[#allocation14 + $0x1b0] sm:$0xff]
        %v2045 = vld [vmem:[#allocation14 + $0x1b8] sm:$0xff]
        %v2046 = vld [vmem:[#allocation14 + $0x1c0] sm:$0xff]
        %v2047 = vld [vmem:[#allocation14 + $0x1c8] sm:$0xff]
        %v2048 = vld [vmem:[#allocation14 + $0x1d0] sm:$0xff]
        %v2049 = vld [vmem:[#allocation14 + $0x1d8] sm:$0xff]
        %v2050 = vld [vmem:[#allocation14 + $0x1e0] sm:$0xff]
        %v2051 = vld [vmem:[#allocation14 + $0x1e8] sm:$0xff]
        %v2052 = vld [vmem:[#allocation14 + $0x1f0] sm:$0xff]
        %v2053 = vld [vmem:[#allocation14 + $0x1f8] sm:$0xff]
        %v2054 = vld [vmem:[%s15] sm:$0x3]
        %v2055 = vld [vmem:[#allocation16] sm:$0xff]
        %v2056 = vld [vmem:[#allocation16 + $0x8] sm:$0xff]
        %v2057 = vld [vmem:[#allocation16 + $0x10] sm:$0xff]
        %v2058 = vld [vmem:[#allocation16 + $0x18] sm:$0xff]
        %v2059 = vld [vmem:[#allocation16 + $0x20] sm:$0xff]
        %v2060 = vld [vmem:[#allocation16 + $0x28] sm:$0xff]
        %v2061 = vld [vmem:[#allocation16 + $0x30] sm:$0xff]
        %v2062 = vld [vmem:[#allocation16 + $0x38] sm:$0xff]
        %v2063 = vld [vmem:[#allocation16 + $0x40] sm:$0xff]
        %v2064 = vld [vmem:[#allocation16 + $0x48] sm:$0xff]
        %v2065 = vld [vmem:[#allocation16 + $0x50] sm:$0xff]
        %v2066 = vld [vmem:[#allocation16 + $0x58] sm:$0xff]
        %v2067 = vld [vmem:[#allocation16 + $0x60] sm:$0xff]
        %v2068 = vld [vmem:[#allocation16 + $0x68] sm:$0xff]
        %v2069 = vld [vmem:[#allocation16 + $0x70] sm:$0xff]
        %v2070 = vld [vmem:[#allocation16 + $0x78] sm:$0xff]
        %v2071 = vld [vmem:[#allocation16 + $0x80] sm:$0xff]
        %v2072 = vld [vmem:[#allocation16 + $0x88] sm:$0xff]
        %v2073 = vld [vmem:[#allocation16 + $0x90] sm:$0xff]
        %v2074 = vld [vmem:[#allocation16 + $0x98] sm:$0xff]
        %v2075 = vld [vmem:[#allocation16 + $0xa0] sm:$0xff]
        %v2076 = vld [vmem:[#allocation16 + $0xa8] sm:$0xff]
        %v2077 = vld [vmem:[#allocation16 + $0xb0] sm:$0xff]
        %v2078 = vld [vmem:[#allocation16 + $0xb8] sm:$0xff]
        %v2079 = vld [vmem:[#allocation16 + $0xc0] sm:$0xff]
        %v2080 = vld [vmem:[#allocation16 + $0xc8] sm:$0xff]
        %v2081 = vld [vmem:[#allocation16 + $0xd0] sm:$0xff]
        %v2082 = vld [vmem:[#allocation16 + $0xd8] sm:$0xff]
        %v2083 = vld [vmem:[#allocation16 + $0xe0] sm:$0xff]
        %v2084 = vld [vmem:[#allocation16 + $0xe8] sm:$0xff]
        %v2085 = vld [vmem:[#allocation16 + $0xf0] sm:$0xff]
        %v2086 = vld [vmem:[#allocation16 + $0xf8] sm:$0xff]
        %v2087 = vld [vmem:[#allocation16 + $0x100] sm:$0xff]
        %v2088 = vld [vmem:[#allocation16 + $0x108] sm:$0xff]
        %v2089 = vld [vmem:[#allocation16 + $0x110] sm:$0xff]
        %v2090 = vld [vmem:[#allocation16 + $0x118] sm:$0xff]
        %v2091 = vld [vmem:[#allocation16 + $0x120] sm:$0xff]
        %v2092 = vld [vmem:[#allocation16 + $0x128] sm:$0xff]
        %v2093 = vld [vmem:[#allocation16 + $0x130] sm:$0xff]
        %v2094 = vld [vmem:[#allocation16 + $0x138] sm:$0xff]
        %v2095 = vld [vmem:[#allocation16 + $0x140] sm:$0xff]
        %v2096 = vld [vmem:[#allocation16 + $0x148] sm:$0xff]
        %v2097 = vld [vmem:[#allocation16 + $0x150] sm:$0xff]
        %v2098 = vld [vmem:[#allocation16 + $0x158] sm:$0xff]
        %v2099 = vld [vmem:[#allocation16 + $0x160] sm:$0xff]
        %v2100 = vld [vmem:[#allocation16 + $0x168] sm:$0xff]
        %v2101 = vld [vmem:[#allocation16 + $0x170] sm:$0xff]
        %v2102 = vld [vmem:[#allocation16 + $0x178] sm:$0xff]
        %v2103 = vld [vmem:[#allocation16 + $0x180] sm:$0xff]
        %v2104 = vld [vmem:[#allocation16 + $0x188] sm:$0xff]
        %v2105 = vld [vmem:[#allocation16 + $0x190] sm:$0xff]
        %v2106 = vld [vmem:[#allocation16 + $0x198] sm:$0xff]
        %v2107 = vld [vmem:[#allocation16 + $0x1a0] sm:$0xff]
        %v2108 = vld [vmem:[#allocation16 + $0x1a8] sm:$0xff]
        %v2109 = vld [vmem:[#allocation16 + $0x1b0] sm:$0xff]
        %v2110 = vld [vmem:[#allocation16 + $0x1b8] sm:$0xff]
        %v2111 = vld [vmem:[#allocation16 + $0x1c0] sm:$0xff]
        %v2112 = vld [vmem:[#allocation16 + $0x1c8] sm:$0xff]
        %v2113 = vld [vmem:[#allocation16 + $0x1d0] sm:$0xff]
        %v2114 = vld [vmem:[#allocation16 + $0x1d8] sm:$0xff]
        %v2115 = vld [vmem:[#allocation16 + $0x1e0] sm:$0xff]
        %v2116 = vld [vmem:[#allocation16 + $0x1e8] sm:$0xff]
        %v2117 = vld [vmem:[#allocation16 + $0x1f0] sm:$0xff]
        %v2118 = vld [vmem:[#allocation16 + $0x1f8] sm:$0xff]
        %v2119 = vld [vmem:[%s17] sm:$0x3]
        %v2120 = vld [vmem:[#allocation17] sm:$0xff]
        %v2121 = vld [vmem:[#allocation17 + $0x8] sm:$0xff]
        %v2122 = vld [vmem:[#allocation17 + $0x10] sm:$0xff]
        %v2123 = vld [vmem:[#allocation17 + $0x18] sm:$0xff]
        %v2124 = vld [vmem:[#allocation17 + $0x20] sm:$0xff]
        %v2125 = vld [vmem:[#allocation17 + $0x28] sm:$0xff]
        %v2126 = vld [vmem:[#allocation17 + $0x30] sm:$0xff]
        %v2127 = vld [vmem:[#allocation17 + $0x38] sm:$0xff]
        %v2128 = vld [vmem:[#allocation17 + $0x40] sm:$0xff]
        %v2129 = vld [vmem:[#allocation17 + $0x48] sm:$0xff]
        %v2130 = vld [vmem:[#allocation17 + $0x50] sm:$0xff]
        %v2131 = vld [vmem:[#allocation17 + $0x58] sm:$0xff]
        %v2132 = vld [vmem:[#allocation17 + $0x60] sm:$0xff]
        %v2133 = vld [vmem:[#allocation17 + $0x68] sm:$0xff]
        %v2134 = vld [vmem:[#allocation17 + $0x70] sm:$0xff]
        %v2135 = vld [vmem:[#allocation17 + $0x78] sm:$0xff]
        %v2136 = vld [vmem:[#allocation17 + $0x80] sm:$0xff]
        %v2137 = vld [vmem:[#allocation17 + $0x88] sm:$0xff]
        %v2138 = vld [vmem:[#allocation17 + $0x90] sm:$0xff]
        %v2139 = vld [vmem:[#allocation17 + $0x98] sm:$0xff]
        %v2140 = vld [vmem:[#allocation17 + $0xa0] sm:$0xff]
        %v2141 = vld [vmem:[#allocation17 + $0xa8] sm:$0xff]
        %v2142 = vld [vmem:[#allocation17 + $0xb0] sm:$0xff]
        %v2143 = vld [vmem:[#allocation17 + $0xb8] sm:$0xff]
        %v2144 = vld [vmem:[#allocation17 + $0xc0] sm:$0xff]
        %v2145 = vld [vmem:[#allocation17 + $0xc8] sm:$0xff]
        %v2146 = vld [vmem:[#allocation17 + $0xd0] sm:$0xff]
        %v2147 = vld [vmem:[#allocation17 + $0xd8] sm:$0xff]
        %v2148 = vld [vmem:[#allocation17 + $0xe0] sm:$0xff]
        %v2149 = vld [vmem:[#allocation17 + $0xe8] sm:$0xff]
        %v2150 = vld [vmem:[#allocation17 + $0xf0] sm:$0xff]
        %v2151 = vld [vmem:[#allocation17 + $0xf8] sm:$0xff]
        %v2152 = vld [vmem:[#allocation17 + $0x100] sm:$0xff]
        %v2153 = vld [vmem:[#allocation17 + $0x108] sm:$0xff]
        %v2154 = vld [vmem:[#allocation17 + $0x110] sm:$0xff]
        %v2155 = vld [vmem:[#allocation17 + $0x118] sm:$0xff]
        %v2156 = vld [vmem:[#allocation17 + $0x120] sm:$0xff]
        %v2157 = vld [vmem:[#allocation17 + $0x128] sm:$0xff]
        %v2158 = vld [vmem:[#allocation17 + $0x130] sm:$0xff]
        %v2159 = vld [vmem:[#allocation17 + $0x138] sm:$0xff]
        %v2160 = vld [vmem:[#allocation17 + $0x140] sm:$0xff]
        %v2161 = vld [vmem:[#allocation17 + $0x148] sm:$0xff]
        %v2162 = vld [vmem:[#allocation17 + $0x150] sm:$0xff]
        %v2163 = vld [vmem:[#allocation17 + $0x158] sm:$0xff]
        %v2164 = vld [vmem:[#allocation17 + $0x160] sm:$0xff]
        %v2165 = vld [vmem:[#allocation17 + $0x168] sm:$0xff]
        %v2166 = vld [vmem:[#allocation17 + $0x170] sm:$0xff]
        %v2167 = vld [vmem:[#allocation17 + $0x178] sm:$0xff]
        %v2168 = vld [vmem:[#allocation17 + $0x180] sm:$0xff]
        %v2169 = vld [vmem:[#allocation17 + $0x188] sm:$0xff]
        %v2170 = vld [vmem:[#allocation17 + $0x190] sm:$0xff]
        %v2171 = vld [vmem:[#allocation17 + $0x198] sm:$0xff]
        %v2172 = vld [vmem:[#allocation17 + $0x1a0] sm:$0xff]
        %v2173 = vld [vmem:[#allocation17 + $0x1a8] sm:$0xff]
        %v2174 = vld [vmem:[#allocation17 + $0x1b0] sm:$0xff]
        %v2175 = vld [vmem:[#allocation17 + $0x1b8] sm:$0xff]
        %v2176 = vld [vmem:[#allocation17 + $0x1c0] sm:$0xff]
        %v2177 = vld [vmem:[#allocation17 + $0x1c8] sm:$0xff]
        %v2178 = vld [vmem:[#allocation17 + $0x1d0] sm:$0xff]
        %v2179 = vld [vmem:[#allocation17 + $0x1d8] sm:$0xff]
        %v2180 = vld [vmem:[#allocation17 + $0x1e0] sm:$0xff]
        %v2181 = vld [vmem:[#allocation17 + $0x1e8] sm:$0xff]
        %v2182 = vld [vmem:[#allocation17 + $0x1f0] sm:$0xff]
        %v2183 = vld [vmem:[#allocation17 + $0x1f8] sm:$0xff]
        %v2184 = vld [vmem:[%s19] sm:$0x3]
        %v2186 = vlaneseq
        %v2187 = vshrl.u32 %v2186, 7
        %v2188 = vsub.s32 0, %v2187
        %v2189 = vrot.slane %v1989, %v2188
        %v2190 = vlaneseq
        %v2191 = vshrl.u32 %v2190, 7
        %v2192 = vsub.s32 1, %v2191
        %v2193 = vrot.slane %v1989, %v2192
        %2196 = vmatprep.subr.mxu0 %v1956
        %2197 = vmatpush1.msra.mxu0 %v1955
        %2198 = vmatprep.subr.mxu0 %v1954
        %2199 = vmatpush1.msra.mxu0 %v1953
        %2200 = vmatprep.subr.mxu0 %v1952
        %2201 = vmatpush1.msra.mxu0 %v1951
        %2202 = vmatprep.subr.mxu0 %v1950
        %2203 = vmatpush1.msra.mxu0 %v1949
        %2204 = vmatprep.subr.mxu0 %v1948
        %2205 = vmatpush1.msra.mxu0 %v1947
        %2206 = vmatprep.subr.mxu0 %v1946
        %2207 = vmatpush1.msra.mxu0 %v1945
        %2208 = vmatprep.subr.mxu0 %v1944
        %2209 = vmatpush1.msra.mxu0 %v1943
        %2210 = vmatprep.subr.mxu0 %v1942
        %2211 = vmatpush1.msra.mxu0 %v1941
        %2212 = vmatprep.subr.mxu0 %v1940
        %2213 = vmatpush1.msra.mxu0 %v1939
        %2214 = vmatprep.subr.mxu0 %v1938
        %2215 = vmatpush1.msra.mxu0 %v1937
        %2216 = vmatprep.subr.mxu0 %v1936
        %2217 = vmatpush1.msra.mxu0 %v1935
        %2218 = vmatprep.subr.mxu0 %v1934
        %2219 = vmatpush1.msra.mxu0 %v1933
        %2220 = vmatprep.subr.mxu0 %v1932
        %2221 = vmatpush1.msra.mxu0 %v1931
        %2222 = vmatprep.subr.mxu0 %v1930
        %2223 = vmatpush1.msra.mxu0 %v1929
        %2224 = vmatprep.subr.mxu0 %v1928
        %2225 = vmatpush1.msra.mxu0 %v1927
        %2226 = vmatprep.subr.mxu0 %v1926
        %2227 = vmatpush1.msra.mxu0 %v1925
        %2228 = vmatprep.subr.mxu0 %v1988
        %2229 = vmatpush2.msra.mxu0 %v1987
        %2230 = vmatprep.subr.mxu0 %v1986
        %2231 = vmatpush2.msra.mxu0 %v1985
        %2232 = vmatprep.subr.mxu0 %v1984
        %2233 = vmatpush2.msra.mxu0 %v1983
        %2234 = vmatprep.subr.mxu0 %v1982
        %2235 = vmatpush2.msra.mxu0 %v1981
        %2236 = vmatprep.subr.mxu0 %v1980
        %2237 = vmatpush2.msra.mxu0 %v1979
        %2238 = vmatprep.subr.mxu0 %v1978
        %2239 = vmatpush2.msra.mxu0 %v1977
        %2240 = vmatprep.subr.mxu0 %v1976
        %2241 = vmatpush2.msra.mxu0 %v1975
        %2242 = vmatprep.subr.mxu0 %v1974
        %2243 = vmatpush2.msra.mxu0 %v1973
        %2244 = vmatprep.subr.mxu0 %v1972
        %2245 = vmatpush2.msra.mxu0 %v1971
        %2246 = vmatprep.subr.mxu0 %v1970
        %2247 = vmatpush2.msra.mxu0 %v1969
        %2248 = vmatprep.subr.mxu0 %v1968
        %2249 = vmatpush2.msra.mxu0 %v1967
        %2250 = vmatprep.subr.mxu0 %v1966
        %2251 = vmatpush2.msra.mxu0 %v1965
        %2252 = vmatprep.subr.mxu0 %v1964
        %2253 = vmatpush2.msra.mxu0 %v1963
        %2254 = vmatprep.subr.mxu0 %v1962
        %2255 = vmatpush2.msra.mxu0 %v1961
        %2256 = vmatprep.subr.mxu0 %v1960
        %2257 = vmatpush2.msra.mxu0 %v1959
        %2258 = vmatprep.subr.mxu0 %v1958
        %2259 = vmatpush2.msra.mxu0 %v1957
        %2260 = vmatprep.mubr.f32.mxu0 %v1924
        %2261 = vmatmul.mubr.f32.gmra.mxu0 %v1923
        %v2262 = vpop.f32.mrf.mxu0
        %v2263 = vadd.f32 %v2189, %v2262
        %v2264 = vpop.f32.mrf.mxu0
        %v2265 = vadd.f32 %v2193, %v2264
        %2266 = vdwg.mxu0
        %v2268 = vlaneseq
        %v2269 = vshrl.u32 %v2268, 7
        %v2270 = vsub.s32 0, %v2269
        %v2271 = vrot.slane %v2054, %v2270
        %v2272 = vlaneseq
        %v2273 = vshrl.u32 %v2272, 7
        %v2274 = vsub.s32 1, %v2273
        %v2275 = vrot.slane %v2054, %v2274
        %2278 = vmatprep.subr.mxu0 %v2021
        %2279 = vmatpush1.msra.mxu0 %v2020
        %2280 = vmatprep.subr.mxu0 %v2019
        %2281 = vmatpush1.msra.mxu0 %v2018
        %2282 = vmatprep.subr.mxu0 %v2017
        %2283 = vmatpush1.msra.mxu0 %v2016
        %2284 = vmatprep.subr.mxu0 %v2015
        %2285 = vmatpush1.msra.mxu0 %v2014
        %2286 = vmatprep.subr.mxu0 %v2013
        %2287 = vmatpush1.msra.mxu0 %v2012
        %2288 = vmatprep.subr.mxu0 %v2011
        %2289 = vmatpush1.msra.mxu0 %v2010
        %2290 = vmatprep.subr.mxu0 %v2009
        %2291 = vmatpush1.msra.mxu0 %v2008
        %2292 = vmatprep.subr.mxu0 %v2007
        %2293 = vmatpush1.msra.mxu0 %v2006
        %2294 = vmatprep.subr.mxu0 %v2005
        %2295 = vmatpush1.msra.mxu0 %v2004
        %2296 = vmatprep.subr.mxu0 %v2003
        %2297 = vmatpush1.msra.mxu0 %v2002
        %2298 = vmatprep.subr.mxu0 %v2001
        %2299 = vmatpush1.msra.mxu0 %v2000
        %2300 = vmatprep.subr.mxu0 %v1999
        %2301 = vmatpush1.msra.mxu0 %v1998
        %2302 = vmatprep.subr.mxu0 %v1997
        %2303 = vmatpush1.msra.mxu0 %v1996
        %2304 = vmatprep.subr.mxu0 %v1995
        %2305 = vmatpush1.msra.mxu0 %v1994
        %2306 = vmatprep.subr.mxu0 %v1993
        %2307 = vmatpush1.msra.mxu0 %v1992
        %2308 = vmatprep.subr.mxu0 %v1991
        %2309 = vmatpush1.msra.mxu0 %v1990
        %2310 = vmatprep.subr.mxu0 %v2053
        %2311 = vmatpush2.msra.mxu0 %v2052
        %2312 = vmatprep.subr.mxu0 %v2051
        %2313 = vmatpush2.msra.mxu0 %v2050
        %2314 = vmatprep.subr.mxu0 %v2049
        %2315 = vmatpush2.msra.mxu0 %v2048
        %2316 = vmatprep.subr.mxu0 %v2047
        %2317 = vmatpush2.msra.mxu0 %v2046
        %2318 = vmatprep.subr.mxu0 %v2045
        %2319 = vmatpush2.msra.mxu0 %v2044
        %2320 = vmatprep.subr.mxu0 %v2043
        %2321 = vmatpush2.msra.mxu0 %v2042
        %2322 = vmatprep.subr.mxu0 %v2041
        %2323 = vmatpush2.msra.mxu0 %v2040
        %2324 = vmatprep.subr.mxu0 %v2039
        %2325 = vmatpush2.msra.mxu0 %v2038
        %2326 = vmatprep.subr.mxu0 %v2037
        %2327 = vmatpush2.msra.mxu0 %v2036
        %2328 = vmatprep.subr.mxu0 %v2035
        %2329 = vmatpush2.msra.mxu0 %v2034
        %2330 = vmatprep.subr.mxu0 %v2033
        %2331 = vmatpush2.msra.mxu0 %v2032
        %2332 = vmatprep.subr.mxu0 %v2031
        %2333 = vmatpush2.msra.mxu0 %v2030
        %2334 = vmatprep.subr.mxu0 %v2029
        %2335 = vmatpush2.msra.mxu0 %v2028
        %2336 = vmatprep.subr.mxu0 %v2027
        %2337 = vmatpush2.msra.mxu0 %v2026
        %2338 = vmatprep.subr.mxu0 %v2025
        %2339 = vmatpush2.msra.mxu0 %v2024
        %2340 = vmatprep.subr.mxu0 %v2023
        %2341 = vmatpush2.msra.mxu0 %v2022
        %2342 = vmatprep.mubr.f32.mxu0 %v976
        %2343 = vmatmul.mubr.f32.gmra.mxu0 %v975
        %v2344 = vpop.f32.mrf.mxu0
        %v2345 = vadd.f32 %v2271, %v2344
        %v2346 = vpop.f32.mrf.mxu0
        %v2347 = vadd.f32 %v2275, %v2346
        %2348 = vdwg.mxu0
        %v2350 = vlaneseq
        %v2351 = vshrl.u32 %v2350, 7
        %v2352 = vsub.s32 0, %v2351
        %v2353 = vrot.slane %v2119, %v2352
        %v2354 = vlaneseq
        %v2355 = vshrl.u32 %v2354, 7
        %v2356 = vsub.s32 1, %v2355
        %v2357 = vrot.slane %v2119, %v2356
        %2360 = vmatprep.subr.mxu0 %v2086
        %2361 = vmatpush1.msra.mxu0 %v2085
        %2362 = vmatprep.subr.mxu0 %v2084
        %2363 = vmatpush1.msra.mxu0 %v2083
        %2364 = vmatprep.subr.mxu0 %v2082
        %2365 = vmatpush1.msra.mxu0 %v2081
        %2366 = vmatprep.subr.mxu0 %v2080
        %2367 = vmatpush1.msra.mxu0 %v2079
        %2368 = vmatprep.subr.mxu0 %v2078
        %2369 = vmatpush1.msra.mxu0 %v2077
        %2370 = vmatprep.subr.mxu0 %v2076
        %2371 = vmatpush1.msra.mxu0 %v2075
        %2372 = vmatprep.subr.mxu0 %v2074
        %2373 = vmatpush1.msra.mxu0 %v2073
        %2374 = vmatprep.subr.mxu0 %v2072
        %2375 = vmatpush1.msra.mxu0 %v2071
        %2376 = vmatprep.subr.mxu0 %v2070
        %2377 = vmatpush1.msra.mxu0 %v2069
        %2378 = vmatprep.subr.mxu0 %v2068
        %2379 = vmatpush1.msra.mxu0 %v2067
        %2380 = vmatprep.subr.mxu0 %v2066
        %2381 = vmatpush1.msra.mxu0 %v2065
        %2382 = vmatprep.subr.mxu0 %v2064
        %2383 = vmatpush1.msra.mxu0 %v2063
        %2384 = vmatprep.subr.mxu0 %v2062
        %2385 = vmatpush1.msra.mxu0 %v2061
        %2386 = vmatprep.subr.mxu0 %v2060
        %2387 = vmatpush1.msra.mxu0 %v2059
        %2388 = vmatprep.subr.mxu0 %v2058
        %2389 = vmatpush1.msra.mxu0 %v2057
        %2390 = vmatprep.subr.mxu0 %v2056
        %2391 = vmatpush1.msra.mxu0 %v2055
        %2392 = vmatprep.subr.mxu0 %v2118
        %2393 = vmatpush2.msra.mxu0 %v2117
        %2394 = vmatprep.subr.mxu0 %v2116
        %2395 = vmatpush2.msra.mxu0 %v2115
        %2396 = vmatprep.subr.mxu0 %v2114
        %2397 = vmatpush2.msra.mxu0 %v2113
        %2398 = vmatprep.subr.mxu0 %v2112
        %2399 = vmatpush2.msra.mxu0 %v2111
        %2400 = vmatprep.subr.mxu0 %v2110
        %2401 = vmatpush2.msra.mxu0 %v2109
        %2402 = vmatprep.subr.mxu0 %v2108
        %2403 = vmatpush2.msra.mxu0 %v2107
        %2404 = vmatprep.subr.mxu0 %v2106
        %2405 = vmatpush2.msra.mxu0 %v2105
        %2406 = vmatprep.subr.mxu0 %v2104
        %2407 = vmatpush2.msra.mxu0 %v2103
        %2408 = vmatprep.subr.mxu0 %v2102
        %2409 = vmatpush2.msra.mxu0 %v2101
        %2410 = vmatprep.subr.mxu0 %v2100
        %2411 = vmatpush2.msra.mxu0 %v2099
        %2412 = vmatprep.subr.mxu0 %v2098
        %2413 = vmatpush2.msra.mxu0 %v2097
        %2414 = vmatprep.subr.mxu0 %v2096
        %2415 = vmatpush2.msra.mxu0 %v2095
        %2416 = vmatprep.subr.mxu0 %v2094
        %2417 = vmatpush2.msra.mxu0 %v2093
        %2418 = vmatprep.subr.mxu0 %v2092
        %2419 = vmatpush2.msra.mxu0 %v2091
        %2420 = vmatprep.subr.mxu0 %v2090
        %2421 = vmatpush2.msra.mxu0 %v2089
        %2422 = vmatprep.subr.mxu0 %v2088
        %2423 = vmatpush2.msra.mxu0 %v2087
        %2424 = vmatprep.mubr.f32.mxu0 %v976
        %2425 = vmatmul.mubr.f32.gmra.mxu0 %v975
        %v2426 = vpop.f32.mrf.mxu0
        %v2427 = vadd.f32 %v2353, %v2426
        %v2428 = vpop.f32.mrf.mxu0
        %v2429 = vadd.f32 %v2357, %v2428
        %2430 = vdwg.mxu0
        %v2431 = vmul.f32 %v2263, 0.088388346
        %2432 = vmatprep.subr.mxu0 0.0
        %2433 = vmatpush1.xpose.msra.mxu0 0.0
        %2434 = vmatprep.subr.mxu0 0.0
        %2435 = vmatpush1.xpose.msra.mxu0 0.0
        %2436 = vmatprep.subr.mxu0 0.0
        %2437 = vmatpush1.xpose.msra.mxu0 0.0
        %2438 = vmatprep.subr.mxu0 0.0
        %2439 = vmatpush1.xpose.msra.mxu0 0.0
        %2440 = vmatprep.subr.mxu0 0.0
        %2441 = vmatpush1.xpose.msra.mxu0 0.0
        %2442 = vmatprep.subr.mxu0 0.0
        %2443 = vmatpush1.xpose.msra.mxu0 0.0
        %2444 = vmatprep.subr.mxu0 0.0
        %2445 = vmatpush1.xpose.msra.mxu0 0.0
        %2446 = vmatprep.subr.mxu0 0.0
        %2447 = vmatpush1.xpose.msra.mxu0 0.0
        %2448 = vmatprep.subr.mxu0 0.0
        %2449 = vmatpush1.xpose.msra.mxu0 0.0
        %2450 = vmatprep.subr.mxu0 0.0
        %2451 = vmatpush1.xpose.msra.mxu0 0.0
        %2452 = vmatprep.subr.mxu0 0.0
        %2453 = vmatpush1.xpose.msra.mxu0 0.0
        %2454 = vmatprep.subr.mxu0 0.0
        %2455 = vmatpush1.xpose.msra.mxu0 0.0
        %2456 = vmatprep.subr.mxu0 0.0
        %2457 = vmatpush1.xpose.msra.mxu0 0.0
        %2458 = vmatprep.subr.mxu0 0.0
        %2459 = vmatpush1.xpose.msra.mxu0 0.0
        %2460 = vmatprep.subr.mxu0 0.0
        %2461 = vmatpush1.xpose.msra.mxu0 0.0
        %2462 = vmatprep.subr.mxu0 0.0
        %2463 = vmatpush1.xpose.msra.mxu0 %v2345
        %2464 = vmatprep.subr.mxu0 0.0
        %2465 = vmatpush2.xpose.msra.mxu0 0.0
        %2466 = vmatprep.subr.mxu0 0.0
        %2467 = vmatpush2.xpose.msra.mxu0 0.0
        %2468 = vmatprep.subr.mxu0 0.0
        %2469 = vmatpush2.xpose.msra.mxu0 0.0
        %2470 = vmatprep.subr.mxu0 0.0
        %2471 = vmatpush2.xpose.msra.mxu0 0.0
        %2472 = vmatprep.subr.mxu0 0.0
        %2473 = vmatpush2.xpose.msra.mxu0 0.0
        %2474 = vmatprep.subr.mxu0 0.0
        %2475 = vmatpush2.xpose.msra.mxu0 0.0
        %2476 = vmatprep.subr.mxu0 0.0
        %2477 = vmatpush2.xpose.msra.mxu0 0.0
        %2478 = vmatprep.subr.mxu0 0.0
        %2479 = vmatpush2.xpose.msra.mxu0 0.0
        %2480 = vmatprep.subr.mxu0 0.0
        %2481 = vmatpush2.xpose.msra.mxu0 0.0
        %2482 = vmatprep.subr.mxu0 0.0
        %2483 = vmatpush2.xpose.msra.mxu0 0.0
        %2484 = vmatprep.subr.mxu0 0.0
        %2485 = vmatpush2.xpose.msra.mxu0 0.0
        %2486 = vmatprep.subr.mxu0 0.0
        %2487 = vmatpush2.xpose.msra.mxu0 0.0
        %2488 = vmatprep.subr.mxu0 0.0
        %2489 = vmatpush2.xpose.msra.mxu0 0.0
        %2490 = vmatprep.subr.mxu0 0.0
        %2491 = vmatpush2.xpose.msra.mxu0 0.0
        %2492 = vmatprep.subr.mxu0 0.0
        %2493 = vmatpush2.xpose.msra.mxu0 0.0
        %2494 = vmatprep.subr.mxu0 0.0
        %2495 = vmatpush2.xpose.msra.mxu0 0.0
        %2496 = vmatprep.mubr.f32.mxu0 0.0
        %2497 = vmatmul.mubr.f32.gmra.mxu0 %v2431
        %v2498 = vpop.f32.mrf.mxu0
        %v2499 = vadd.f32 0.0, %v2498
        %v2500 = vpop.f32.mrf.mxu0
        %2501 = vdwg.mxu0
        %v2502 = vsel %vm1556, %v2499, -inf
        %2503 = vmax.xlane.f32.xlu0 %v2502
        %v2504 = vpop.xlane.xlu0 %2503
        %v2505 = vsub.f32 %v2499, %v2504
        %v2506 = vmul.f32 %v2505, 1.442695
        %v2507 = vpow.pop %v2506
        %v2508 = vsel %vm1556, %v2507, 0.0
        %2509 = vadd.xlane.f32.xlu0 %v2508
        %v2510 = vpop.xlane.xlu0 %2509
        %v2511 = vrcp.pop %v2510
        %v2512 = vmul.f32 %v2507, %v2511
        %v2514 = vsel %vm1556, %v2512, 0
        %2516 = vmatprep.subr.mxu0 0.0
        %2517 = vmatpush1.msra.mxu0 0.0
        %2518 = vmatprep.subr.mxu0 0.0
        %2519 = vmatpush1.msra.mxu0 0.0
        %2520 = vmatprep.subr.mxu0 0.0
        %2521 = vmatpush1.msra.mxu0 0.0
        %2522 = vmatprep.subr.mxu0 0.0
        %2523 = vmatpush1.msra.mxu0 0.0
        %2524 = vmatprep.subr.mxu0 0.0
        %2525 = vmatpush1.msra.mxu0 0.0
        %2526 = vmatprep.subr.mxu0 0.0
        %2527 = vmatpush1.msra.mxu0 0.0
        %2528 = vmatprep.subr.mxu0 0.0
        %2529 = vmatpush1.msra.mxu0 0.0
        %2530 = vmatprep.subr.mxu0 0.0
        %2531 = vmatpush1.msra.mxu0 0.0
        %2532 = vmatprep.subr.mxu0 0.0
        %2533 = vmatpush1.msra.mxu0 0.0
        %2534 = vmatprep.subr.mxu0 0.0
        %2535 = vmatpush1.msra.mxu0 0.0
        %2536 = vmatprep.subr.mxu0 0.0
        %2537 = vmatpush1.msra.mxu0 0.0
        %2538 = vmatprep.subr.mxu0 0.0
        %2539 = vmatpush1.msra.mxu0 0.0
        %2540 = vmatprep.subr.mxu0 0.0
        %2541 = vmatpush1.msra.mxu0 0.0
        %2542 = vmatprep.subr.mxu0 0.0
        %2543 = vmatpush1.msra.mxu0 0.0
        %2544 = vmatprep.subr.mxu0 0.0
        %2545 = vmatpush1.msra.mxu0 0.0
        %2546 = vmatprep.subr.mxu0 0.0
        %2547 = vmatpush1.msra.mxu0 %v2427
        %2548 = vmatprep.subr.mxu0 0.0
        %2549 = vmatpush2.msra.mxu0 0.0
        %2550 = vmatprep.subr.mxu0 0.0
        %2551 = vmatpush2.msra.mxu0 0.0
        %2552 = vmatprep.subr.mxu0 0.0
        %2553 = vmatpush2.msra.mxu0 0.0
        %2554 = vmatprep.subr.mxu0 0.0
        %2555 = vmatpush2.msra.mxu0 0.0
        %2556 = vmatprep.subr.mxu0 0.0
        %2557 = vmatpush2.msra.mxu0 0.0
        %2558 = vmatprep.subr.mxu0 0.0
        %2559 = vmatpush2.msra.mxu0 0.0
        %2560 = vmatprep.subr.mxu0 0.0
        %2561 = vmatpush2.msra.mxu0 0.0
        %2562 = vmatprep.subr.mxu0 0.0
        %2563 = vmatpush2.msra.mxu0 0.0
        %2564 = vmatprep.subr.mxu0 0.0
        %2565 = vmatpush2.msra.mxu0 0.0
        %2566 = vmatprep.subr.mxu0 0.0
        %2567 = vmatpush2.msra.mxu0 0.0
        %2568 = vmatprep.subr.mxu0 0.0
        %2569 = vmatpush2.msra.mxu0 0.0
        %2570 = vmatprep.subr.mxu0 0.0
        %2571 = vmatpush2.msra.mxu0 0.0
        %2572 = vmatprep.subr.mxu0 0.0
        %2573 = vmatpush2.msra.mxu0 0.0
        %2574 = vmatprep.subr.mxu0 0.0
        %2575 = vmatpush2.msra.mxu0 0.0
        %2576 = vmatprep.subr.mxu0 0.0
        %2577 = vmatpush2.msra.mxu0 0.0
        %2578 = vmatprep.subr.mxu0 0.0
        %2579 = vmatpush2.msra.mxu0 0.0
        %2580 = vmatprep.mubr.f32.mxu0 0.0
        %2581 = vmatmul.mubr.f32.gmra.mxu0 %v2514
        %v2582 = vpop.f32.mrf.mxu0
        %v2583 = vadd.f32 0.0, %v2582
        %v2584 = vpop.f32.mrf.mxu0
        %2585 = vdwg.mxu0
        %v2586 = vmul.f32 %v2265, 0.088388346
        %2587 = vmatprep.subr.mxu0 0.0
        %2588 = vmatpush1.xpose.msra.mxu0 0.0
        %2589 = vmatprep.subr.mxu0 0.0
        %2590 = vmatpush1.xpose.msra.mxu0 0.0
        %2591 = vmatprep.subr.mxu0 0.0
        %2592 = vmatpush1.xpose.msra.mxu0 0.0
        %2593 = vmatprep.subr.mxu0 0.0
        %2594 = vmatpush1.xpose.msra.mxu0 0.0
        %2595 = vmatprep.subr.mxu0 0.0
        %2596 = vmatpush1.xpose.msra.mxu0 0.0
        %2597 = vmatprep.subr.mxu0 0.0
        %2598 = vmatpush1.xpose.msra.mxu0 0.0
        %2599 = vmatprep.subr.mxu0 0.0
        %2600 = vmatpush1.xpose.msra.mxu0 0.0
        %2601 = vmatprep.subr.mxu0 0.0
        %2602 = vmatpush1.xpose.msra.mxu0 0.0
        %2603 = vmatprep.subr.mxu0 0.0
        %2604 = vmatpush1.xpose.msra.mxu0 0.0
        %2605 = vmatprep.subr.mxu0 0.0
        %2606 = vmatpush1.xpose.msra.mxu0 0.0
        %2607 = vmatprep.subr.mxu0 0.0
        %2608 = vmatpush1.xpose.msra.mxu0 0.0
        %2609 = vmatprep.subr.mxu0 0.0
        %2610 = vmatpush1.xpose.msra.mxu0 0.0
        %2611 = vmatprep.subr.mxu0 0.0
        %2612 = vmatpush1.xpose.msra.mxu0 0.0
        %2613 = vmatprep.subr.mxu0 0.0
        %2614 = vmatpush1.xpose.msra.mxu0 0.0
        %2615 = vmatprep.subr.mxu0 0.0
        %2616 = vmatpush1.xpose.msra.mxu0 0.0
        %2617 = vmatprep.subr.mxu0 0.0
        %2618 = vmatpush1.xpose.msra.mxu0 %v2347
        %2619 = vmatprep.subr.mxu0 0.0
        %2620 = vmatpush2.xpose.msra.mxu0 0.0
        %2621 = vmatprep.subr.mxu0 0.0
        %2622 = vmatpush2.xpose.msra.mxu0 0.0
        %2623 = vmatprep.subr.mxu0 0.0
        %2624 = vmatpush2.xpose.msra.mxu0 0.0
        %2625 = vmatprep.subr.mxu0 0.0
        %2626 = vmatpush2.xpose.msra.mxu0 0.0
        %2627 = vmatprep.subr.mxu0 0.0
        %2628 = vmatpush2.xpose.msra.mxu0 0.0
        %2629 = vmatprep.subr.mxu0 0.0
        %2630 = vmatpush2.xpose.msra.mxu0 0.0
        %2631 = vmatprep.subr.mxu0 0.0
        %2632 = vmatpush2.xpose.msra.mxu0 0.0
        %2633 = vmatprep.subr.mxu0 0.0
        %2634 = vmatpush2.xpose.msra.mxu0 0.0
        %2635 = vmatprep.subr.mxu0 0.0
        %2636 = vmatpush2.xpose.msra.mxu0 0.0
        %2637 = vmatprep.subr.mxu0 0.0
        %2638 = vmatpush2.xpose.msra.mxu0 0.0
        %2639 = vmatprep.subr.mxu0 0.0
        %2640 = vmatpush2.xpose.msra.mxu0 0.0
        %2641 = vmatprep.subr.mxu0 0.0
        %2642 = vmatpush2.xpose.msra.mxu0 0.0
        %2643 = vmatprep.subr.mxu0 0.0
        %2644 = vmatpush2.xpose.msra.mxu0 0.0
        %2645 = vmatprep.subr.mxu0 0.0
        %2646 = vmatpush2.xpose.msra.mxu0 0.0
        %2647 = vmatprep.subr.mxu0 0.0
        %2648 = vmatpush2.xpose.msra.mxu0 0.0
        %2649 = vmatprep.subr.mxu0 0.0
        %2650 = vmatpush2.xpose.msra.mxu0 0.0
        %2651 = vmatprep.mubr.f32.mxu0 0.0
        %2652 = vmatmul.mubr.f32.gmra.mxu0 %v2586
        %v2653 = vpop.f32.mrf.mxu0
        %v2654 = vadd.f32 0.0, %v2653
        %v2655 = vpop.f32.mrf.mxu0
        %2656 = vdwg.mxu0
        %v2657 = vsel %vm1556, %v2654, -inf
        %2658 = vmax.xlane.f32.xlu0 %v2657
        %v2659 = vpop.xlane.xlu0 %2658
        %v2660 = vsub.f32 %v2654, %v2659
        %v2661 = vmul.f32 %v2660, 1.442695
        %v2662 = vpow.pop %v2661
        %v2663 = vsel %vm1556, %v2662, 0.0
        %2664 = vadd.xlane.f32.xlu0 %v2663
        %v2665 = vpop.xlane.xlu0 %2664
        %v2666 = vrcp.pop %v2665
        %v2667 = vmul.f32 %v2662, %v2666
        %v2669 = vsel %vm1556, %v2667, 0
        %2671 = vmatprep.subr.mxu0 0.0
        %2672 = vmatpush1.msra.mxu0 0.0
        %2673 = vmatprep.subr.mxu0 0.0
        %2674 = vmatpush1.msra.mxu0 0.0
        %2675 = vmatprep.subr.mxu0 0.0
        %2676 = vmatpush1.msra.mxu0 0.0
        %2677 = vmatprep.subr.mxu0 0.0
        %2678 = vmatpush1.msra.mxu0 0.0
        %2679 = vmatprep.subr.mxu0 0.0
        %2680 = vmatpush1.msra.mxu0 0.0
        %2681 = vmatprep.subr.mxu0 0.0
        %2682 = vmatpush1.msra.mxu0 0.0
        %2683 = vmatprep.subr.mxu0 0.0
        %2684 = vmatpush1.msra.mxu0 0.0
        %2685 = vmatprep.subr.mxu0 0.0
        %2686 = vmatpush1.msra.mxu0 0.0
        %2687 = vmatprep.subr.mxu0 0.0
        %2688 = vmatpush1.msra.mxu0 0.0
        %2689 = vmatprep.subr.mxu0 0.0
        %2690 = vmatpush1.msra.mxu0 0.0
        %2691 = vmatprep.subr.mxu0 0.0
        %2692 = vmatpush1.msra.mxu0 0.0
        %2693 = vmatprep.subr.mxu0 0.0
        %2694 = vmatpush1.msra.mxu0 0.0
        %2695 = vmatprep.subr.mxu0 0.0
        %2696 = vmatpush1.msra.mxu0 0.0
        %2697 = vmatprep.subr.mxu0 0.0
        %2698 = vmatpush1.msra.mxu0 0.0
        %2699 = vmatprep.subr.mxu0 0.0
        %2700 = vmatpush1.msra.mxu0 0.0
        %2701 = vmatprep.subr.mxu0 0.0
        %2702 = vmatpush1.msra.mxu0 %v2429
        %2703 = vmatprep.subr.mxu0 0.0
        %2704 = vmatpush2.msra.mxu0 0.0
        %2705 = vmatprep.subr.mxu0 0.0
        %2706 = vmatpush2.msra.mxu0 0.0
        %2707 = vmatprep.subr.mxu0 0.0
        %2708 = vmatpush2.msra.mxu0 0.0
        %2709 = vmatprep.subr.mxu0 0.0
        %2710 = vmatpush2.msra.mxu0 0.0
        %2711 = vmatprep.subr.mxu0 0.0
        %2712 = vmatpush2.msra.mxu0 0.0
        %2713 = vmatprep.subr.mxu0 0.0
        %2714 = vmatpush2.msra.mxu0 0.0
        %2715 = vmatprep.subr.mxu0 0.0
        %2716 = vmatpush2.msra.mxu0 0.0
        %2717 = vmatprep.subr.mxu0 0.0
        %2718 = vmatpush2.msra.mxu0 0.0
        %2719 = vmatprep.subr.mxu0 0.0
        %2720 = vmatpush2.msra.mxu0 0.0
        %2721 = vmatprep.subr.mxu0 0.0
        %2722 = vmatpush2.msra.mxu0 0.0
        %2723 = vmatprep.subr.mxu0 0.0
        %2724 = vmatpush2.msra.mxu0 0.0
        %2725 = vmatprep.subr.mxu0 0.0
        %2726 = vmatpush2.msra.mxu0 0.0
        %2727 = vmatprep.subr.mxu0 0.0
        %2728 = vmatpush2.msra.mxu0 0.0
        %2729 = vmatprep.subr.mxu0 0.0
        %2730 = vmatpush2.msra.mxu0 0.0
        %2731 = vmatprep.subr.mxu0 0.0
        %2732 = vmatpush2.msra.mxu0 0.0
        %2733 = vmatprep.subr.mxu0 0.0
        %2734 = vmatpush2.msra.mxu0 0.0
        %2735 = vmatprep.mubr.f32.mxu0 0.0
        %2736 = vmatmul.mubr.f32.gmra.mxu0 %v2669
        %v2737 = vpop.f32.mrf.mxu0
        %v2738 = vadd.f32 0.0, %v2737
        %v2739 = vpop.f32.mrf.mxu0
        %2740 = vdwg.mxu0
        %v2742 = vlaneseq
        %v2743 = vshrl.u32 %v2742, 7
        %v2744 = vsub.s32 0, %v2743
        %v2745 = vrot.slane %v2184, %v2744
        %v2746 = vlaneseq
        %v2747 = vshrl.u32 %v2746, 7
        %v2748 = vsub.s32 1, %v2747
        %v2749 = vrot.slane %v2184, %v2748
        %2752 = vmatprep.subr.mxu0 %v2151
        %2753 = vmatpush1.msra.mxu0 %v2150
        %2754 = vmatprep.subr.mxu0 %v2149
        %2755 = vmatpush1.msra.mxu0 %v2148
        %2756 = vmatprep.subr.mxu0 %v2147
        %2757 = vmatpush1.msra.mxu0 %v2146
        %2758 = vmatprep.subr.mxu0 %v2145
        %2759 = vmatpush1.msra.mxu0 %v2144
        %2760 = vmatprep.subr.mxu0 %v2143
        %2761 = vmatpush1.msra.mxu0 %v2142
        %2762 = vmatprep.subr.mxu0 %v2141
        %2763 = vmatpush1.msra.mxu0 %v2140
        %2764 = vmatprep.subr.mxu0 %v2139
        %2765 = vmatpush1.msra.mxu0 %v2138
        %2766 = vmatprep.subr.mxu0 %v2137
        %2767 = vmatpush1.msra.mxu0 %v2136
        %2768 = vmatprep.subr.mxu0 %v2135
        %2769 = vmatpush1.msra.mxu0 %v2134
        %2770 = vmatprep.subr.mxu0 %v2133
        %2771 = vmatpush1.msra.mxu0 %v2132
        %2772 = vmatprep.subr.mxu0 %v2131
        %2773 = vmatpush1.msra.mxu0 %v2130
        %2774 = vmatprep.subr.mxu0 %v2129
        %2775 = vmatpush1.msra.mxu0 %v2128
        %2776 = vmatprep.subr.mxu0 %v2127
        %2777 = vmatpush1.msra.mxu0 %v2126
        %2778 = vmatprep.subr.mxu0 %v2125
        %2779 = vmatpush1.msra.mxu0 %v2124
        %2780 = vmatprep.subr.mxu0 %v2123
        %2781 = vmatpush1.msra.mxu0 %v2122
        %2782 = vmatprep.subr.mxu0 %v2121
        %2783 = vmatpush1.msra.mxu0 %v2120
        %2784 = vmatprep.subr.mxu0 %v2183
        %2785 = vmatpush2.msra.mxu0 %v2182
        %2786 = vmatprep.subr.mxu0 %v2181
        %2787 = vmatpush2.msra.mxu0 %v2180
        %2788 = vmatprep.subr.mxu0 %v2179
        %2789 = vmatpush2.msra.mxu0 %v2178
        %2790 = vmatprep.subr.mxu0 %v2177
        %2791 = vmatpush2.msra.mxu0 %v2176
        %2792 = vmatprep.subr.mxu0 %v2175
        %2793 = vmatpush2.msra.mxu0 %v2174
        %2794 = vmatprep.subr.mxu0 %v2173
        %2795 = vmatpush2.msra.mxu0 %v2172
        %2796 = vmatprep.subr.mxu0 %v2171
        %2797 = vmatpush2.msra.mxu0 %v2170
        %2798 = vmatprep.subr.mxu0 %v2169
        %2799 = vmatpush2.msra.mxu0 %v2168
        %2800 = vmatprep.subr.mxu0 %v2167
        %2801 = vmatpush2.msra.mxu0 %v2166
        %2802 = vmatprep.subr.mxu0 %v2165
        %2803 = vmatpush2.msra.mxu0 %v2164
        %2804 = vmatprep.subr.mxu0 %v2163
        %2805 = vmatpush2.msra.mxu0 %v2162
        %2806 = vmatprep.subr.mxu0 %v2161
        %2807 = vmatpush2.msra.mxu0 %v2160
        %2808 = vmatprep.subr.mxu0 %v2159
        %2809 = vmatpush2.msra.mxu0 %v2158
        %2810 = vmatprep.subr.mxu0 %v2157
        %2811 = vmatpush2.msra.mxu0 %v2156
        %2812 = vmatprep.subr.mxu0 %v2155
        %2813 = vmatpush2.msra.mxu0 %v2154
        %2814 = vmatprep.subr.mxu0 %v2153
        %2815 = vmatpush2.msra.mxu0 %v2152
        %2816 = vmatprep.mubr.f32.mxu0 %v2738
        %2817 = vmatmul.mubr.f32.gmra.mxu0 %v2583
        %v2818 = vpop.f32.mrf.mxu0
        %v2819 = vadd.f32 %v2745, %v2818
        %v2820 = vpop.f32.mrf.mxu0
        %v2821 = vadd.f32 %v2749, %v2820
        %2822 = vdwg.mxu0
        %2823 = vst.msk [vmem:[%s974] sm:$0xff] %vm1556, %v2512
        %v2824 = vld [vmem:[#allocation19] sm:$0xff]
        %v2825 = vld [vmem:[#allocation19 + $0x8] sm:$0xff]
        %v2826 = vld [vmem:[#allocation19 + $0x10] sm:$0xff]
        %v2827 = vld [vmem:[#allocation19 + $0x18] sm:$0xff]
        %v2828 = vld [vmem:[#allocation19 + $0x20] sm:$0xff]
        %v2829 = vld [vmem:[#allocation19 + $0x28] sm:$0xff]
        %v2830 = vld [vmem:[#allocation19 + $0x30] sm:$0xff]
        %v2831 = vld [vmem:[#allocation19 + $0x38] sm:$0xff]
        %v2832 = vld [vmem:[#allocation19 + $0x40] sm:$0xff]
        %v2833 = vld [vmem:[#allocation19 + $0x48] sm:$0xff]
        %v2834 = vld [vmem:[#allocation19 + $0x50] sm:$0xff]
        %v2835 = vld [vmem:[#allocation19 + $0x58] sm:$0xff]
        %v2836 = vld [vmem:[#allocation19 + $0x60] sm:$0xff]
        %v2837 = vld [vmem:[#allocation19 + $0x68] sm:$0xff]
        %v2838 = vld [vmem:[#allocation19 + $0x70] sm:$0xff]
        %v2839 = vld [vmem:[#allocation19 + $0x78] sm:$0xff]
        %v2840 = vld [vmem:[#allocation19 + $0x80] sm:$0xff]
        %v2841 = vld [vmem:[#allocation19 + $0x88] sm:$0xff]
        %v2842 = vld [vmem:[#allocation19 + $0x90] sm:$0xff]
        %v2843 = vld [vmem:[#allocation19 + $0x98] sm:$0xff]
        %v2844 = vld [vmem:[#allocation19 + $0xa0] sm:$0xff]
        %v2845 = vld [vmem:[#allocation19 + $0xa8] sm:$0xff]
        %v2846 = vld [vmem:[#allocation19 + $0xb0] sm:$0xff]
        %v2847 = vld [vmem:[#allocation19 + $0xb8] sm:$0xff]
        %v2848 = vld [vmem:[#allocation19 + $0xc0] sm:$0xff]
        %v2849 = vld [vmem:[#allocation19 + $0xc8] sm:$0xff]
        %v2850 = vld [vmem:[#allocation19 + $0xd0] sm:$0xff]
        %v2851 = vld [vmem:[#allocation19 + $0xd8] sm:$0xff]
        %v2852 = vld [vmem:[#allocation19 + $0xe0] sm:$0xff]
        %v2853 = vld [vmem:[#allocation19 + $0xe8] sm:$0xff]
        %v2854 = vld [vmem:[#allocation19 + $0xf0] sm:$0xff]
        %v2855 = vld [vmem:[#allocation19 + $0xf8] sm:$0xff]
        %v2856 = vld [vmem:[#allocation19 + $0x100] sm:$0xff]
        %v2857 = vld [vmem:[#allocation19 + $0x108] sm:$0xff]
        %v2858 = vld [vmem:[#allocation19 + $0x110] sm:$0xff]
        %v2859 = vld [vmem:[#allocation19 + $0x118] sm:$0xff]
        %v2860 = vld [vmem:[#allocation19 + $0x120] sm:$0xff]
        %v2861 = vld [vmem:[#allocation19 + $0x128] sm:$0xff]
        %v2862 = vld [vmem:[#allocation19 + $0x130] sm:$0xff]
        %v2863 = vld [vmem:[#allocation19 + $0x138] sm:$0xff]
        %v2864 = vld [vmem:[#allocation19 + $0x140] sm:$0xff]
        %v2865 = vld [vmem:[#allocation19 + $0x148] sm:$0xff]
        %v2866 = vld [vmem:[#allocation19 + $0x150] sm:$0xff]
        %v2867 = vld [vmem:[#allocation19 + $0x158] sm:$0xff]
        %v2868 = vld [vmem:[#allocation19 + $0x160] sm:$0xff]
        %v2869 = vld [vmem:[#allocation19 + $0x168] sm:$0xff]
        %v2870 = vld [vmem:[#allocation19 + $0x170] sm:$0xff]
        %v2871 = vld [vmem:[#allocation19 + $0x178] sm:$0xff]
        %v2872 = vld [vmem:[#allocation19 + $0x180] sm:$0xff]
        %v2873 = vld [vmem:[#allocation19 + $0x188] sm:$0xff]
        %v2874 = vld [vmem:[#allocation19 + $0x190] sm:$0xff]
        %v2875 = vld [vmem:[#allocation19 + $0x198] sm:$0xff]
        %v2876 = vld [vmem:[#allocation19 + $0x1a0] sm:$0xff]
        %v2877 = vld [vmem:[#allocation19 + $0x1a8] sm:$0xff]
        %v2878 = vld [vmem:[#allocation19 + $0x1b0] sm:$0xff]
        %v2879 = vld [vmem:[#allocation19 + $0x1b8] sm:$0xff]
        %v2880 = vld [vmem:[#allocation19 + $0x1c0] sm:$0xff]
        %v2881 = vld [vmem:[#allocation19 + $0x1c8] sm:$0xff]
        %v2882 = vld [vmem:[#allocation19 + $0x1d0] sm:$0xff]
        %v2883 = vld [vmem:[#allocation19 + $0x1d8] sm:$0xff]
        %v2884 = vld [vmem:[#allocation19 + $0x1e0] sm:$0xff]
        %v2885 = vld [vmem:[#allocation19 + $0x1e8] sm:$0xff]
        %v2886 = vld [vmem:[#allocation19 + $0x1f0] sm:$0xff]
        %v2887 = vld [vmem:[#allocation19 + $0x1f8] sm:$0xff]
        %v2888 = vld [vmem:[%s21] sm:$0x3]
        %v2890 = vlaneseq
        %v2891 = vshrl.u32 %v2890, 7
        %v2892 = vsub.s32 0, %v2891
        %v2893 = vrot.slane %v2888, %v2892
        %v2894 = vlaneseq
        %v2895 = vshrl.u32 %v2894, 7
        %v2896 = vsub.s32 1, %v2895
        %v2897 = vrot.slane %v2888, %v2896
        %2900 = vmatprep.subr.mxu0 %v2855
        %2901 = vmatpush1.msra.mxu0 %v2854
        %2902 = vmatprep.subr.mxu0 %v2853
        %2903 = vmatpush1.msra.mxu0 %v2852
        %2904 = vmatprep.subr.mxu0 %v2851
        %2905 = vmatpush1.msra.mxu0 %v2850
        %2906 = vmatprep.subr.mxu0 %v2849
        %2907 = vmatpush1.msra.mxu0 %v2848
        %2908 = vmatprep.subr.mxu0 %v2847
        %2909 = vmatpush1.msra.mxu0 %v2846
        %2910 = vmatprep.subr.mxu0 %v2845
        %2911 = vmatpush1.msra.mxu0 %v2844
        %2912 = vmatprep.subr.mxu0 %v2843
        %2913 = vmatpush1.msra.mxu0 %v2842
        %2914 = vmatprep.subr.mxu0 %v2841
        %2915 = vmatpush1.msra.mxu0 %v2840
        %2916 = vmatprep.subr.mxu0 %v2839
        %2917 = vmatpush1.msra.mxu0 %v2838
        %2918 = vmatprep.subr.mxu0 %v2837
        %2919 = vmatpush1.msra.mxu0 %v2836
        %2920 = vmatprep.subr.mxu0 %v2835
        %2921 = vmatpush1.msra.mxu0 %v2834
        %2922 = vmatprep.subr.mxu0 %v2833
        %2923 = vmatpush1.msra.mxu0 %v2832
        %2924 = vmatprep.subr.mxu0 %v2831
        %2925 = vmatpush1.msra.mxu0 %v2830
        %2926 = vmatprep.subr.mxu0 %v2829
        %2927 = vmatpush1.msra.mxu0 %v2828
        %2928 = vmatprep.subr.mxu0 %v2827
        %2929 = vmatpush1.msra.mxu0 %v2826
        %2930 = vmatprep.subr.mxu0 %v2825
        %2931 = vmatpush1.msra.mxu0 %v2824
        %2932 = vmatprep.subr.mxu0 %v2887
        %2933 = vmatpush2.msra.mxu0 %v2886
        %2934 = vmatprep.subr.mxu0 %v2885
        %2935 = vmatpush2.msra.mxu0 %v2884
        %2936 = vmatprep.subr.mxu0 %v2883
        %2937 = vmatpush2.msra.mxu0 %v2882
        %2938 = vmatprep.subr.mxu0 %v2881
        %2939 = vmatpush2.msra.mxu0 %v2880
        %2940 = vmatprep.subr.mxu0 %v2879
        %2941 = vmatpush2.msra.mxu0 %v2878
        %2942 = vmatprep.subr.mxu0 %v2877
        %2943 = vmatpush2.msra.mxu0 %v2876
        %2944 = vmatprep.subr.mxu0 %v2875
        %2945 = vmatpush2.msra.mxu0 %v2874
        %2946 = vmatprep.subr.mxu0 %v2873
        %2947 = vmatpush2.msra.mxu0 %v2872
        %2948 = vmatprep.subr.mxu0 %v2871
        %2949 = vmatpush2.msra.mxu0 %v2870
        %2950 = vmatprep.subr.mxu0 %v2869
        %2951 = vmatpush2.msra.mxu0 %v2868
        %2952 = vmatprep.subr.mxu0 %v2867
        %2953 = vmatpush2.msra.mxu0 %v2866
        %2954 = vmatprep.subr.mxu0 %v2865
        %2955 = vmatpush2.msra.mxu0 %v2864
        %2956 = vmatprep.subr.mxu0 %v2863
        %2957 = vmatpush2.msra.mxu0 %v2862
        %2958 = vmatprep.subr.mxu0 %v2861
        %2959 = vmatpush2.msra.mxu0 %v2860
        %2960 = vmatprep.subr.mxu0 %v2859
        %2961 = vmatpush2.msra.mxu0 %v2858
        %2962 = vmatprep.subr.mxu0 %v2857
        %2963 = vmatpush2.msra.mxu0 %v2856
        %2964 = vmatprep.mubr.f32.mxu0 %v2821
        %2965 = vmatmul.mubr.f32.gmra.mxu0 %v2819
        %v2966 = vpop.f32.mrf.mxu0
        %v2967 = vadd.f32 %v2893, %v2966
        %v2968 = vpop.f32.mrf.mxu0
        %v2969 = vadd.f32 %v2897, %v2968
        %2970 = vdwg.mxu0
        %v2971 = vmax.f32 %v2967, 0.0
        %v2972 = vmax.f32 %v2969, 0.0
        %v2973 = vld [vmem:[#allocation20] sm:$0xff]
        %v2974 = vld [vmem:[#allocation20 + $0x8] sm:$0xff]
        %v2975 = vld [vmem:[#allocation20 + $0x10] sm:$0xff]
        %v2976 = vld [vmem:[#allocation20 + $0x18] sm:$0xff]
        %v2977 = vld [vmem:[#allocation20 + $0x20] sm:$0xff]
        %v2978 = vld [vmem:[#allocation20 + $0x28] sm:$0xff]
        %v2979 = vld [vmem:[#allocation20 + $0x30] sm:$0xff]
        %v2980 = vld [vmem:[#allocation20 + $0x38] sm:$0xff]
        %v2981 = vld [vmem:[#allocation20 + $0x40] sm:$0xff]
        %v2982 = vld [vmem:[#allocation20 + $0x48] sm:$0xff]
        %v2983 = vld [vmem:[#allocation20 + $0x50] sm:$0xff]
        %v2984 = vld [vmem:[#allocation20 + $0x58] sm:$0xff]
        %v2985 = vld [vmem:[#allocation20 + $0x60] sm:$0xff]
        %v2986 = vld [vmem:[#allocation20 + $0x68] sm:$0xff]
        %v2987 = vld [vmem:[#allocation20 + $0x70] sm:$0xff]
        %v2988 = vld [vmem:[#allocation20 + $0x78] sm:$0xff]
        %v2989 = vld [vmem:[#allocation20 + $0x80] sm:$0xff]
        %v2990 = vld [vmem:[#allocation20 + $0x88] sm:$0xff]
        %v2991 = vld [vmem:[#allocation20 + $0x90] sm:$0xff]
        %v2992 = vld [vmem:[#allocation20 + $0x98] sm:$0xff]
        %v2993 = vld [vmem:[#allocation20 + $0xa0] sm:$0xff]
        %v2994 = vld [vmem:[#allocation20 + $0xa8] sm:$0xff]
        %v2995 = vld [vmem:[#allocation20 + $0xb0] sm:$0xff]
        %v2996 = vld [vmem:[#allocation20 + $0xb8] sm:$0xff]
        %v2997 = vld [vmem:[#allocation20 + $0xc0] sm:$0xff]
        %v2998 = vld [vmem:[#allocation20 + $0xc8] sm:$0xff]
        %v2999 = vld [vmem:[#allocation20 + $0xd0] sm:$0xff]
        %v3000 = vld [vmem:[#allocation20 + $0xd8] sm:$0xff]
        %v3001 = vld [vmem:[#allocation20 + $0xe0] sm:$0xff]
        %v3002 = vld [vmem:[#allocation20 + $0xe8] sm:$0xff]
        %v3003 = vld [vmem:[#allocation20 + $0xf0] sm:$0xff]
        %v3004 = vld [vmem:[#allocation20 + $0xf8] sm:$0xff]
        %v3005 = vld [vmem:[#allocation20 + $0x100] sm:$0xff]
        %v3006 = vld [vmem:[#allocation20 + $0x108] sm:$0xff]
        %v3007 = vld [vmem:[#allocation20 + $0x110] sm:$0xff]
        %v3008 = vld [vmem:[#allocation20 + $0x118] sm:$0xff]
        %v3009 = vld [vmem:[#allocation20 + $0x120] sm:$0xff]
        %v3010 = vld [vmem:[#allocation20 + $0x128] sm:$0xff]
        %v3011 = vld [vmem:[#allocation20 + $0x130] sm:$0xff]
        %v3012 = vld [vmem:[#allocation20 + $0x138] sm:$0xff]
        %v3013 = vld [vmem:[#allocation20 + $0x140] sm:$0xff]
        %v3014 = vld [vmem:[#allocation20 + $0x148] sm:$0xff]
        %v3015 = vld [vmem:[#allocation20 + $0x150] sm:$0xff]
        %v3016 = vld [vmem:[#allocation20 + $0x158] sm:$0xff]
        %v3017 = vld [vmem:[#allocation20 + $0x160] sm:$0xff]
        %v3018 = vld [vmem:[#allocation20 + $0x168] sm:$0xff]
        %v3019 = vld [vmem:[#allocation20 + $0x170] sm:$0xff]
        %v3020 = vld [vmem:[#allocation20 + $0x178] sm:$0xff]
        %v3021 = vld [vmem:[#allocation20 + $0x180] sm:$0xff]
        %v3022 = vld [vmem:[#allocation20 + $0x188] sm:$0xff]
        %v3023 = vld [vmem:[#allocation20 + $0x190] sm:$0xff]
        %v3024 = vld [vmem:[#allocation20 + $0x198] sm:$0xff]
        %v3025 = vld [vmem:[#allocation20 + $0x1a0] sm:$0xff]
        %v3026 = vld [vmem:[#allocation20 + $0x1a8] sm:$0xff]
        %v3027 = vld [vmem:[#allocation20 + $0x1b0] sm:$0xff]
        %v3028 = vld [vmem:[#allocation20 + $0x1b8] sm:$0xff]
        %v3029 = vld [vmem:[#allocation20 + $0x1c0] sm:$0xff]
        %v3030 = vld [vmem:[#allocation20 + $0x1c8] sm:$0xff]
        %v3031 = vld [vmem:[#allocation20 + $0x1d0] sm:$0xff]
        %v3032 = vld [vmem:[#allocation20 + $0x1d8] sm:$0xff]
        %v3033 = vld [vmem:[#allocation20 + $0x1e0] sm:$0xff]
        %v3034 = vld [vmem:[#allocation20 + $0x1e8] sm:$0xff]
        %v3035 = vld [vmem:[#allocation20 + $0x1f0] sm:$0xff]
        %v3036 = vld [vmem:[#allocation20 + $0x1f8] sm:$0xff]
        %3037 = vmatprep.subr.mxu0 %v3004
        %3038 = vmatpush1.msra.mxu0 %v3003
        %3039 = vmatprep.subr.mxu0 %v3002
        %3040 = vmatpush1.msra.mxu0 %v3001
        %3041 = vmatprep.subr.mxu0 %v3000
        %3042 = vmatpush1.msra.mxu0 %v2999
        %3043 = vmatprep.subr.mxu0 %v2998
        %3044 = vmatpush1.msra.mxu0 %v2997
        %3045 = vmatprep.subr.mxu0 %v2996
        %3046 = vmatpush1.msra.mxu0 %v2995
        %3047 = vmatprep.subr.mxu0 %v2994
        %3048 = vmatpush1.msra.mxu0 %v2993
        %3049 = vmatprep.subr.mxu0 %v2992
        %3050 = vmatpush1.msra.mxu0 %v2991
        %3051 = vmatprep.subr.mxu0 %v2990
        %3052 = vmatpush1.msra.mxu0 %v2989
        %3053 = vmatprep.subr.mxu0 %v2988
        %3054 = vmatpush1.msra.mxu0 %v2987
        %3055 = vmatprep.subr.mxu0 %v2986
        %3056 = vmatpush1.msra.mxu0 %v2985
        %3057 = vmatprep.subr.mxu0 %v2984
        %3058 = vmatpush1.msra.mxu0 %v2983
        %3059 = vmatprep.subr.mxu0 %v2982
        %3060 = vmatpush1.msra.mxu0 %v2981
        %3061 = vmatprep.subr.mxu0 %v2980
        %3062 = vmatpush1.msra.mxu0 %v2979
        %3063 = vmatprep.subr.mxu0 %v2978
        %3064 = vmatpush1.msra.mxu0 %v2977
        %3065 = vmatprep.subr.mxu0 %v2976
        %3066 = vmatpush1.msra.mxu0 %v2975
        %3067 = vmatprep.subr.mxu0 %v2974
        %3068 = vmatpush1.msra.mxu0 %v2973
        %3069 = vmatprep.subr.mxu0 %v3036
        %3070 = vmatpush2.msra.mxu0 %v3035
        %3071 = vmatprep.subr.mxu0 %v3034
        %3072 = vmatpush2.msra.mxu0 %v3033
        %3073 = vmatprep.subr.mxu0 %v3032
        %3074 = vmatpush2.msra.mxu0 %v3031
        %3075 = vmatprep.subr.mxu0 %v3030
        %3076 = vmatpush2.msra.mxu0 %v3029
        %3077 = vmatprep.subr.mxu0 %v3028
        %3078 = vmatpush2.msra.mxu0 %v3027
        %3079 = vmatprep.subr.mxu0 %v3026
        %3080 = vmatpush2.msra.mxu0 %v3025
        %3081 = vmatprep.subr.mxu0 %v3024
        %3082 = vmatpush2.msra.mxu0 %v3023
        %3083 = vmatprep.subr.mxu0 %v3022
        %3084 = vmatpush2.msra.mxu0 %v3021
        %3085 = vmatprep.subr.mxu0 %v3020
        %3086 = vmatpush2.msra.mxu0 %v3019
        %3087 = vmatprep.subr.mxu0 %v3018
        %3088 = vmatpush2.msra.mxu0 %v3017
        %3089 = vmatprep.subr.mxu0 %v3016
        %3090 = vmatpush2.msra.mxu0 %v3015
        %3091 = vmatprep.subr.mxu0 %v3014
        %3092 = vmatpush2.msra.mxu0 %v3013
        %3093 = vmatprep.subr.mxu0 %v3012
        %3094 = vmatpush2.msra.mxu0 %v3011
        %3095 = vmatprep.subr.mxu0 %v3010
        %3096 = vmatpush2.msra.mxu0 %v3009
        %3097 = vmatprep.subr.mxu0 %v3008
        %3098 = vmatpush2.msra.mxu0 %v3007
        %3099 = vmatprep.subr.mxu0 %v3006
        %3100 = vmatpush2.msra.mxu0 %v3005
        %3101 = vmatprep.mubr.f32.mxu0 %v2972
        %3102 = vmatmul.mubr.f32.gmra.mxu0 %v2971
        %v3103 = vpop.f32.mrf.mxu0
        %v3104 = vadd.f32 0.0, %v3103
        %v3105 = vpop.f32.mrf.mxu0
        %v3106 = vadd.f32 0.0, %v3105
        %3107 = vdwg.mxu0
        %v3108 = vadd.f32 %v2819, %v3104
        %v3109 = vadd.f32 %v2821, %v3106
        %v3110 = vld [vmem:[%s23] sm:$0x3]
        %v3112 = vlaneseq
        %v3113 = vshrl.u32 %v3112, 7
        %v3114 = vsub.s32 0, %v3113
        %v3115 = vrot.slane %v3110, %v3114
        %v3116 = vlaneseq
        %v3117 = vshrl.u32 %v3116, 7
        %v3118 = vsub.s32 1, %v3117
        %v3119 = vrot.slane %v3110, %v3118
        %v3122 = vadd.f32 %v3108, %v3115
        %v3123 = vadd.f32 %v3109, %v3119
        %3124 = vst [vmem:[%s967] sm:$0xff] %v3122
        %3125 = vst [vmem:[%s967 + $0x8] sm:$0xff] %v3123
        %s3126 = sand.u32 %s576, 1
        %s3127 = scalar_lea.sflag [#allocation4], %s3126
        %s3128 = sand.u32 %s576, 1
        %s3129 = smul.addr %s3128, 16
        %s3130 = scalar_lea.vmem [#allocation22], %s3129
        %s3131 = sand.u32 %s602, 1
        %s3132 = scalar_lea.sflag [#allocation24], %s3131
        %s3133 = sand.u32 %s602, 1
        %s3134 = smul.addr %s3133, 8
        %s3135 = scalar_lea.vmem [#allocation23], %s3134
        // Predicated region
        $region165: #{ident_layer2.1} parent=115 // pred_check
          %p3136 = pneg %p586
        $region166: #{ident_layer2.1} parent=115 // pred_check_branch
          %3138 = sbr.rel (%p3136) target = $region168
        $region167: #{ident_layer2.1} parent=115 // pred_region
          %s3140 = ssub.s32 256, 256
          %3141 = vsyncadd %s3127, %s3140
          %s3142 = smul.addr %s54, 2
          %s3143 = smul.addr %s3142, 128
          %s3144 = scalar_lea.hbm %s24, %s3143
          %s3146 = sshll.u32 %s3130, 4
          %s3147 = int_to_ptr.vmem [resolvable:$true] %s3146
          %3149 = dma.vmem_to_hbm [thread:$0]  %s3147, 256, %s3144, %s3127
        $region168: #{ident_layer2.1} parent=115 // pred_fallthru
          _
        // Predicated region
        $region169: #{ident_layer2.1} parent=115 // pred_check
          %p3150 = pneg %p612
        $region170: #{ident_layer2.1} parent=115 // pred_check_branch
          %3152 = sbr.rel (%p3150) target = $region172
        $region171: #{ident_layer2.1} parent=115 // pred_region
          %s3154 = ssub.s32 128, 128
          %3155 = vsyncadd %s3132, %s3154
          %s3156 = smul.addr %s54, 128
          %s3157 = scalar_lea.hbm %s25, %s3156
          %s3159 = sshll.u32 %s3135, 4
          %s3160 = int_to_ptr.vmem [resolvable:$true] %s3159
          %3162 = dma.vmem_to_hbm [thread:$0]  %s3160, 128, %s3157, %s3132
        $region172: #{ident_layer2.1} parent=115 // pred_fallthru
          _
      $region116: #{ident_layer2.1} parent=5 // pred_fallthru
        _
      %p3163 = scmp.le.s32.totalorder 2, %s49
      // Predicated region
      $region173: #{ident_layer2.1} parent=5 // pred_check
        %p3164 = pneg %p3163
      $region174: #{ident_layer2.1} parent=5 // pred_check_branch
        %3166 = sbr.rel (%p3164) target = $region176
      $region175: #{ident_layer2.1} parent=5 // pred_region
        %s3167 = ssub.s32 %s49, 2
        // Predicated region
        $region177: #{ident_layer2.1} parent=175 // pred_check
          %p3168 = pneg %p592
        $region178: #{ident_layer2.1} parent=175 // pred_check_branch
          %3170 = sbr.rel (%p3168) target = $region180
        $region179: #{ident_layer2.1} parent=175 // pred_region
          %s3171 = sand.u32 %s577, 1
          %s3172 = scalar_lea.sflag [#allocation4], %s3171
          %s3173 = sand.u32 %s577, 1
          %s3174 = smul.addr %s3173, 16
          %s3175 = scalar_lea.vmem [#allocation22], %s3174
          %3176 = dma.done %s3172, 256
        $region180: #{ident_layer2.1} parent=175 // pred_fallthru
          _
        // Predicated region
        $region181: #{ident_layer2.1} parent=175 // pred_check
          %p3177 = pneg %p618
        $region182: #{ident_layer2.1} parent=175 // pred_check_branch
          %3179 = sbr.rel (%p3177) target = $region184
        $region183: #{ident_layer2.1} parent=175 // pred_region
          %s3180 = sand.u32 %s603, 1
          %s3181 = scalar_lea.sflag [#allocation24], %s3180
          %s3182 = sand.u32 %s603, 1
          %s3183 = smul.addr %s3182, 8
          %s3184 = scalar_lea.vmem [#allocation23], %s3183
          %3185 = dma.done %s3181, 128
        $region184: #{ident_layer2.1} parent=175 // pred_fallthru
          _
      $region176: #{ident_layer2.1} parent=5 // pred_fallthru
        _
    $region6: #{ident_layer2.1} parent=1 // loop_footer
      %s53 = sadd.s32 1, %s49
    $region7: #{ident_layer2.1} parent=1 // loop_footer_branch
      %48 = sbr.rel target = $region3
    $region8: #{ident_layer2.1} parent=1 // loop_exit
      _
    %3186 = vsyncpa [#allocation3], 1
    %s3187 = scalar_lea.sflag [#allocation3], 1
    %3188 = vsyncpa %s3187, 1
    %3189 = vsyncpa [#allocation6], 1
    %s3190 = scalar_lea.sflag [#allocation6], 1
    %3191 = vsyncpa %s3190, 1
    %3192 = vsyncpa [#allocation9], 1
    %3193 = vsyncpa [#allocation12], 1
    %3194 = vsyncpa [#allocation15], 1
    %3195 = vsyncpa [#allocation18], 1
    %3196 = vsyncpa [#allocation21], 1
    %3197 = vsyncpa [#allocation4], 1
    %s3198 = scalar_lea.sflag [#allocation4], 1
    %3199 = vsyncpa %s3198, 1
    %3200 = vsyncpa [#allocation24], 1
    %s3201 = scalar_lea.sflag [#allocation24], 1
    %3202 = vsyncpa %s3201, 1

</llo_original>
